<compile_context>
chip_gen: v7x
topology: tpu7x:2x2x1
jax: 0.10.0
libtpu: 0.0.40
codegen_flags: <defaults>
</compile_context>

<pallas_src>
import jax
import jax.numpy as jnp
from jax import lax
from jax.experimental import pallas as pl
from jax.experimental.pallas import tpu as pltpu


# --------------------------- features kernel --------------------------------

def _make_features_kernel(S, Cin, C1, C2):
    """conv(3x3,p=1)+ReLU -> pool2x2 -> conv(3x3,p=1)+ReLU -> pool2x2, one sample."""
    S1, S2 = S // 2, S // 4
    Wp = S1 + 16          # padded-W of the pool1 buffer; interior starts at col 8
                          # (keeps the interior store sublane-aligned)

    def kernel(x_ref, w1_ref, b1_ref, w2_ref, b2_ref, o_ref, a1s, p1pad, a2s):
        f32 = jnp.float32

        # ---- conv1 (3x3, pad=1) + ReLU: in-kernel im2col as 9 tap matmuls ----
        acc = jnp.zeros((S * S, C1), f32)
        for dy in range(3):
            for dx in range(3):
                win = x_ref[0, dy:dy + S, dx:dx + S, :]            # (S, S, Cin)
                acc += jnp.dot(win.reshape(S * S, Cin), w1_ref[dy, dx],
                               preferred_element_type=f32)
        a1s[...] = jnp.maximum(acc + b1_ref[...], 0.0).reshape(S, S, C1)

        # ---- maxpool 2x2 stride 2 (W: strided sublane reads, H: slab max) ----
        wmx = jnp.maximum(a1s[:, pl.ds(0, S1, 2), :],
                          a1s[:, pl.ds(1, S1, 2), :])               # (S, S1, C1)
        wmx = wmx.reshape(S1, 2, S1, C1)
        p1 = jnp.maximum(wmx[:, 0], wmx[:, 1])                      # (S1, S1, C1)

        # ---- zero-padded (pad=1) buffer for conv2, interior at cols 8..8+S1-1
        p1pad[...] = jnp.zeros((S1 + 2, Wp, C1), f32)
        p1pad[1:1 + S1, 8:8 + S1, :] = p1

        # ---- conv2 (3x3, pad=1) + ReLU ----
        acc = jnp.zeros((S1 * S1, C2), f32)
        for dy in range(3):
            for dx in range(3):
                win = p1pad[dy:dy + S1, 7 + dx:7 + dx + S1, :]      # (S1, S1, C1)
                acc += jnp.dot(win.reshape(S1 * S1, C1), w2_ref[dy, dx],
                               preferred_element_type=f32)
        a2s[...] = jnp.maximum(acc + b2_ref[...], 0.0).reshape(S1, S1, C2)

        # ---- maxpool 2x2 stride 2 ----
        wmx = jnp.maximum(a2s[:, pl.ds(0, S2, 2), :],
                          a2s[:, pl.ds(1, S2, 2), :])               # (S1, S2, C2)
        wmx = wmx.reshape(S2, 2, S2, C2)
        o_ref[0] = jnp.maximum(wmx[:, 0], wmx[:, 1])                # (S2, S2, C2)

    return kernel, Wp


def conv_features(x_nchw, p):
    """Fused conv/pool feature extractor, gridded over batch."""
    N, Cin, S, _ = x_nchw.shape
    C1 = p["conv1_w"].shape[-1]
    C2 = p["conv2_w"].shape[-1]
    S1, S2 = S // 2, S // 4
    kernel, Wp = _make_features_kernel(S, Cin, C1, C2)

    x = jnp.transpose(x_nchw, (0, 2, 3, 1))                 # NCHW -> NHWC (glue)
    xp = jnp.pad(x, ((0, 0), (1, 1), (1, 1), (0, 0)))       # (N, S+2, S+2, Cin)

    return pl.pallas_call(
        kernel,
        out_shape=jax.ShapeDtypeStruct((N, S2, S2, C2), jnp.float32),
        grid_spec=pltpu.PrefetchScalarGridSpec(
            num_scalar_prefetch=0,
            grid=(N,),
            in_specs=[
                pl.BlockSpec((1, S + 2, S + 2, Cin), lambda i: (i, 0, 0, 0)),
                pl.BlockSpec((3, 3, Cin, C1), lambda i: (0, 0, 0, 0)),  # resident
                pl.BlockSpec((1, C1), lambda i: (0, 0)),
                pl.BlockSpec((3, 3, C1, C2), lambda i: (0, 0, 0, 0)),   # resident
                pl.BlockSpec((1, C2), lambda i: (0, 0)),
            ],
            out_specs=pl.BlockSpec((1, S2, S2, C2), lambda i: (i, 0, 0, 0)),
            scratch_shapes=[
                pltpu.VMEM((S, S, C1), jnp.float32),        # conv1 activation
                pltpu.VMEM((S1 + 2, Wp, C1), jnp.float32),  # padded pool1 buffer
                pltpu.VMEM((S1, S1, C2), jnp.float32),      # conv2 activation
            ],
        ),
        compiler_params=pltpu.CompilerParams(
            dimension_semantics=("parallel",),              # v7x: shard across TCs
            vmem_limit_bytes=32 * 1024 * 1024,
        ),
    )(xp, p["conv1_w"], p["conv1_b"], p["conv2_w"], p["conv2_b"])


# --------------------------- classifier kernel ------------------------------

def _classifier_kernel(x_ref, w1_ref, b1_ref, w2_ref, b2_ref, o_ref):
    h = jnp.dot(x_ref[...], w1_ref[...], preferred_element_type=jnp.float32)
    h = jnp.maximum(h + b1_ref[...], 0.0)
    # TODO(synk): nn.Dropout(0.5) is identity in eval mode; training-mode RNG mask not implemented.
    o_ref[...] = jnp.dot(h, w2_ref[...], preferred_element_type=jnp.float32) + b2_ref[...]


def classifier(x_flat, w1, b1, w2, b2):
    N, D = x_flat.shape
    Hd = w1.shape[1]
    Cp = w2.shape[1]                 # padded to a multiple of 128 (lane-dense out)
    return pl.pallas_call(
        _classifier_kernel,
        out_shape=jax.ShapeDtypeStruct((N, Cp), jnp.float32),
        in_specs=[
            pl.BlockSpec((N, D), lambda: (0, 0)),
            pl.BlockSpec((D, Hd), lambda: (0, 0)),
            pl.BlockSpec((1, Hd), lambda: (0, 0)),
            pl.BlockSpec((Hd, Cp), lambda: (0, 0)),
            pl.BlockSpec((1, Cp), lambda: (0, 0)),
        ],
        out_specs=pl.BlockSpec((N, Cp), lambda: (0, 0)),
        compiler_params=pltpu.CompilerParams(vmem_limit_bytes=32 * 1024 * 1024),
    )(x_flat, w1, b1, w2, b2)


# --------------------------- param prep & forward ----------------------------

def prepare_params(params, image_size, num_classes):
    """One-time weight layout work (hoisted out of the forward path)."""
    Hp = image_size // 4
    hidden, flat = params["fc1_w"].shape
    C2 = params["conv2_w"].shape[0]
    cpad = max(128, ((num_classes + 127) // 128) * 128)

    # fc1 input dim permuted so it consumes the kernel's (h, w, c) flatten order
    # instead of PyTorch's (c, h, w) NCHW flatten -> no activation transpose.
    w1 = jnp.transpose(params["fc1_w"].reshape(hidden, C2, Hp, Hp),
                       (2, 3, 1, 0)).reshape(flat, hidden)
    w2 = jnp.pad(params["fc2_w"].T, ((0, 0), (0, cpad - num_classes)))
    b2 = jnp.pad(params["fc2_b"], (0, cpad - num_classes)).reshape(1, cpad)

    return dict(
        conv1_w=jnp.transpose(params["conv1_w"], (2, 3, 1, 0)),   # (3,3,Cin,C1)
        conv1_b=params["conv1_b"].reshape(1, -1),
        conv2_w=jnp.transpose(params["conv2_w"], (2, 3, 1, 0)),   # (3,3,C1,C2)
        conv2_b=params["conv2_b"].reshape(1, -1),
        fc1_w=w1, fc1_b=params["fc1_b"].reshape(1, -1),
        fc2_w=w2, fc2_b=b2,
    )


def stroke_classifier_forward(x_nchw, prepped, num_classes):
    feats = conv_features(x_nchw, prepped)              # (N, S/4, S/4, 32)
    x_flat = feats.reshape(feats.shape[0], -1)          # (h, w, c) order (fc1_w matches)
    logits = classifier(x_flat, prepped["fc1_w"], prepped["fc1_b"],
                        prepped["fc2_w"], prepped["fc2_b"])
    return logits[:, :num_classes]                      # drop padded lanes


# --------------------------- pure-JAX reference ------------------------------

def reference_forward(x_nchw, params):
    def conv(x, w, b):
        y = lax.conv_general_dilated(
            x, w, window_strides=(1, 1), padding=((1, 1), (1, 1)),
            dimension_numbers=("NCHW", "OIHW", "NCHW"))
        return jnp.maximum(y + b[None, :, None, None], 0.0)

    def pool(x):
        return lax.reduce_window(x, -jnp.inf, lax.max,
                                 (1, 1, 2, 2), (1, 1, 2, 2), "VALID")

    x = pool(conv(x_nchw, params["conv1_w"], params["conv1_b"]))
    x = pool(conv(x, params["conv2_w"], params["conv2_b"]))
    x = x.reshape(x.shape[0], -1)
    x = jnp.maximum(x @ params["fc1_w"].T + params["fc1_b"], 0.0)
    return x @ params["fc2_w"].T + params["fc2_b"]


# --------------------------- main --------------------------------------------

if __name__ == "__main__":
    # Small shapes consistent with the module: image_size=16 -> flatten dim
    # 32 * (16//4) * (16//4) = 512, matching Linear(32*(s//4)^2, 512).
    batch, image_size, num_classes = 2, 16, 4
    hidden = 512
    flat_dim = 32 * (image_size // 4) * (image_size // 4)    # 512

    key = jax.random.PRNGKey(0)
    keys = jax.random.split(key, 9)
    params = {
        "conv1_w": 0.1 * jax.random.normal(keys[0], (16, 3, 3, 3), jnp.float32),
        "conv1_b": 0.1 * jax.random.normal(keys[1], (16,), jnp.float32),
        "conv2_w": 0.1 * jax.random.normal(keys[2], (32, 16, 3, 3), jnp.float32),
        "conv2_b": 0.1 * jax.random.normal(keys[3], (32,), jnp.float32),
        "fc1_w": 0.05 * jax.random.normal(keys[4], (hidden, flat_dim), jnp.float32),
        "fc1_b": 0.05 * jax.random.normal(keys[5], (hidden,), jnp.float32),
        "fc2_w": 0.05 * jax.random.normal(keys[6], (num_classes, hidden), jnp.float32),
        "fc2_b": 0.05 * jax.random.normal(keys[7], (num_classes,), jnp.float32),
    }
    x = jax.random.normal(keys[8], (batch, 3, image_size, image_size), jnp.float32)

    prepped = prepare_params(params, image_size, num_classes)
    out = jax.block_until_ready(stroke_classifier_forward(x, prepped, num_classes))
    ref = jax.block_until_ready(reference_forward(x, params))

    assert out.shape == (batch, num_classes), out.shape
    assert jnp.allclose(out, ref, atol=1e-4, rtol=1e-4), float(jnp.abs(out - ref).max())
    print("KERNEL_OK")
</pallas_src>

<mosaic_0001>
module attributes {stable_mosaic.version = 11 : i64} {
  func.func @kernel(%arg0: i32, %arg1: memref<1x18x18x3xf32, #tpu.memory_space<vmem>>, %arg2: memref<3x3x3x16xf32, #tpu.memory_space<vmem>>, %arg3: memref<1x16xf32, #tpu.memory_space<vmem>>, %arg4: memref<3x3x16x32xf32, #tpu.memory_space<vmem>>, %arg5: memref<1x32xf32, #tpu.memory_space<vmem>>, %arg6: memref<1x4x4x32xf32, #tpu.memory_space<vmem>>, %arg7: memref<16x16x16xf32, #tpu.memory_space<vmem>>, %arg8: memref<10x24x16xf32, #tpu.memory_space<vmem>>, %arg9: memref<8x8x32xf32, #tpu.memory_space<vmem>>) attributes {dimension_semantics = [#tpu.dimension_semantics<parallel>], iteration_bounds = array<i64: 2>, scalar_prefetch = 0 : i64, scratch_operands = 3 : i64, tpu.core_type = #tpu.core_type<tc>, window_params = [{transform_indices = @transform_0, window_bounds = array<i64: 1, 18, 18, 3>}, {pipeline_mode = #tpu.pipeline_mode<synchronous>, transform_indices = @transform_1, window_bounds = array<i64: 3, 3, 3, 16>}, {pipeline_mode = #tpu.pipeline_mode<synchronous>, transform_indices = @transform_2, window_bounds = array<i64: 1, 16>}, {pipeline_mode = #tpu.pipeline_mode<synchronous>, transform_indices = @transform_3, window_bounds = array<i64: 3, 3, 16, 32>}, {pipeline_mode = #tpu.pipeline_mode<synchronous>, transform_indices = @transform_4, window_bounds = array<i64: 1, 32>}, {transform_indices = @transform_5, window_bounds = array<i64: 1, 4, 4, 32>}]} {
    %cst = arith.constant 0.000000e+00 : f32
    %0 = vector.broadcast %cst : f32 to vector<256x16xf32>
    %c0 = arith.constant 0 : index
    %c0_0 = arith.constant 0 : index
    %c0_1 = arith.constant 0 : index
    %c0_2 = arith.constant 0 : index
    %1 = vector.load %arg1[%c0, %c0_0, %c0_1, %c0_2] : memref<1x18x18x3xf32, #tpu.memory_space<vmem>>, vector<1x16x16x3xf32>
    %2 = vector.shape_cast %1 : vector<1x16x16x3xf32> to vector<16x16x3xf32>
    %3 = vector.shape_cast %2 : vector<16x16x3xf32> to vector<256x3xf32>
    %c0_3 = arith.constant 0 : index
    %c0_4 = arith.constant 0 : index
    %c0_5 = arith.constant 0 : index
    %c0_6 = arith.constant 0 : index
    %4 = vector.load %arg2[%c0_3, %c0_4, %c0_5, %c0_6] : memref<3x3x3x16xf32, #tpu.memory_space<vmem>>, vector<1x1x3x16xf32>
    %5 = vector.shape_cast %4 : vector<1x1x3x16xf32> to vector<3x16xf32>
    %cst_7 = arith.constant dense<0.000000e+00> : vector<256x16xf32>
    %6 = tpu.matmul %3, %5, %cst_7 {dimension_numbers = #tpu.dot_dimension_numbers<[1], [0], [0], [1], [0, 0, 1, 1], [], []>} : vector<256x3xf32>, vector<3x16xf32>, vector<256x16xf32> -> vector<256x16xf32>
    %7 = arith.addf %0, %6 : vector<256x16xf32>
    %c0_8 = arith.constant 0 : index
    %c0_9 = arith.constant 0 : index
    %c1 = arith.constant 1 : index
    %c0_10 = arith.constant 0 : index
    %8 = vector.load %arg1[%c0_8, %c0_9, %c1, %c0_10] : memref<1x18x18x3xf32, #tpu.memory_space<vmem>>, vector<1x16x16x3xf32>
    %9 = vector.shape_cast %8 : vector<1x16x16x3xf32> to vector<16x16x3xf32>
    %10 = vector.shape_cast %9 : vector<16x16x3xf32> to vector<256x3xf32>
    %c0_11 = arith.constant 0 : index
    %c1_12 = arith.constant 1 : index
    %c0_13 = arith.constant 0 : index
    %c0_14 = arith.constant 0 : index
    %11 = vector.load %arg2[%c0_11, %c1_12, %c0_13, %c0_14] : memref<3x3x3x16xf32, #tpu.memory_space<vmem>>, vector<1x1x3x16xf32>
    %12 = vector.shape_cast %11 : vector<1x1x3x16xf32> to vector<3x16xf32>
    %cst_15 = arith.constant dense<0.000000e+00> : vector<256x16xf32>
    %13 = tpu.matmul %10, %12, %cst_15 {dimension_numbers = #tpu.dot_dimension_numbers<[1], [0], [0], [1], [0, 0, 1, 1], [], []>} : vector<256x3xf32>, vector<3x16xf32>, vector<256x16xf32> -> vector<256x16xf32>
    %14 = arith.addf %7, %13 : vector<256x16xf32>
    %c0_16 = arith.constant 0 : index
    %c0_17 = arith.constant 0 : index
    %c2 = arith.constant 2 : index
    %c0_18 = arith.constant 0 : index
    %15 = vector.load %arg1[%c0_16, %c0_17, %c2, %c0_18] : memref<1x18x18x3xf32, #tpu.memory_space<vmem>>, vector<1x16x16x3xf32>
    %16 = vector.shape_cast %15 : vector<1x16x16x3xf32> to vector<16x16x3xf32>
    %17 = vector.shape_cast %16 : vector<16x16x3xf32> to vector<256x3xf32>
    %c0_19 = arith.constant 0 : index
    %c2_20 = arith.constant 2 : index
    %c0_21 = arith.constant 0 : index
    %c0_22 = arith.constant 0 : index
    %18 = vector.load %arg2[%c0_19, %c2_20, %c0_21, %c0_22] : memref<3x3x3x16xf32, #tpu.memory_space<vmem>>, vector<1x1x3x16xf32>
    %19 = vector.shape_cast %18 : vector<1x1x3x16xf32> to vector<3x16xf32>
    %cst_23 = arith.constant dense<0.000000e+00> : vector<256x16xf32>
    %20 = tpu.matmul %17, %19, %cst_23 {dimension_numbers = #tpu.dot_dimension_numbers<[1], [0], [0], [1], [0, 0, 1, 1], [], []>} : vector<256x3xf32>, vector<3x16xf32>, vector<256x16xf32> -> vector<256x16xf32>
    %21 = arith.addf %14, %20 : vector<256x16xf32>
    %c0_24 = arith.constant 0 : index
    %c1_25 = arith.constant 1 : index
    %c0_26 = arith.constant 0 : index
    %c0_27 = arith.constant 0 : index
    %22 = vector.load %arg1[%c0_24, %c1_25, %c0_26, %c0_27] : memref<1x18x18x3xf32, #tpu.memory_space<vmem>>, vector<1x16x16x3xf32>
    %23 = vector.shape_cast %22 : vector<1x16x16x3xf32> to vector<16x16x3xf32>
    %24 = vector.shape_cast %23 : vector<16x16x3xf32> to vector<256x3xf32>
    %c1_28 = arith.constant 1 : index
    %c0_29 = arith.constant 0 : index
    %c0_30 = arith.constant 0 : index
    %c0_31 = arith.constant 0 : index
    %25 = vector.load %arg2[%c1_28, %c0_29, %c0_30, %c0_31] : memref<3x3x3x16xf32, #tpu.memory_space<vmem>>, vector<1x1x3x16xf32>
    %26 = vector.shape_cast %25 : vector<1x1x3x16xf32> to vector<3x16xf32>
    %cst_32 = arith.constant dense<0.000000e+00> : vector<256x16xf32>
    %27 = tpu.matmul %24, %26, %cst_32 {dimension_numbers = #tpu.dot_dimension_numbers<[1], [0], [0], [1], [0, 0, 1, 1], [], []>} : vector<256x3xf32>, vector<3x16xf32>, vector<256x16xf32> -> vector<256x16xf32>
    %28 = arith.addf %21, %27 : vector<256x16xf32>
    %c0_33 = arith.constant 0 : index
    %c1_34 = arith.constant 1 : index
    %c1_35 = arith.constant 1 : index
    %c0_36 = arith.constant 0 : index
    %29 = vector.load %arg1[%c0_33, %c1_34, %c1_35, %c0_36] : memref<1x18x18x3xf32, #tpu.memory_space<vmem>>, vector<1x16x16x3xf32>
    %30 = vector.shape_cast %29 : vector<1x16x16x3xf32> to vector<16x16x3xf32>
    %31 = vector.shape_cast %30 : vector<16x16x3xf32> to vector<256x3xf32>
    %c1_37 = arith.constant 1 : index
    %c1_38 = arith.constant 1 : index
    %c0_39 = arith.constant 0 : index
    %c0_40 = arith.constant 0 : index
    %32 = vector.load %arg2[%c1_37, %c1_38, %c0_39, %c0_40] : memref<3x3x3x16xf32, #tpu.memory_space<vmem>>, vector<1x1x3x16xf32>
    %33 = vector.shape_cast %32 : vector<1x1x3x16xf32> to vector<3x16xf32>
    %cst_41 = arith.constant dense<0.000000e+00> : vector<256x16xf32>
    %34 = tpu.matmul %31, %33, %cst_41 {dimension_numbers = #tpu.dot_dimension_numbers<[1], [0], [0], [1], [0, 0, 1, 1], [], []>} : vector<256x3xf32>, vector<3x16xf32>, vector<256x16xf32> -> vector<256x16xf32>
    %35 = arith.addf %28, %34 : vector<256x16xf32>
    %c0_42 = arith.constant 0 : index
    %c1_43 = arith.constant 1 : index
    %c2_44 = arith.constant 2 : index
    %c0_45 = arith.constant 0 : index
    %36 = vector.load %arg1[%c0_42, %c1_43, %c2_44, %c0_45] : memref<1x18x18x3xf32, #tpu.memory_space<vmem>>, vector<1x16x16x3xf32>
    %37 = vector.shape_cast %36 : vector<1x16x16x3xf32> to vector<16x16x3xf32>
    %38 = vector.shape_cast %37 : vector<16x16x3xf32> to vector<256x3xf32>
    %c1_46 = arith.constant 1 : index
    %c2_47 = arith.constant 2 : index
    %c0_48 = arith.constant 0 : index
    %c0_49 = arith.constant 0 : index
    %39 = vector.load %arg2[%c1_46, %c2_47, %c0_48, %c0_49] : memref<3x3x3x16xf32, #tpu.memory_space<vmem>>, vector<1x1x3x16xf32>
    %40 = vector.shape_cast %39 : vector<1x1x3x16xf32> to vector<3x16xf32>
    %cst_50 = arith.constant dense<0.000000e+00> : vector<256x16xf32>
    %41 = tpu.matmul %38, %40, %cst_50 {dimension_numbers = #tpu.dot_dimension_numbers<[1], [0], [0], [1], [0, 0, 1, 1], [], []>} : vector<256x3xf32>, vector<3x16xf32>, vector<256x16xf32> -> vector<256x16xf32>
    %42 = arith.addf %35, %41 : vector<256x16xf32>
    %c0_51 = arith.constant 0 : index
    %c2_52 = arith.constant 2 : index
    %c0_53 = arith.constant 0 : index
    %c0_54 = arith.constant 0 : index
    %43 = vector.load %arg1[%c0_51, %c2_52, %c0_53, %c0_54] : memref<1x18x18x3xf32, #tpu.memory_space<vmem>>, vector<1x16x16x3xf32>
    %44 = vector.shape_cast %43 : vector<1x16x16x3xf32> to vector<16x16x3xf32>
    %45 = vector.shape_cast %44 : vector<16x16x3xf32> to vector<256x3xf32>
    %c2_55 = arith.constant 2 : index
    %c0_56 = arith.constant 0 : index
    %c0_57 = arith.constant 0 : index
    %c0_58 = arith.constant 0 : index
    %46 = vector.load %arg2[%c2_55, %c0_56, %c0_57, %c0_58] : memref<3x3x3x16xf32, #tpu.memory_space<vmem>>, vector<1x1x3x16xf32>
    %47 = vector.shape_cast %46 : vector<1x1x3x16xf32> to vector<3x16xf32>
    %cst_59 = arith.constant dense<0.000000e+00> : vector<256x16xf32>
    %48 = tpu.matmul %45, %47, %cst_59 {dimension_numbers = #tpu.dot_dimension_numbers<[1], [0], [0], [1], [0, 0, 1, 1], [], []>} : vector<256x3xf32>, vector<3x16xf32>, vector<256x16xf32> -> vector<256x16xf32>
    %49 = arith.addf %42, %48 : vector<256x16xf32>
    %c0_60 = arith.constant 0 : index
    %c2_61 = arith.constant 2 : index
    %c1_62 = arith.constant 1 : index
    %c0_63 = arith.constant 0 : index
    %50 = vector.load %arg1[%c0_60, %c2_61, %c1_62, %c0_63] : memref<1x18x18x3xf32, #tpu.memory_space<vmem>>, vector<1x16x16x3xf32>
    %51 = vector.shape_cast %50 : vector<1x16x16x3xf32> to vector<16x16x3xf32>
    %52 = vector.shape_cast %51 : vector<16x16x3xf32> to vector<256x3xf32>
    %c2_64 = arith.constant 2 : index
    %c1_65 = arith.constant 1 : index
    %c0_66 = arith.constant 0 : index
    %c0_67 = arith.constant 0 : index
    %53 = vector.load %arg2[%c2_64, %c1_65, %c0_66, %c0_67] : memref<3x3x3x16xf32, #tpu.memory_space<vmem>>, vector<1x1x3x16xf32>
    %54 = vector.shape_cast %53 : vector<1x1x3x16xf32> to vector<3x16xf32>
    %cst_68 = arith.constant dense<0.000000e+00> : vector<256x16xf32>
    %55 = tpu.matmul %52, %54, %cst_68 {dimension_numbers = #tpu.dot_dimension_numbers<[1], [0], [0], [1], [0, 0, 1, 1], [], []>} : vector<256x3xf32>, vector<3x16xf32>, vector<256x16xf32> -> vector<256x16xf32>
    %56 = arith.addf %49, %55 : vector<256x16xf32>
    %c0_69 = arith.constant 0 : index
    %c2_70 = arith.constant 2 : index
    %c2_71 = arith.constant 2 : index
    %c0_72 = arith.constant 0 : index
    %57 = vector.load %arg1[%c0_69, %c2_70, %c2_71, %c0_72] : memref<1x18x18x3xf32, #tpu.memory_space<vmem>>, vector<1x16x16x3xf32>
    %58 = vector.shape_cast %57 : vector<1x16x16x3xf32> to vector<16x16x3xf32>
    %59 = vector.shape_cast %58 : vector<16x16x3xf32> to vector<256x3xf32>
    %c2_73 = arith.constant 2 : index
    %c2_74 = arith.constant 2 : index
    %c0_75 = arith.constant 0 : index
    %c0_76 = arith.constant 0 : index
    %60 = vector.load %arg2[%c2_73, %c2_74, %c0_75, %c0_76] : memref<3x3x3x16xf32, #tpu.memory_space<vmem>>, vector<1x1x3x16xf32>
    %61 = vector.shape_cast %60 : vector<1x1x3x16xf32> to vector<3x16xf32>
    %cst_77 = arith.constant dense<0.000000e+00> : vector<256x16xf32>
    %62 = tpu.matmul %59, %61, %cst_77 {dimension_numbers = #tpu.dot_dimension_numbers<[1], [0], [0], [1], [0, 0, 1, 1], [], []>} : vector<256x3xf32>, vector<3x16xf32>, vector<256x16xf32> -> vector<256x16xf32>
    %63 = arith.addf %56, %62 : vector<256x16xf32>
    %c0_78 = arith.constant 0 : index
    %c0_79 = arith.constant 0 : index
    %64 = vector.load %arg3[%c0_78, %c0_79] : memref<1x16xf32, #tpu.memory_space<vmem>>, vector<1x16xf32>
    %65 = vector.broadcast %64 : vector<1x16xf32> to vector<256x16xf32>
    %66 = arith.addf %63, %65 : vector<256x16xf32>
    %cst_80 = arith.constant 0.000000e+00 : f32
    %67 = vector.broadcast %cst_80 : f32 to vector<256x16xf32>
    %68 = arith.maximumf %66, %67 : vector<256x16xf32>
    %69 = vector.shape_cast %68 : vector<256x16xf32> to vector<16x16x16xf32>
    %c0_81 = arith.constant 0 : index
    %c0_82 = arith.constant 0 : index
    %c0_83 = arith.constant 0 : index
    %70 = vector.load %arg7[%c0_81, %c0_82, %c0_83] : memref<16x16x16xf32, #tpu.memory_space<vmem>>, vector<16x16x16xf32>
    tpu.vector_store %arg7[%c0_81, %c0_82, %c0_83], %69 {strides = array<i32>} : memref<16x16x16xf32, #tpu.memory_space<vmem>>, vector<16x16x16xf32>,
    %c0_84 = arith.constant 0 : index
    %c0_85 = arith.constant 0 : index
    %c0_86 = arith.constant 0 : index
    %71 = tpu.strided_load %arg7[%c0_84, %c0_85, %c0_86] {strides = array<i32: 1, 2, 1>} : memref<16x16x16xf32, #tpu.memory_space<vmem>>, vector<16x8x16xf32>
    %c0_87 = arith.constant 0 : index
    %c1_88 = arith.constant 1 : index
    %c0_89 = arith.constant 0 : index
    %72 = tpu.strided_load %arg7[%c0_87, %c1_88, %c0_89] {strides = array<i32: 1, 2, 1>} : memref<16x16x16xf32, #tpu.memory_space<vmem>>, vector<16x8x16xf32>
    %73 = arith.maximumf %71, %72 : vector<16x8x16xf32>
    %74 = vector.shape_cast %73 : vector<16x8x16xf32> to vector<8x2x8x16xf32>
    %75 = vector.extract_strided_slice %74 {offsets = [0, 0, 0, 0], sizes = [8, 1, 8, 16], strides = [1, 1, 1, 1]} : vector<8x2x8x16xf32> to vector<8x1x8x16xf32>
    %76 = vector.shape_cast %75 : vector<8x1x8x16xf32> to vector<8x8x16xf32>
    %77 = vector.extract_strided_slice %74 {offsets = [0, 1, 0, 0], sizes = [8, 1, 8, 16], strides = [1, 1, 1, 1]} : vector<8x2x8x16xf32> to vector<8x1x8x16xf32>
    %78 = vector.shape_cast %77 : vector<8x1x8x16xf32> to vector<8x8x16xf32>
    %79 = arith.maximumf %76, %78 : vector<8x8x16xf32>
    %cst_90 = arith.constant 0.000000e+00 : f32
    %80 = vector.broadcast %cst_90 : f32 to vector<10x24x16xf32>
    %c0_91 = arith.constant 0 : index
    %c0_92 = arith.constant 0 : index
    %c0_93 = arith.constant 0 : index
    %81 = vector.load %arg8[%c0_91, %c0_92, %c0_93] : memref<10x24x16xf32, #tpu.memory_space<vmem>>, vector<10x24x16xf32>
    tpu.vector_store %arg8[%c0_91, %c0_92, %c0_93], %80 {strides = array<i32>} : memref<10x24x16xf32, #tpu.memory_space<vmem>>, vector<10x24x16xf32>,
    %c1_94 = arith.constant 1 : index
    %c8 = arith.constant 8 : index
    %c0_95 = arith.constant 0 : index
    %82 = vector.load %arg8[%c1_94, %c8, %c0_95] : memref<10x24x16xf32, #tpu.memory_space<vmem>>, vector<8x8x16xf32>
    tpu.vector_store %arg8[%c1_94, %c8, %c0_95], %79 {strides = array<i32>} : memref<10x24x16xf32, #tpu.memory_space<vmem>>, vector<8x8x16xf32>,
    %cst_96 = arith.constant 0.000000e+00 : f32
    %83 = vector.broadcast %cst_96 : f32 to vector<64x32xf32>
    %c0_97 = arith.constant 0 : index
    %c7 = arith.constant 7 : index
    %c0_98 = arith.constant 0 : index
    %84 = vector.load %arg8[%c0_97, %c7, %c0_98] : memref<10x24x16xf32, #tpu.memory_space<vmem>>, vector<8x8x16xf32>
    %85 = vector.shape_cast %84 : vector<8x8x16xf32> to vector<64x16xf32>
    %c0_99 = arith.constant 0 : index
    %c0_100 = arith.constant 0 : index
    %c0_101 = arith.constant 0 : index
    %c0_102 = arith.constant 0 : index
    %86 = vector.load %arg4[%c0_99, %c0_100, %c0_101, %c0_102] : memref<3x3x16x32xf32, #tpu.memory_space<vmem>>, vector<1x1x16x32xf32>
    %87 = vector.shape_cast %86 : vector<1x1x16x32xf32> to vector<16x32xf32>
    %cst_103 = arith.constant dense<0.000000e+00> : vector<64x32xf32>
    %88 = tpu.matmul %85, %87, %cst_103 {dimension_numbers = #tpu.dot_dimension_numbers<[1], [0], [0], [1], [0, 0, 1, 1], [], []>} : vector<64x16xf32>, vector<16x32xf32>, vector<64x32xf32> -> vector<64x32xf32>
    %89 = arith.addf %83, %88 : vector<64x32xf32>
    %c0_104 = arith.constant 0 : index
    %c8_105 = arith.constant 8 : index
    %c0_106 = arith.constant 0 : index
    %90 = vector.load %arg8[%c0_104, %c8_105, %c0_106] : memref<10x24x16xf32, #tpu.memory_space<vmem>>, vector<8x8x16xf32>
    %91 = vector.shape_cast %90 : vector<8x8x16xf32> to vector<64x16xf32>
    %c0_107 = arith.constant 0 : index
    %c1_108 = arith.constant 1 : index
    %c0_109 = arith.constant 0 : index
    %c0_110 = arith.constant 0 : index
    %92 = vector.load %arg4[%c0_107, %c1_108, %c0_109, %c0_110] : memref<3x3x16x32xf32, #tpu.memory_space<vmem>>, vector<1x1x16x32xf32>
    %93 = vector.shape_cast %92 : vector<1x1x16x32xf32> to vector<16x32xf32>
    %cst_111 = arith.constant dense<0.000000e+00> : vector<64x32xf32>
    %94 = tpu.matmul %91, %93, %cst_111 {dimension_numbers = #tpu.dot_dimension_numbers<[1], [0], [0], [1], [0, 0, 1, 1], [], []>} : vector<64x16xf32>, vector<16x32xf32>, vector<64x32xf32> -> vector<64x32xf32>
    %95 = arith.addf %89, %94 : vector<64x32xf32>
    %c0_112 = arith.constant 0 : index
    %c9 = arith.constant 9 : index
    %c0_113 = arith.constant 0 : index
    %96 = vector.load %arg8[%c0_112, %c9, %c0_113] : memref<10x24x16xf32, #tpu.memory_space<vmem>>, vector<8x8x16xf32>
    %97 = vector.shape_cast %96 : vector<8x8x16xf32> to vector<64x16xf32>
    %c0_114 = arith.constant 0 : index
    %c2_115 = arith.constant 2 : index
    %c0_116 = arith.constant 0 : index
    %c0_117 = arith.constant 0 : index
    %98 = vector.load %arg4[%c0_114, %c2_115, %c0_116, %c0_117] : memref<3x3x16x32xf32, #tpu.memory_space<vmem>>, vector<1x1x16x32xf32>
    %99 = vector.shape_cast %98 : vector<1x1x16x32xf32> to vector<16x32xf32>
    %cst_118 = arith.constant dense<0.000000e+00> : vector<64x32xf32>
    %100 = tpu.matmul %97, %99, %cst_118 {dimension_numbers = #tpu.dot_dimension_numbers<[1], [0], [0], [1], [0, 0, 1, 1], [], []>} : vector<64x16xf32>, vector<16x32xf32>, vector<64x32xf32> -> vector<64x32xf32>
    %101 = arith.addf %95, %100 : vector<64x32xf32>
    %c1_119 = arith.constant 1 : index
    %c7_120 = arith.constant 7 : index
    %c0_121 = arith.constant 0 : index
    %102 = vector.load %arg8[%c1_119, %c7_120, %c0_121] : memref<10x24x16xf32, #tpu.memory_space<vmem>>, vector<8x8x16xf32>
    %103 = vector.shape_cast %102 : vector<8x8x16xf32> to vector<64x16xf32>
    %c1_122 = arith.constant 1 : index
    %c0_123 = arith.constant 0 : index
    %c0_124 = arith.constant 0 : index
    %c0_125 = arith.constant 0 : index
    %104 = vector.load %arg4[%c1_122, %c0_123, %c0_124, %c0_125] : memref<3x3x16x32xf32, #tpu.memory_space<vmem>>, vector<1x1x16x32xf32>
    %105 = vector.shape_cast %104 : vector<1x1x16x32xf32> to vector<16x32xf32>
    %cst_126 = arith.constant dense<0.000000e+00> : vector<64x32xf32>
    %106 = tpu.matmul %103, %105, %cst_126 {dimension_numbers = #tpu.dot_dimension_numbers<[1], [0], [0], [1], [0, 0, 1, 1], [], []>} : vector<64x16xf32>, vector<16x32xf32>, vector<64x32xf32> -> vector<64x32xf32>
    %107 = arith.addf %101, %106 : vector<64x32xf32>
    %c1_127 = arith.constant 1 : index
    %c8_128 = arith.constant 8 : index
    %c0_129 = arith.constant 0 : index
    %108 = vector.load %arg8[%c1_127, %c8_128, %c0_129] : memref<10x24x16xf32, #tpu.memory_space<vmem>>, vector<8x8x16xf32>
    %109 = vector.shape_cast %108 : vector<8x8x16xf32> to vector<64x16xf32>
    %c1_130 = arith.constant 1 : index
    %c1_131 = arith.constant 1 : index
    %c0_132 = arith.constant 0 : index
    %c0_133 = arith.constant 0 : index
    %110 = vector.load %arg4[%c1_130, %c1_131, %c0_132, %c0_133] : memref<3x3x16x32xf32, #tpu.memory_space<vmem>>, vector<1x1x16x32xf32>
    %111 = vector.shape_cast %110 : vector<1x1x16x32xf32> to vector<16x32xf32>
    %cst_134 = arith.constant dense<0.000000e+00> : vector<64x32xf32>
    %112 = tpu.matmul %109, %111, %cst_134 {dimension_numbers = #tpu.dot_dimension_numbers<[1], [0], [0], [1], [0, 0, 1, 1], [], []>} : vector<64x16xf32>, vector<16x32xf32>, vector<64x32xf32> -> vector<64x32xf32>
    %113 = arith.addf %107, %112 : vector<64x32xf32>
    %c1_135 = arith.constant 1 : index
    %c9_136 = arith.constant 9 : index
    %c0_137 = arith.constant 0 : index
    %114 = vector.load %arg8[%c1_135, %c9_136, %c0_137] : memref<10x24x16xf32, #tpu.memory_space<vmem>>, vector<8x8x16xf32>
    %115 = vector.shape_cast %114 : vector<8x8x16xf32> to vector<64x16xf32>
    %c1_138 = arith.constant 1 : index
    %c2_139 = arith.constant 2 : index
    %c0_140 = arith.constant 0 : index
    %c0_141 = arith.constant 0 : index
    %116 = vector.load %arg4[%c1_138, %c2_139, %c0_140, %c0_141] : memref<3x3x16x32xf32, #tpu.memory_space<vmem>>, vector<1x1x16x32xf32>
    %117 = vector.shape_cast %116 : vector<1x1x16x32xf32> to vector<16x32xf32>
    %cst_142 = arith.constant dense<0.000000e+00> : vector<64x32xf32>
    %118 = tpu.matmul %115, %117, %cst_142 {dimension_numbers = #tpu.dot_dimension_numbers<[1], [0], [0], [1], [0, 0, 1, 1], [], []>} : vector<64x16xf32>, vector<16x32xf32>, vector<64x32xf32> -> vector<64x32xf32>
    %119 = arith.addf %113, %118 : vector<64x32xf32>
    %c2_143 = arith.constant 2 : index
    %c7_144 = arith.constant 7 : index
    %c0_145 = arith.constant 0 : index
    %120 = vector.load %arg8[%c2_143, %c7_144, %c0_145] : memref<10x24x16xf32, #tpu.memory_space<vmem>>, vector<8x8x16xf32>
    %121 = vector.shape_cast %120 : vector<8x8x16xf32> to vector<64x16xf32>
    %c2_146 = arith.constant 2 : index
    %c0_147 = arith.constant 0 : index
    %c0_148 = arith.constant 0 : index
    %c0_149 = arith.constant 0 : index
    %122 = vector.load %arg4[%c2_146, %c0_147, %c0_148, %c0_149] : memref<3x3x16x32xf32, #tpu.memory_space<vmem>>, vector<1x1x16x32xf32>
    %123 = vector.shape_cast %122 : vector<1x1x16x32xf32> to vector<16x32xf32>
    %cst_150 = arith.constant dense<0.000000e+00> : vector<64x32xf32>
    %124 = tpu.matmul %121, %123, %cst_150 {dimension_numbers = #tpu.dot_dimension_numbers<[1], [0], [0], [1], [0, 0, 1, 1], [], []>} : vector<64x16xf32>, vector<16x32xf32>, vector<64x32xf32> -> vector<64x32xf32>
    %125 = arith.addf %119, %124 : vector<64x32xf32>
    %c2_151 = arith.constant 2 : index
    %c8_152 = arith.constant 8 : index
    %c0_153 = arith.constant 0 : index
    %126 = vector.load %arg8[%c2_151, %c8_152, %c0_153] : memref<10x24x16xf32, #tpu.memory_space<vmem>>, vector<8x8x16xf32>
    %127 = vector.shape_cast %126 : vector<8x8x16xf32> to vector<64x16xf32>
    %c2_154 = arith.constant 2 : index
    %c1_155 = arith.constant 1 : index
    %c0_156 = arith.constant 0 : index
    %c0_157 = arith.constant 0 : index
    %128 = vector.load %arg4[%c2_154, %c1_155, %c0_156, %c0_157] : memref<3x3x16x32xf32, #tpu.memory_space<vmem>>, vector<1x1x16x32xf32>
    %129 = vector.shape_cast %128 : vector<1x1x16x32xf32> to vector<16x32xf32>
    %cst_158 = arith.constant dense<0.000000e+00> : vector<64x32xf32>
    %130 = tpu.matmul %127, %129, %cst_158 {dimension_numbers = #tpu.dot_dimension_numbers<[1], [0], [0], [1], [0, 0, 1, 1], [], []>} : vector<64x16xf32>, vector<16x32xf32>, vector<64x32xf32> -> vector<64x32xf32>
    %131 = arith.addf %125, %130 : vector<64x32xf32>
    %c2_159 = arith.constant 2 : index
    %c9_160 = arith.constant 9 : index
    %c0_161 = arith.constant 0 : index
    %132 = vector.load %arg8[%c2_159, %c9_160, %c0_161] : memref<10x24x16xf32, #tpu.memory_space<vmem>>, vector<8x8x16xf32>
    %133 = vector.shape_cast %132 : vector<8x8x16xf32> to vector<64x16xf32>
    %c2_162 = arith.constant 2 : index
    %c2_163 = arith.constant 2 : index
    %c0_164 = arith.constant 0 : index
    %c0_165 = arith.constant 0 : index
    %134 = vector.load %arg4[%c2_162, %c2_163, %c0_164, %c0_165] : memref<3x3x16x32xf32, #tpu.memory_space<vmem>>, vector<1x1x16x32xf32>
    %135 = vector.shape_cast %134 : vector<1x1x16x32xf32> to vector<16x32xf32>
    %cst_166 = arith.constant dense<0.000000e+00> : vector<64x32xf32>
    %136 = tpu.matmul %133, %135, %cst_166 {dimension_numbers = #tpu.dot_dimension_numbers<[1], [0], [0], [1], [0, 0, 1, 1], [], []>} : vector<64x16xf32>, vector<16x32xf32>, vector<64x32xf32> -> vector<64x32xf32>
    %137 = arith.addf %131, %136 : vector<64x32xf32>
    %c0_167 = arith.constant 0 : index
    %c0_168 = arith.constant 0 : index
    %138 = vector.load %arg5[%c0_167, %c0_168] : memref<1x32xf32, #tpu.memory_space<vmem>>, vector<1x32xf32>
    %139 = vector.broadcast %138 : vector<1x32xf32> to vector<64x32xf32>
    %140 = arith.addf %137, %139 : vector<64x32xf32>
    %cst_169 = arith.constant 0.000000e+00 : f32
    %141 = vector.broadcast %cst_169 : f32 to vector<64x32xf32>
    %142 = arith.maximumf %140, %141 : vector<64x32xf32>
    %143 = vector.shape_cast %142 : vector<64x32xf32> to vector<8x8x32xf32>
    %c0_170 = arith.constant 0 : index
    %c0_171 = arith.constant 0 : index
    %c0_172 = arith.constant 0 : index
    %144 = vector.load %arg9[%c0_170, %c0_171, %c0_172] : memref<8x8x32xf32, #tpu.memory_space<vmem>>, vector<8x8x32xf32>
    tpu.vector_store %arg9[%c0_170, %c0_171, %c0_172], %143 {strides = array<i32>} : memref<8x8x32xf32, #tpu.memory_space<vmem>>, vector<8x8x32xf32>,
    %c0_173 = arith.constant 0 : index
    %c0_174 = arith.constant 0 : index
    %c0_175 = arith.constant 0 : index
    %145 = tpu.strided_load %arg9[%c0_173, %c0_174, %c0_175] {strides = array<i32: 1, 2, 1>} : memref<8x8x32xf32, #tpu.memory_space<vmem>>, vector<8x4x32xf32>
    %c0_176 = arith.constant 0 : index
    %c1_177 = arith.constant 1 : index
    %c0_178 = arith.constant 0 : index
    %146 = tpu.strided_load %arg9[%c0_176, %c1_177, %c0_178] {strides = array<i32: 1, 2, 1>} : memref<8x8x32xf32, #tpu.memory_space<vmem>>, vector<8x4x32xf32>
    %147 = arith.maximumf %145, %146 : vector<8x4x32xf32>
    %148 = vector.shape_cast %147 : vector<8x4x32xf32> to vector<4x2x4x32xf32>
    %149 = vector.extract_strided_slice %148 {offsets = [0, 0, 0, 0], sizes = [4, 1, 4, 32], strides = [1, 1, 1, 1]} : vector<4x2x4x32xf32> to vector<4x1x4x32xf32>
    %150 = vector.shape_cast %149 : vector<4x1x4x32xf32> to vector<4x4x32xf32>
    %151 = vector.extract_strided_slice %148 {offsets = [0, 1, 0, 0], sizes = [4, 1, 4, 32], strides = [1, 1, 1, 1]} : vector<4x2x4x32xf32> to vector<4x1x4x32xf32>
    %152 = vector.shape_cast %151 : vector<4x1x4x32xf32> to vector<4x4x32xf32>
    %153 = arith.maximumf %150, %152 : vector<4x4x32xf32>
    %c0_179 = arith.constant 0 : index
    %c0_180 = arith.constant 0 : index
    %c0_181 = arith.constant 0 : index
    %c0_182 = arith.constant 0 : index
    %154 = vector.load %arg6[%c0_179, %c0_180, %c0_181, %c0_182] : memref<1x4x4x32xf32, #tpu.memory_space<vmem>>, vector<1x4x4x32xf32>
    %155 = vector.shape_cast %154 : vector<1x4x4x32xf32> to vector<4x4x32xf32>
    %156 = vector.shape_cast %153 : vector<4x4x32xf32> to vector<1x4x4x32xf32>
    tpu.vector_store %arg6[%c0_179, %c0_180, %c0_181, %c0_182], %156 {strides = array<i32>} : memref<1x4x4x32xf32, #tpu.memory_space<vmem>>, vector<1x4x4x32xf32>,
    return
  }
  func.func @transform_0(%arg0: i32) -> (i32, i32, i32, i32) {
    %c0_i32 = arith.constant 0 : i32
    %c0_i32_0 = arith.constant 0 : i32
    %c0_i32_1 = arith.constant 0 : i32
    %c0_i32_2 = arith.constant 0 : i32
    return %arg0, %c0_i32, %c0_i32_0, %c0_i32_1 : i32, i32, i32, i32
  }
  func.func @transform_1(%arg0: i32) -> (i32, i32, i32, i32) {
    %c0_i32 = arith.constant 0 : i32
    %c0_i32_0 = arith.constant 0 : i32
    %c0_i32_1 = arith.constant 0 : i32
    %c0_i32_2 = arith.constant 0 : i32
    %c0_i32_3 = arith.constant 0 : i32
    return %c0_i32, %c0_i32_0, %c0_i32_1, %c0_i32_2 : i32, i32, i32, i32
  }
  func.func @transform_2(%arg0: i32) -> (i32, i32) {
    %c0_i32 = arith.constant 0 : i32
    %c0_i32_0 = arith.constant 0 : i32
    %c0_i32_1 = arith.constant 0 : i32
    return %c0_i32, %c0_i32_0 : i32, i32
  }
  func.func @transform_3(%arg0: i32) -> (i32, i32, i32, i32) {
    %c0_i32 = arith.constant 0 : i32
    %c0_i32_0 = arith.constant 0 : i32
    %c0_i32_1 = arith.constant 0 : i32
    %c0_i32_2 = arith.constant 0 : i32
    %c0_i32_3 = arith.constant 0 : i32
    return %c0_i32, %c0_i32_0, %c0_i32_1, %c0_i32_2 : i32, i32, i32, i32
  }
  func.func @transform_4(%arg0: i32) -> (i32, i32) {
    %c0_i32 = arith.constant 0 : i32
    %c0_i32_0 = arith.constant 0 : i32
    %c0_i32_1 = arith.constant 0 : i32
    return %c0_i32, %c0_i32_0 : i32, i32
  }
  func.func @transform_5(%arg0: i32) -> (i32, i32, i32, i32) {
    %c0_i32 = arith.constant 0 : i32
    %c0_i32_0 = arith.constant 0 : i32
    %c0_i32_1 = arith.constant 0 : i32
    %c0_i32_2 = arith.constant 0 : i32
    return %arg0, %c0_i32, %c0_i32_0, %c0_i32_1 : i32, i32, i32, i32
  }
}

</mosaic_0001>

<llo_original>
// kernel: tpu_custom_call.1
$region0: #{tpu_custom_call.1}
  #allocation0 [shape = 'u32[]', space=smem, size = 0x4, offset = 0x4, fixed_abs, tag = 'smem constant byte address 0x4 - core index']
  #allocation1 [shape = 'u32[144,128]{1,0:T(1,128)}', space=vmem, size = 0x12000, scoped, tag = 'internal scratch']
  #allocation2 [shape = 'f32[16,16,16]{2,1,0:T(8,128)}', space=vmem, size = 0x20000, scoped, tag = 'scratch operand']
  #allocation3 [shape = 'f32[10,24,16]{2,1,0:T(8,128)}', space=vmem, size = 0x1e000, scoped, tag = 'scratch operand']
  #allocation4 [shape = 'f32[8,8,32]{2,1,0:T(8,128)}', space=vmem, size = 0x8000, scoped, tag = 'scratch operand']
  %s0 = inlined_call_operand.vmem [shape: f32[2,18,18,3], index: 0, kind: input, shape index: {}]
  %s1 = inlined_call_operand.vmem [shape: f32[3,3,3,16], index: 1, kind: input, shape index: {}]
  %s2 = inlined_call_operand.vmem [shape: f32[1,16], index: 2, kind: input, shape index: {}]
  %s3 = inlined_call_operand.vmem [shape: f32[3,3,16,32], index: 3, kind: input, shape index: {}]
  %s4 = inlined_call_operand.vmem [shape: f32[1,32], index: 4, kind: input, shape index: {}]
  %s5 = inlined_call_operand.hbm [shape: f32[2,4,4,32], index: 5, kind: output, shape index: {}]
  %s6 = sld [smem:[#allocation0]]
  $region53: #{tpu_custom_call.1} parent=0
    _
  %s8 = ssub.s32 1, %s6
  %s9 = scalar_select 0, %s8, %s6
  $region1: #{tpu_custom_call.1} parent=0
    #allocation5 [shape = 'u8[16384]{0}', space=vmem, size = 0x4000, scoped, tag = 'output window, operand 0']
    #allocation6 [shape = 's32[2]{0}', space=sflag, size = 0x8, scoped, tag = 'scoped memory for tpu_custom_call.1']
    %10 = vsyncpa [#allocation6], 0
    %s11 = scalar_lea.sflag [#allocation6], 1
    %12 = vsyncpa %s11, 0
    loop: start=0, step=1, limit=4
    $region2: #{tpu_custom_call.1} parent=1 // loop_pre_header
      _
    $region3: #{tpu_custom_call.1} parent=1 // loop_header
      %s14 = sphi 0, %s18
      %p15 = scmp.ge.s32.totalorder %s14, 4
      %s24 = sphi 0, %s26
      %s27 = sphi 0, %s24
      %s28 = sphi 0, %s27
      %s44 = sphi 0, %s28
      %s48 = sphi 0, %s48
      %s50 = sphi 0, %s48
      %s51 = sphi 0, %s50
      %s65 = sphi 0, %s51
      %s69 = sphi 0, %s69
      %s71 = sphi 0, %s69
      %s72 = sphi 0, %s71
      %s86 = sphi 0, %s72
      %s90 = sphi 0, %s90
      %s92 = sphi 0, %s90
      %s93 = sphi 0, %s92
      %s107 = sphi 0, %s93
      %s111 = sphi 0, %s111
      %s113 = sphi 0, %s111
      %s114 = sphi 0, %s113
      %s128 = sphi 0, %s114
      %s134 = sphi 0, %s136
      %s137 = sphi 0, %s134
      %s138 = sphi 0, %s137
      %s154 = sphi 0, %s138
    $region4: #{tpu_custom_call.1} parent=1 // loop_header_branch
      %17 = sbr.rel (%p15) target = $region8
    $region5: #{tpu_custom_call.1} parent=1 // loop_body
      %s19 = ssub.s32 %s14, 1
      %s20 = ssub.s32 %s14, 2
      %s21 = sadd.s32 %s14, 1
      %s22 = ssub.s32 %s14, %s21
      %p23 = scmp.eq.s32.totalorder %s22, 0
      %s25 = sadd.s32 %s24, 1
      %s26 = scalar_select %p23, %s24, %s25
      %p29 = pneg %p23
      %p30 = scmp.eq.s32.totalorder %s14, 1
      %p31 = por %p29, %p30
      %p32 = scmp.ne.s32.totalorder %s24, %s27
      %p33 = scmp.eq.s32.totalorder %s14, 0
      %p34 = por %p32, %p33
      %p35 = scmp.ne.s32.totalorder %s24, %s27
      %p36 = scmp.eq.s32.totalorder %s19, 1
      %p37 = por %p35, %p36
      %p38 = scmp.ne.s32.totalorder %s27, %s28
      %p39 = scmp.eq.s32.totalorder %s19, 0
      %p40 = por %p38, %p39
      %p41 = scmp.ne.s32.totalorder %s27, %s28
      %p42 = scmp.eq.s32.totalorder %s20, 1
      %p43 = por %p41, %p42
      %p45 = scmp.ne.s32.totalorder %s28, %s44
      %p46 = scmp.eq.s32.totalorder %s20, 0
      %p47 = por %p45, %p46
      %s49 = sadd.s32 %s48, 1
      %p52 = scmp.eq.s32.totalorder %s14, 1
      %p53 = scmp.ne.s32.totalorder %s48, %s50
      %p54 = scmp.eq.s32.totalorder %s14, 0
      %p55 = por %p53, %p54
      %p56 = scmp.ne.s32.totalorder %s48, %s50
      %p57 = scmp.eq.s32.totalorder %s19, 1
      %p58 = por %p56, %p57
      %p59 = scmp.ne.s32.totalorder %s50, %s51
      %p60 = scmp.eq.s32.totalorder %s19, 0
      %p61 = por %p59, %p60
      %p62 = scmp.ne.s32.totalorder %s50, %s51
      %p63 = scmp.eq.s32.totalorder %s20, 1
      %p64 = por %p62, %p63
      %p66 = scmp.ne.s32.totalorder %s51, %s65
      %p67 = scmp.eq.s32.totalorder %s20, 0
      %p68 = por %p66, %p67
      %s70 = sadd.s32 %s69, 1
      %p73 = scmp.eq.s32.totalorder %s14, 1
      %p74 = scmp.ne.s32.totalorder %s69, %s71
      %p75 = scmp.eq.s32.totalorder %s14, 0
      %p76 = por %p74, %p75
      %p77 = scmp.ne.s32.totalorder %s69, %s71
      %p78 = scmp.eq.s32.totalorder %s19, 1
      %p79 = por %p77, %p78
      %p80 = scmp.ne.s32.totalorder %s71, %s72
      %p81 = scmp.eq.s32.totalorder %s19, 0
      %p82 = por %p80, %p81
      %p83 = scmp.ne.s32.totalorder %s71, %s72
      %p84 = scmp.eq.s32.totalorder %s20, 1
      %p85 = por %p83, %p84
      %p87 = scmp.ne.s32.totalorder %s72, %s86
      %p88 = scmp.eq.s32.totalorder %s20, 0
      %p89 = por %p87, %p88
      %s91 = sadd.s32 %s90, 1
      %p94 = scmp.eq.s32.totalorder %s14, 1
      %p95 = scmp.ne.s32.totalorder %s90, %s92
      %p96 = scmp.eq.s32.totalorder %s14, 0
      %p97 = por %p95, %p96
      %p98 = scmp.ne.s32.totalorder %s90, %s92
      %p99 = scmp.eq.s32.totalorder %s19, 1
      %p100 = por %p98, %p99
      %p101 = scmp.ne.s32.totalorder %s92, %s93
      %p102 = scmp.eq.s32.totalorder %s19, 0
      %p103 = por %p101, %p102
      %p104 = scmp.ne.s32.totalorder %s92, %s93
      %p105 = scmp.eq.s32.totalorder %s20, 1
      %p106 = por %p104, %p105
      %p108 = scmp.ne.s32.totalorder %s93, %s107
      %p109 = scmp.eq.s32.totalorder %s20, 0
      %p110 = por %p108, %p109
      %s112 = sadd.s32 %s111, 1
      %p115 = scmp.eq.s32.totalorder %s14, 1
      %p116 = scmp.ne.s32.totalorder %s111, %s113
      %p117 = scmp.eq.s32.totalorder %s14, 0
      %p118 = por %p116, %p117
      %p119 = scmp.ne.s32.totalorder %s111, %s113
      %p120 = scmp.eq.s32.totalorder %s19, 1
      %p121 = por %p119, %p120
      %p122 = scmp.ne.s32.totalorder %s113, %s114
      %p123 = scmp.eq.s32.totalorder %s19, 0
      %p124 = por %p122, %p123
      %p125 = scmp.ne.s32.totalorder %s113, %s114
      %p126 = scmp.eq.s32.totalorder %s20, 1
      %p127 = por %p125, %p126
      %p129 = scmp.ne.s32.totalorder %s114, %s128
      %p130 = scmp.eq.s32.totalorder %s20, 0
      %p131 = por %p129, %p130
      %s132 = ssub.s32 %s14, %s21
      %p133 = scmp.eq.s32.totalorder %s132, 0
      %s135 = sadd.s32 %s134, 1
      %s136 = scalar_select %p133, %s134, %s135
      %p139 = pneg %p133
      %p140 = scmp.eq.s32.totalorder %s14, 1
      %p141 = por %p139, %p140
      %p142 = scmp.ne.s32.totalorder %s134, %s137
      %p143 = scmp.eq.s32.totalorder %s14, 0
      %p144 = por %p142, %p143
      %p145 = scmp.ne.s32.totalorder %s134, %s137
      %p146 = scmp.eq.s32.totalorder %s19, 1
      %p147 = por %p145, %p146
      %p148 = scmp.ne.s32.totalorder %s137, %s138
      %p149 = scmp.eq.s32.totalorder %s19, 0
      %p150 = por %p148, %p149
      %p151 = scmp.ne.s32.totalorder %s137, %s138
      %p152 = scmp.eq.s32.totalorder %s20, 1
      %p153 = por %p151, %p152
      %p155 = scmp.ne.s32.totalorder %s138, %s154
      %p156 = scmp.eq.s32.totalorder %s20, 0
      %p157 = por %p155, %p156
      %p158 = scmp.le.s32.totalorder 1, %s14
      %p159 = scmp.lt.s32.totalorder %s14, 3
      %p160 = pnand %p158, %p159
      %p161 = pneg %p160
      // Predicated region
      $region9: #{tpu_custom_call.1} parent=5 // pred_check
        _
      $region10: #{tpu_custom_call.1} parent=5 // pred_check_branch
        %163 = sbr.rel (%p160) target = $region12
      $region11: #{tpu_custom_call.1} parent=5 // pred_region
        %s164 = ssub.s32 %s14, 1
        // Predicated region
        $region13: #{tpu_custom_call.1} parent=11 // pred_check
          %p165 = pneg %p61
        $region14: #{tpu_custom_call.1} parent=11 // pred_check_branch
          %167 = sbr.rel (%p165) target = $region16
        $region15: #{tpu_custom_call.1} parent=11 // pred_region
          _
        $region16: #{tpu_custom_call.1} parent=11 // pred_fallthru
          _
        // Predicated region
        $region17: #{tpu_custom_call.1} parent=11 // pred_check
          %p168 = pneg %p82
        $region18: #{tpu_custom_call.1} parent=11 // pred_check_branch
          %170 = sbr.rel (%p168) target = $region20
        $region19: #{tpu_custom_call.1} parent=11 // pred_region
          _
        $region20: #{tpu_custom_call.1} parent=11 // pred_fallthru
          _
        // Predicated region
        $region21: #{tpu_custom_call.1} parent=11 // pred_check
          %p171 = pneg %p103
        $region22: #{tpu_custom_call.1} parent=11 // pred_check_branch
          %173 = sbr.rel (%p171) target = $region24
        $region23: #{tpu_custom_call.1} parent=11 // pred_region
          _
        $region24: #{tpu_custom_call.1} parent=11 // pred_fallthru
          _
        // Predicated region
        $region25: #{tpu_custom_call.1} parent=11 // pred_check
          %p174 = pneg %p124
        $region26: #{tpu_custom_call.1} parent=11 // pred_check_branch
          %176 = sbr.rel (%p174) target = $region28
        $region27: #{tpu_custom_call.1} parent=11 // pred_region
          _
        $region28: #{tpu_custom_call.1} parent=11 // pred_fallthru
          _
      $region12: #{tpu_custom_call.1} parent=5 // pred_fallthru
        _
      %p177 = scmp.lt.s32.totalorder %s14, 2
      // Predicated region
      $region29: #{tpu_custom_call.1} parent=5 // pred_check
        %p178 = pneg %p177
      $region30: #{tpu_custom_call.1} parent=5 // pred_check_branch
        %180 = sbr.rel (%p178) target = $region32
      $region31: #{tpu_custom_call.1} parent=5 // pred_region
        // Predicated region
        $region33: #{tpu_custom_call.1} parent=31 // pred_check
          %p181 = pneg %p34
        $region34: #{tpu_custom_call.1} parent=31 // pred_check_branch
          %183 = sbr.rel (%p181) target = $region36
        $region35: #{tpu_custom_call.1} parent=31 // pred_region
          %p184 = scmp.lt.s32.totalorder %s14, 1
          %s185 = scalar_select %p184, %s14, 1
          %s186 = smul.addr %s185, 54
          %s187 = smul.addr %s186, 8
          %s188 = scalar_lea.vmem %s0, %s187
        $region36: #{tpu_custom_call.1} parent=31 // pred_fallthru
          _
      $region32: #{tpu_custom_call.1} parent=5 // pred_fallthru
        _
      %p189 = scmp.le.s32.totalorder 1, %s14
      %p190 = scmp.lt.s32.totalorder %s14, 3
      %p191 = pnand %p189, %p190
      %p192 = pneg %p191
      // Predicated region
      $region37: #{tpu_custom_call.1} parent=5 // pred_check
        _
      $region38: #{tpu_custom_call.1} parent=5 // pred_check_branch
        %194 = sbr.rel (%p191) target = $region40
      $region39: #{tpu_custom_call.1} parent=5 // pred_region
        %s195 = ssub.s32 %s14, 1
        %p196 = scmp.lt.s32.totalorder %s19, 1
        %s197 = scalar_select %p196, %s19, 1
        %s198 = smul.addr %s197, 54
        %s199 = smul.addr %s198, 8
        %s200 = scalar_lea.vmem %s0, %s199
        %p201 = pneg %p40
        %p202 = pneg %p37
        %p203 = pneg %p61
        %p204 = pneg %p58
        %p205 = pneg %p82
        %p206 = pneg %p79
        %p207 = pneg %p103
        %p208 = pneg %p100
        %p209 = pneg %p124
        %p210 = pneg %p121
        %p211 = pneg %p150
        %p212 = pneg %p147
        %s213 = sand.u32 %s137, 1
        %s214 = scalar_lea.sflag [#allocation6], %s213
        %s215 = sand.u32 %s137, 1
        %s216 = smul.addr %s215, 16
        %s217 = scalar_lea.vmem [#allocation5], %s216
        %p218 = scmp.lt.s32.totalorder %s19, 1
        %s219 = scalar_select %p218, %s19, 1
        %s220 = smul.addr %s219, 54
        %s221 = smul.addr %s220, 8
        %s222 = scalar_lea.vmem %s0, %s221
        %v223 = vld [vmem:[%s222] sm:$0xff]
        %v224 = vld [vmem:[%s222 + $0x8] sm:$0xff]
        %v225 = vld [vmem:[%s222 + $0x18] sm:$0xff]
        %v226 = vld [vmem:[%s222 + $0x20] sm:$0xff]
        %v227 = vld [vmem:[%s222 + $0x30] sm:$0xff]
        %v228 = vld [vmem:[%s222 + $0x38] sm:$0xff]
        %v229 = vld [vmem:[%s222 + $0x48] sm:$0xff]
        %v230 = vld [vmem:[%s222 + $0x50] sm:$0xff]
        %v231 = vld [vmem:[%s222 + $0x60] sm:$0xff]
        %v232 = vld [vmem:[%s222 + $0x68] sm:$0xff]
        %v233 = vld [vmem:[%s222 + $0x78] sm:$0xff]
        %v234 = vld [vmem:[%s222 + $0x80] sm:$0xff]
        %v235 = vld [vmem:[%s222 + $0x90] sm:$0xff]
        %v236 = vld [vmem:[%s222 + $0x98] sm:$0xff]
        %v237 = vld [vmem:[%s222 + $0xa8] sm:$0xff]
        %v238 = vld [vmem:[%s222 + $0xb0] sm:$0xff]
        %v239 = vld [vmem:[%s222 + $0xc0] sm:$0xff]
        %v240 = vld [vmem:[%s222 + $0xc8] sm:$0xff]
        %v241 = vld [vmem:[%s222 + $0xd8] sm:$0xff]
        %v242 = vld [vmem:[%s222 + $0xe0] sm:$0xff]
        %v243 = vld [vmem:[%s222 + $0xf0] sm:$0xff]
        %v244 = vld [vmem:[%s222 + $0xf8] sm:$0xff]
        %v245 = vld [vmem:[%s222 + $0x108] sm:$0xff]
        %v246 = vld [vmem:[%s222 + $0x110] sm:$0xff]
        %v247 = vld [vmem:[%s222 + $0x120] sm:$0xff]
        %v248 = vld [vmem:[%s222 + $0x128] sm:$0xff]
        %v249 = vld [vmem:[%s222 + $0x138] sm:$0xff]
        %v250 = vld [vmem:[%s222 + $0x140] sm:$0xff]
        %v251 = vld [vmem:[%s222 + $0x150] sm:$0xff]
        %v252 = vld [vmem:[%s222 + $0x158] sm:$0xff]
        %v253 = vld [vmem:[%s222 + $0x168] sm:$0xff]
        %v254 = vld [vmem:[%s222 + $0x170] sm:$0xff]
        %v255 = vld [vmem:[%s1] sm:$0x7]
        %v256 = vld [vmem:[%s222 + $0x1] sm:$0xff]
        %v257 = vld [vmem:[%s222 + $0x9] sm:$0xff]
        %v258 = vld [vmem:[%s222 + $0x19] sm:$0xff]
        %v259 = vld [vmem:[%s222 + $0x21] sm:$0xff]
        %v260 = vld [vmem:[%s222 + $0x31] sm:$0xff]
        %v261 = vld [vmem:[%s222 + $0x39] sm:$0xff]
        %v262 = vld [vmem:[%s222 + $0x49] sm:$0xff]
        %v263 = vld [vmem:[%s222 + $0x51] sm:$0xff]
        %v264 = vld [vmem:[%s222 + $0x61] sm:$0xff]
        %v265 = vld [vmem:[%s222 + $0x69] sm:$0xff]
        %v266 = vld [vmem:[%s222 + $0x79] sm:$0xff]
        %v267 = vld [vmem:[%s222 + $0x81] sm:$0xff]
        %v268 = vld [vmem:[%s222 + $0x91] sm:$0xff]
        %v269 = vld [vmem:[%s222 + $0x99] sm:$0xff]
        %v270 = vld [vmem:[%s222 + $0xa9] sm:$0xff]
        %v271 = vld [vmem:[%s222 + $0xb1] sm:$0xff]
        %v272 = vld [vmem:[%s222 + $0xc1] sm:$0xff]
        %v273 = vld [vmem:[%s222 + $0xc9] sm:$0xff]
        %v274 = vld [vmem:[%s222 + $0xd9] sm:$0xff]
        %v275 = vld [vmem:[%s222 + $0xe1] sm:$0xff]
        %v276 = vld [vmem:[%s222 + $0xf1] sm:$0xff]
        %v277 = vld [vmem:[%s222 + $0xf9] sm:$0xff]
        %v278 = vld [vmem:[%s222 + $0x109] sm:$0xff]
        %v279 = vld [vmem:[%s222 + $0x111] sm:$0xff]
        %v280 = vld [vmem:[%s222 + $0x121] sm:$0xff]
        %v281 = vld [vmem:[%s222 + $0x129] sm:$0xff]
        %v282 = vld [vmem:[%s222 + $0x139] sm:$0xff]
        %v283 = vld [vmem:[%s222 + $0x141] sm:$0xff]
        %v284 = vld [vmem:[%s222 + $0x151] sm:$0xff]
        %v285 = vld [vmem:[%s222 + $0x159] sm:$0xff]
        %v286 = vld [vmem:[%s222 + $0x169] sm:$0xff]
        %v287 = vld [vmem:[%s222 + $0x171] sm:$0xff]
        %s288 = scalar_lea.vmem %s1, 4
        %v289 = vld [vmem:[%s288] sm:$0x7]
        %vm290 = vcmask 23552
        %v292 = vsel %vm290, %v256, 0
        %v295 = vsel %vm290, %v257, 0
        %v298 = vsel %vm290, %v258, 0
        %v301 = vsel %vm290, %v259, 0
        %v304 = vsel %vm290, %v260, 0
        %v307 = vsel %vm290, %v261, 0
        %v310 = vsel %vm290, %v262, 0
        %v313 = vsel %vm290, %v263, 0
        %v316 = vsel %vm290, %v264, 0
        %v319 = vsel %vm290, %v265, 0
        %v322 = vsel %vm290, %v266, 0
        %v325 = vsel %vm290, %v267, 0
        %v328 = vsel %vm290, %v268, 0
        %v331 = vsel %vm290, %v269, 0
        %v334 = vsel %vm290, %v270, 0
        %v337 = vsel %vm290, %v271, 0
        %v340 = vsel %vm290, %v272, 0
        %v343 = vsel %vm290, %v273, 0
        %v346 = vsel %vm290, %v274, 0
        %v349 = vsel %vm290, %v275, 0
        %v352 = vsel %vm290, %v276, 0
        %v355 = vsel %vm290, %v277, 0
        %v358 = vsel %vm290, %v278, 0
        %v361 = vsel %vm290, %v279, 0
        %v364 = vsel %vm290, %v280, 0
        %v367 = vsel %vm290, %v281, 0
        %v370 = vsel %vm290, %v282, 0
        %v373 = vsel %vm290, %v283, 0
        %v376 = vsel %vm290, %v284, 0
        %v379 = vsel %vm290, %v285, 0
        %v382 = vsel %vm290, %v286, 0
        %v385 = vsel %vm290, %v287, 0
        %vm387 = vcmask 1042432
        %v389 = vsel %vm387, %v289, 0
        %391 = vmatprep.subr.mxu0 0.0
        %392 = vmatpush1.msra.mxu0 %v389
        %393 = vmatprep.subr.mxu0 0.0
        %394 = vmatpush1.msra.mxu0 0.0
        %395 = vmatprep.subr.mxu0 0.0
        %396 = vmatpush1.msra.mxu0 0.0
        %397 = vmatprep.subr.mxu0 0.0
        %398 = vmatpush1.msra.mxu0 0.0
        %399 = vmatprep.subr.mxu0 0.0
        %400 = vmatpush1.msra.mxu0 0.0
        %401 = vmatprep.subr.mxu0 0.0
        %402 = vmatpush1.msra.mxu0 0.0
        %403 = vmatprep.subr.mxu0 0.0
        %404 = vmatpush1.msra.mxu0 0.0
        %405 = vmatprep.subr.mxu0 0.0
        %406 = vmatpush1.msra.mxu0 0.0
        %407 = vmatprep.subr.mxu0 0.0
        %408 = vmatpush1.msra.mxu0 0.0
        %409 = vmatprep.subr.mxu0 0.0
        %410 = vmatpush1.msra.mxu0 0.0
        %411 = vmatprep.subr.mxu0 0.0
        %412 = vmatpush1.msra.mxu0 0.0
        %413 = vmatprep.subr.mxu0 0.0
        %414 = vmatpush1.msra.mxu0 0.0
        %415 = vmatprep.subr.mxu0 0.0
        %416 = vmatpush1.msra.mxu0 0.0
        %417 = vmatprep.subr.mxu0 0.0
        %418 = vmatpush1.msra.mxu0 0.0
        %419 = vmatprep.subr.mxu0 0.0
        %420 = vmatpush1.msra.mxu0 0.0
        %421 = vmatprep.subr.mxu0 0.0
        %422 = vmatpush1.msra.mxu0 0.0
        %423 = vmatprep.subr.mxu0 0.0
        %424 = vmatpush1.msra.mxu0 0.0
        %425 = vmatprep.subr.mxu0 0.0
        %426 = vmatpush1.msra.mxu0 0.0
        %427 = vmatprep.subr.mxu0 0.0
        %428 = vmatpush1.msra.mxu0 0.0
        %429 = vmatprep.subr.mxu0 0.0
        %430 = vmatpush1.msra.mxu0 0.0
        %431 = vmatprep.subr.mxu0 0.0
        %432 = vmatpush1.msra.mxu0 0.0
        %433 = vmatprep.subr.mxu0 0.0
        %434 = vmatpush1.msra.mxu0 0.0
        %435 = vmatprep.subr.mxu0 0.0
        %436 = vmatpush1.msra.mxu0 0.0
        %437 = vmatprep.subr.mxu0 0.0
        %438 = vmatpush1.msra.mxu0 0.0
        %439 = vmatprep.subr.mxu0 0.0
        %440 = vmatpush1.msra.mxu0 0.0
        %441 = vmatprep.subr.mxu0 0.0
        %442 = vmatpush1.msra.mxu0 0.0
        %443 = vmatprep.subr.mxu0 0.0
        %444 = vmatpush1.msra.mxu0 0.0
        %445 = vmatprep.subr.mxu0 0.0
        %446 = vmatpush1.msra.mxu0 0.0
        %447 = vmatprep.subr.mxu0 0.0
        %448 = vmatpush1.msra.mxu0 0.0
        %449 = vmatprep.subr.mxu0 0.0
        %450 = vmatpush1.msra.mxu0 0.0
        %451 = vmatprep.subr.mxu0 0.0
        %452 = vmatpush1.msra.mxu0 0.0
        %453 = vmatprep.subr.mxu0 0.0
        %454 = vmatpush1.msra.mxu0 0.0
        %455 = vmatprep.mubr.f32.mxu0 0.0
        %456 = vmatmul.mubr.f32.gmra.mrb[0].mxu0 %v292
        %v457 = vpop.f32.mrb[0].mxu0
        %v458 = vadd.f32 0.0, %v457
        %v459 = vpop.f32.mrb[0].mxu0
        %460 = vmatprep.mubr.f32.mxu0 0.0
        %461 = vmatmul.mubr.f32.gmra.mrb[0].mxu0 %v295
        %v462 = vpop.f32.mrb[0].mxu0
        %v463 = vadd.f32 0.0, %v462
        %v464 = vpop.f32.mrb[0].mxu0
        %465 = vmatprep.mubr.f32.mxu0 0.0
        %466 = vmatmul.mubr.f32.gmra.mrb[0].mxu0 %v298
        %v467 = vpop.f32.mrb[0].mxu0
        %v468 = vadd.f32 0.0, %v467
        %v469 = vpop.f32.mrb[0].mxu0
        %470 = vmatprep.mubr.f32.mxu0 0.0
        %471 = vmatmul.mubr.f32.gmra.mrb[0].mxu0 %v301
        %v472 = vpop.f32.mrb[0].mxu0
        %v473 = vadd.f32 0.0, %v472
        %v474 = vpop.f32.mrb[0].mxu0
        %475 = vmatprep.mubr.f32.mxu0 0.0
        %476 = vmatmul.mubr.f32.gmra.mrb[0].mxu0 %v304
        %v477 = vpop.f32.mrb[0].mxu0
        %v478 = vadd.f32 0.0, %v477
        %v479 = vpop.f32.mrb[0].mxu0
        %480 = vmatprep.mubr.f32.mxu0 0.0
        %481 = vmatmul.mubr.f32.gmra.mrb[0].mxu0 %v307
        %v482 = vpop.f32.mrb[0].mxu0
        %v483 = vadd.f32 0.0, %v482
        %v484 = vpop.f32.mrb[0].mxu0
        %485 = vmatprep.mubr.f32.mxu0 0.0
        %486 = vmatmul.mubr.f32.gmra.mrb[0].mxu0 %v310
        %v487 = vpop.f32.mrb[0].mxu0
        %v488 = vadd.f32 0.0, %v487
        %v489 = vpop.f32.mrb[0].mxu0
        %490 = vmatprep.mubr.f32.mxu0 0.0
        %491 = vmatmul.mubr.f32.gmra.mrb[0].mxu0 %v313
        %v492 = vpop.f32.mrb[0].mxu0
        %v493 = vadd.f32 0.0, %v492
        %v494 = vpop.f32.mrb[0].mxu0
        %495 = vmatprep.mubr.f32.mxu0 0.0
        %496 = vmatmul.mubr.f32.gmra.mrb[0].mxu0 %v316
        %v497 = vpop.f32.mrb[0].mxu0
        %v498 = vadd.f32 0.0, %v497
        %v499 = vpop.f32.mrb[0].mxu0
        %500 = vmatprep.mubr.f32.mxu0 0.0
        %501 = vmatmul.mubr.f32.gmra.mrb[0].mxu0 %v319
        %v502 = vpop.f32.mrb[0].mxu0
        %v503 = vadd.f32 0.0, %v502
        %v504 = vpop.f32.mrb[0].mxu0
        %505 = vmatprep.mubr.f32.mxu0 0.0
        %506 = vmatmul.mubr.f32.gmra.mrb[0].mxu0 %v322
        %v507 = vpop.f32.mrb[0].mxu0
        %v508 = vadd.f32 0.0, %v507
        %v509 = vpop.f32.mrb[0].mxu0
        %510 = vmatprep.mubr.f32.mxu0 0.0
        %511 = vmatmul.mubr.f32.gmra.mrb[0].mxu0 %v325
        %v512 = vpop.f32.mrb[0].mxu0
        %v513 = vadd.f32 0.0, %v512
        %v514 = vpop.f32.mrb[0].mxu0
        %515 = vmatprep.mubr.f32.mxu0 0.0
        %516 = vmatmul.mubr.f32.gmra.mrb[0].mxu0 %v328
        %v517 = vpop.f32.mrb[0].mxu0
        %v518 = vadd.f32 0.0, %v517
        %v519 = vpop.f32.mrb[0].mxu0
        %520 = vmatprep.mubr.f32.mxu0 0.0
        %521 = vmatmul.mubr.f32.gmra.mrb[0].mxu0 %v331
        %v522 = vpop.f32.mrb[0].mxu0
        %v523 = vadd.f32 0.0, %v522
        %v524 = vpop.f32.mrb[0].mxu0
        %525 = vmatprep.mubr.f32.mxu0 0.0
        %526 = vmatmul.mubr.f32.gmra.mrb[0].mxu0 %v334
        %v527 = vpop.f32.mrb[0].mxu0
        %v528 = vadd.f32 0.0, %v527
        %v529 = vpop.f32.mrb[0].mxu0
        %530 = vmatprep.mubr.f32.mxu0 0.0
        %531 = vmatmul.mubr.f32.gmra.mrb[0].mxu0 %v337
        %v532 = vpop.f32.mrb[0].mxu0
        %v533 = vadd.f32 0.0, %v532
        %v534 = vpop.f32.mrb[0].mxu0
        %535 = vmatprep.mubr.f32.mxu0 0.0
        %536 = vmatmul.mubr.f32.gmra.mrb[0].mxu0 %v340
        %v537 = vpop.f32.mrb[0].mxu0
        %v538 = vadd.f32 0.0, %v537
        %v539 = vpop.f32.mrb[0].mxu0
        %540 = vmatprep.mubr.f32.mxu0 0.0
        %541 = vmatmul.mubr.f32.gmra.mrb[0].mxu0 %v343
        %v542 = vpop.f32.mrb[0].mxu0
        %v543 = vadd.f32 0.0, %v542
        %v544 = vpop.f32.mrb[0].mxu0
        %545 = vmatprep.mubr.f32.mxu0 0.0
        %546 = vmatmul.mubr.f32.gmra.mrb[0].mxu0 %v346
        %v547 = vpop.f32.mrb[0].mxu0
        %v548 = vadd.f32 0.0, %v547
        %v549 = vpop.f32.mrb[0].mxu0
        %550 = vmatprep.mubr.f32.mxu0 0.0
        %551 = vmatmul.mubr.f32.gmra.mrb[0].mxu0 %v349
        %v552 = vpop.f32.mrb[0].mxu0
        %v553 = vadd.f32 0.0, %v552
        %v554 = vpop.f32.mrb[0].mxu0
        %555 = vmatprep.mubr.f32.mxu0 0.0
        %556 = vmatmul.mubr.f32.gmra.mrb[0].mxu0 %v352
        %v557 = vpop.f32.mrb[0].mxu0
        %v558 = vadd.f32 0.0, %v557
        %v559 = vpop.f32.mrb[0].mxu0
        %560 = vmatprep.mubr.f32.mxu0 0.0
        %561 = vmatmul.mubr.f32.gmra.mrb[0].mxu0 %v355
        %v562 = vpop.f32.mrb[0].mxu0
        %v563 = vadd.f32 0.0, %v562
        %v564 = vpop.f32.mrb[0].mxu0
        %565 = vmatprep.mubr.f32.mxu0 0.0
        %566 = vmatmul.mubr.f32.gmra.mrb[0].mxu0 %v358
        %v567 = vpop.f32.mrb[0].mxu0
        %v568 = vadd.f32 0.0, %v567
        %v569 = vpop.f32.mrb[0].mxu0
        %570 = vmatprep.mubr.f32.mxu0 0.0
        %571 = vmatmul.mubr.f32.gmra.mrb[0].mxu0 %v361
        %v572 = vpop.f32.mrb[0].mxu0
        %v573 = vadd.f32 0.0, %v572
        %v574 = vpop.f32.mrb[0].mxu0
        %575 = vmatprep.mubr.f32.mxu0 0.0
        %576 = vmatmul.mubr.f32.gmra.mrb[0].mxu0 %v364
        %v577 = vpop.f32.mrb[0].mxu0
        %v578 = vadd.f32 0.0, %v577
        %v579 = vpop.f32.mrb[0].mxu0
        %580 = vmatprep.mubr.f32.mxu0 0.0
        %581 = vmatmul.mubr.f32.gmra.mrb[0].mxu0 %v367
        %v582 = vpop.f32.mrb[0].mxu0
        %v583 = vadd.f32 0.0, %v582
        %v584 = vpop.f32.mrb[0].mxu0
        %585 = vmatprep.mubr.f32.mxu0 0.0
        %586 = vmatmul.mubr.f32.gmra.mrb[0].mxu0 %v370
        %v587 = vpop.f32.mrb[0].mxu0
        %v588 = vadd.f32 0.0, %v587
        %v589 = vpop.f32.mrb[0].mxu0
        %590 = vmatprep.mubr.f32.mxu0 0.0
        %591 = vmatmul.mubr.f32.gmra.mrb[0].mxu0 %v373
        %v592 = vpop.f32.mrb[0].mxu0
        %v593 = vadd.f32 0.0, %v592
        %v594 = vpop.f32.mrb[0].mxu0
        %595 = vmatprep.mubr.f32.mxu0 0.0
        %596 = vmatmul.mubr.f32.gmra.mrb[0].mxu0 %v376
        %v597 = vpop.f32.mrb[0].mxu0
        %v598 = vadd.f32 0.0, %v597
        %v599 = vpop.f32.mrb[0].mxu0
        %600 = vmatprep.mubr.f32.mxu0 0.0
        %601 = vmatmul.mubr.f32.gmra.mrb[0].mxu0 %v379
        %v602 = vpop.f32.mrb[0].mxu0
        %v603 = vadd.f32 0.0, %v602
        %v604 = vpop.f32.mrb[0].mxu0
        %605 = vmatprep.mubr.f32.mxu0 0.0
        %606 = vmatmul.mubr.f32.gmra.mrb[0].mxu0 %v382
        %v607 = vpop.f32.mrb[0].mxu0
        %v608 = vadd.f32 0.0, %v607
        %v609 = vpop.f32.mrb[0].mxu0
        %610 = vmatprep.mubr.f32.mxu0 0.0
        %611 = vmatmul.mubr.f32.gmra.mrb[0].mxu0 %v385
        %v612 = vpop.f32.mrb[0].mxu0
        %v613 = vadd.f32 0.0, %v612
        %v614 = vpop.f32.mrb[0].mxu0
        %615 = vdwg.mxu0
        %v617 = vsel %vm290, %v223, 0
        %v620 = vsel %vm290, %v224, 0
        %v623 = vsel %vm290, %v225, 0
        %v626 = vsel %vm290, %v226, 0
        %v629 = vsel %vm290, %v227, 0
        %v632 = vsel %vm290, %v228, 0
        %v635 = vsel %vm290, %v229, 0
        %v638 = vsel %vm290, %v230, 0
        %v641 = vsel %vm290, %v231, 0
        %v644 = vsel %vm290, %v232, 0
        %v647 = vsel %vm290, %v233, 0
        %v650 = vsel %vm290, %v234, 0
        %v653 = vsel %vm290, %v235, 0
        %v656 = vsel %vm290, %v236, 0
        %v659 = vsel %vm290, %v237, 0
        %v662 = vsel %vm290, %v238, 0
        %v665 = vsel %vm290, %v239, 0
        %v668 = vsel %vm290, %v240, 0
        %v671 = vsel %vm290, %v241, 0
        %v674 = vsel %vm290, %v242, 0
        %v677 = vsel %vm290, %v243, 0
        %v680 = vsel %vm290, %v244, 0
        %v683 = vsel %vm290, %v245, 0
        %v686 = vsel %vm290, %v246, 0
        %v689 = vsel %vm290, %v247, 0
        %v692 = vsel %vm290, %v248, 0
        %v695 = vsel %vm290, %v249, 0
        %v698 = vsel %vm290, %v250, 0
        %v701 = vsel %vm290, %v251, 0
        %v704 = vsel %vm290, %v252, 0
        %v707 = vsel %vm290, %v253, 0
        %v710 = vsel %vm290, %v254, 0
        %v713 = vsel %vm387, %v255, 0
        %715 = vmatprep.subr.mxu0 0.0
        %716 = vmatpush1.msra.mxu0 %v713
        %717 = vmatprep.subr.mxu0 0.0
        %718 = vmatpush1.msra.mxu0 0.0
        %719 = vmatprep.subr.mxu0 0.0
        %720 = vmatpush1.msra.mxu0 0.0
        %721 = vmatprep.subr.mxu0 0.0
        %722 = vmatpush1.msra.mxu0 0.0
        %723 = vmatprep.subr.mxu0 0.0
        %724 = vmatpush1.msra.mxu0 0.0
        %725 = vmatprep.subr.mxu0 0.0
        %726 = vmatpush1.msra.mxu0 0.0
        %727 = vmatprep.subr.mxu0 0.0
        %728 = vmatpush1.msra.mxu0 0.0
        %729 = vmatprep.subr.mxu0 0.0
        %730 = vmatpush1.msra.mxu0 0.0
        %731 = vmatprep.subr.mxu0 0.0
        %732 = vmatpush1.msra.mxu0 0.0
        %733 = vmatprep.subr.mxu0 0.0
        %734 = vmatpush1.msra.mxu0 0.0
        %735 = vmatprep.subr.mxu0 0.0
        %736 = vmatpush1.msra.mxu0 0.0
        %737 = vmatprep.subr.mxu0 0.0
        %738 = vmatpush1.msra.mxu0 0.0
        %739 = vmatprep.subr.mxu0 0.0
        %740 = vmatpush1.msra.mxu0 0.0
        %741 = vmatprep.subr.mxu0 0.0
        %742 = vmatpush1.msra.mxu0 0.0
        %743 = vmatprep.subr.mxu0 0.0
        %744 = vmatpush1.msra.mxu0 0.0
        %745 = vmatprep.subr.mxu0 0.0
        %746 = vmatpush1.msra.mxu0 0.0
        %747 = vmatprep.subr.mxu0 0.0
        %748 = vmatpush1.msra.mxu0 0.0
        %749 = vmatprep.subr.mxu0 0.0
        %750 = vmatpush1.msra.mxu0 0.0
        %751 = vmatprep.subr.mxu0 0.0
        %752 = vmatpush1.msra.mxu0 0.0
        %753 = vmatprep.subr.mxu0 0.0
        %754 = vmatpush1.msra.mxu0 0.0
        %755 = vmatprep.subr.mxu0 0.0
        %756 = vmatpush1.msra.mxu0 0.0
        %757 = vmatprep.subr.mxu0 0.0
        %758 = vmatpush1.msra.mxu0 0.0
        %759 = vmatprep.subr.mxu0 0.0
        %760 = vmatpush1.msra.mxu0 0.0
        %761 = vmatprep.subr.mxu0 0.0
        %762 = vmatpush1.msra.mxu0 0.0
        %763 = vmatprep.subr.mxu0 0.0
        %764 = vmatpush1.msra.mxu0 0.0
        %765 = vmatprep.subr.mxu0 0.0
        %766 = vmatpush1.msra.mxu0 0.0
        %767 = vmatprep.subr.mxu0 0.0
        %768 = vmatpush1.msra.mxu0 0.0
        %769 = vmatprep.subr.mxu0 0.0
        %770 = vmatpush1.msra.mxu0 0.0
        %771 = vmatprep.subr.mxu0 0.0
        %772 = vmatpush1.msra.mxu0 0.0
        %773 = vmatprep.subr.mxu0 0.0
        %774 = vmatpush1.msra.mxu0 0.0
        %775 = vmatprep.subr.mxu0 0.0
        %776 = vmatpush1.msra.mxu0 0.0
        %777 = vmatprep.subr.mxu0 0.0
        %778 = vmatpush1.msra.mxu0 0.0
        %779 = vmatprep.mubr.f32.mxu0 0.0
        %780 = vmatmul.mubr.f32.gmra.mrb[0].mxu0 %v617
        %v781 = vpop.f32.mrb[0].mxu0
        %v782 = vadd.f32 %v458, %v781
        %v783 = vpop.f32.mrb[0].mxu0
        %784 = vmatprep.mubr.f32.mxu0 0.0
        %785 = vmatmul.mubr.f32.gmra.mrb[0].mxu0 %v620
        %v786 = vpop.f32.mrb[0].mxu0
        %v787 = vadd.f32 %v463, %v786
        %v788 = vpop.f32.mrb[0].mxu0
        %789 = vmatprep.mubr.f32.mxu0 0.0
        %790 = vmatmul.mubr.f32.gmra.mrb[0].mxu0 %v623
        %v791 = vpop.f32.mrb[0].mxu0
        %v792 = vadd.f32 %v468, %v791
        %v793 = vpop.f32.mrb[0].mxu0
        %794 = vmatprep.mubr.f32.mxu0 0.0
        %795 = vmatmul.mubr.f32.gmra.mrb[0].mxu0 %v626
        %v796 = vpop.f32.mrb[0].mxu0
        %v797 = vadd.f32 %v473, %v796
        %v798 = vpop.f32.mrb[0].mxu0
        %799 = vmatprep.mubr.f32.mxu0 0.0
        %800 = vmatmul.mubr.f32.gmra.mrb[0].mxu0 %v629
        %v801 = vpop.f32.mrb[0].mxu0
        %v802 = vadd.f32 %v478, %v801
        %v803 = vpop.f32.mrb[0].mxu0
        %804 = vmatprep.mubr.f32.mxu0 0.0
        %805 = vmatmul.mubr.f32.gmra.mrb[0].mxu0 %v632
        %v806 = vpop.f32.mrb[0].mxu0
        %v807 = vadd.f32 %v483, %v806
        %v808 = vpop.f32.mrb[0].mxu0
        %809 = vmatprep.mubr.f32.mxu0 0.0
        %810 = vmatmul.mubr.f32.gmra.mrb[0].mxu0 %v635
        %v811 = vpop.f32.mrb[0].mxu0
        %v812 = vadd.f32 %v488, %v811
        %v813 = vpop.f32.mrb[0].mxu0
        %814 = vmatprep.mubr.f32.mxu0 0.0
        %815 = vmatmul.mubr.f32.gmra.mrb[0].mxu0 %v638
        %v816 = vpop.f32.mrb[0].mxu0
        %v817 = vadd.f32 %v493, %v816
        %v818 = vpop.f32.mrb[0].mxu0
        %819 = vmatprep.mubr.f32.mxu0 0.0
        %820 = vmatmul.mubr.f32.gmra.mrb[0].mxu0 %v641
        %v821 = vpop.f32.mrb[0].mxu0
        %v822 = vadd.f32 %v498, %v821
        %v823 = vpop.f32.mrb[0].mxu0
        %824 = vmatprep.mubr.f32.mxu0 0.0
        %825 = vmatmul.mubr.f32.gmra.mrb[0].mxu0 %v644
        %v826 = vpop.f32.mrb[0].mxu0
        %v827 = vadd.f32 %v503, %v826
        %v828 = vpop.f32.mrb[0].mxu0
        %829 = vmatprep.mubr.f32.mxu0 0.0
        %830 = vmatmul.mubr.f32.gmra.mrb[0].mxu0 %v647
        %v831 = vpop.f32.mrb[0].mxu0
        %v832 = vadd.f32 %v508, %v831
        %v833 = vpop.f32.mrb[0].mxu0
        %834 = vmatprep.mubr.f32.mxu0 0.0
        %835 = vmatmul.mubr.f32.gmra.mrb[0].mxu0 %v650
        %v836 = vpop.f32.mrb[0].mxu0
        %v837 = vadd.f32 %v513, %v836
        %v838 = vpop.f32.mrb[0].mxu0
        %839 = vmatprep.mubr.f32.mxu0 0.0
        %840 = vmatmul.mubr.f32.gmra.mrb[0].mxu0 %v653
        %v841 = vpop.f32.mrb[0].mxu0
        %v842 = vadd.f32 %v518, %v841
        %v843 = vpop.f32.mrb[0].mxu0
        %844 = vmatprep.mubr.f32.mxu0 0.0
        %845 = vmatmul.mubr.f32.gmra.mrb[0].mxu0 %v656
        %v846 = vpop.f32.mrb[0].mxu0
        %v847 = vadd.f32 %v523, %v846
        %v848 = vpop.f32.mrb[0].mxu0
        %849 = vmatprep.mubr.f32.mxu0 0.0
        %850 = vmatmul.mubr.f32.gmra.mrb[0].mxu0 %v659
        %v851 = vpop.f32.mrb[0].mxu0
        %v852 = vadd.f32 %v528, %v851
        %v853 = vpop.f32.mrb[0].mxu0
        %854 = vmatprep.mubr.f32.mxu0 0.0
        %855 = vmatmul.mubr.f32.gmra.mrb[0].mxu0 %v662
        %v856 = vpop.f32.mrb[0].mxu0
        %v857 = vadd.f32 %v533, %v856
        %v858 = vpop.f32.mrb[0].mxu0
        %859 = vmatprep.mubr.f32.mxu0 0.0
        %860 = vmatmul.mubr.f32.gmra.mrb[0].mxu0 %v665
        %v861 = vpop.f32.mrb[0].mxu0
        %v862 = vadd.f32 %v538, %v861
        %v863 = vpop.f32.mrb[0].mxu0
        %864 = vmatprep.mubr.f32.mxu0 0.0
        %865 = vmatmul.mubr.f32.gmra.mrb[0].mxu0 %v668
        %v866 = vpop.f32.mrb[0].mxu0
        %v867 = vadd.f32 %v543, %v866
        %v868 = vpop.f32.mrb[0].mxu0
        %869 = vmatprep.mubr.f32.mxu0 0.0
        %870 = vmatmul.mubr.f32.gmra.mrb[0].mxu0 %v671
        %v871 = vpop.f32.mrb[0].mxu0
        %v872 = vadd.f32 %v548, %v871
        %v873 = vpop.f32.mrb[0].mxu0
        %874 = vmatprep.mubr.f32.mxu0 0.0
        %875 = vmatmul.mubr.f32.gmra.mrb[0].mxu0 %v674
        %v876 = vpop.f32.mrb[0].mxu0
        %v877 = vadd.f32 %v553, %v876
        %v878 = vpop.f32.mrb[0].mxu0
        %879 = vmatprep.mubr.f32.mxu0 0.0
        %880 = vmatmul.mubr.f32.gmra.mrb[0].mxu0 %v677
        %v881 = vpop.f32.mrb[0].mxu0
        %v882 = vadd.f32 %v558, %v881
        %v883 = vpop.f32.mrb[0].mxu0
        %884 = vmatprep.mubr.f32.mxu0 0.0
        %885 = vmatmul.mubr.f32.gmra.mrb[0].mxu0 %v680
        %v886 = vpop.f32.mrb[0].mxu0
        %v887 = vadd.f32 %v563, %v886
        %v888 = vpop.f32.mrb[0].mxu0
        %889 = vmatprep.mubr.f32.mxu0 0.0
        %890 = vmatmul.mubr.f32.gmra.mrb[0].mxu0 %v683
        %v891 = vpop.f32.mrb[0].mxu0
        %v892 = vadd.f32 %v568, %v891
        %v893 = vpop.f32.mrb[0].mxu0
        %894 = vmatprep.mubr.f32.mxu0 0.0
        %895 = vmatmul.mubr.f32.gmra.mrb[0].mxu0 %v686
        %v896 = vpop.f32.mrb[0].mxu0
        %v897 = vadd.f32 %v573, %v896
        %v898 = vpop.f32.mrb[0].mxu0
        %899 = vmatprep.mubr.f32.mxu0 0.0
        %900 = vmatmul.mubr.f32.gmra.mrb[0].mxu0 %v689
        %v901 = vpop.f32.mrb[0].mxu0
        %v902 = vadd.f32 %v578, %v901
        %v903 = vpop.f32.mrb[0].mxu0
        %904 = vmatprep.mubr.f32.mxu0 0.0
        %905 = vmatmul.mubr.f32.gmra.mrb[0].mxu0 %v692
        %v906 = vpop.f32.mrb[0].mxu0
        %v907 = vadd.f32 %v583, %v906
        %v908 = vpop.f32.mrb[0].mxu0
        %909 = vmatprep.mubr.f32.mxu0 0.0
        %910 = vmatmul.mubr.f32.gmra.mrb[0].mxu0 %v695
        %v911 = vpop.f32.mrb[0].mxu0
        %v912 = vadd.f32 %v588, %v911
        %v913 = vpop.f32.mrb[0].mxu0
        %914 = vmatprep.mubr.f32.mxu0 0.0
        %915 = vmatmul.mubr.f32.gmra.mrb[0].mxu0 %v698
        %v916 = vpop.f32.mrb[0].mxu0
        %v917 = vadd.f32 %v593, %v916
        %v918 = vpop.f32.mrb[0].mxu0
        %919 = vmatprep.mubr.f32.mxu0 0.0
        %920 = vmatmul.mubr.f32.gmra.mrb[0].mxu0 %v701
        %v921 = vpop.f32.mrb[0].mxu0
        %v922 = vadd.f32 %v598, %v921
        %v923 = vpop.f32.mrb[0].mxu0
        %924 = vmatprep.mubr.f32.mxu0 0.0
        %925 = vmatmul.mubr.f32.gmra.mrb[0].mxu0 %v704
        %v926 = vpop.f32.mrb[0].mxu0
        %v927 = vadd.f32 %v603, %v926
        %v928 = vpop.f32.mrb[0].mxu0
        %929 = vmatprep.mubr.f32.mxu0 0.0
        %930 = vmatmul.mubr.f32.gmra.mrb[0].mxu0 %v707
        %v931 = vpop.f32.mrb[0].mxu0
        %v932 = vadd.f32 %v608, %v931
        %v933 = vpop.f32.mrb[0].mxu0
        %934 = vmatprep.mubr.f32.mxu0 0.0
        %935 = vmatmul.mubr.f32.gmra.mrb[0].mxu0 %v710
        %v936 = vpop.f32.mrb[0].mxu0
        %v937 = vadd.f32 %v613, %v936
        %v938 = vpop.f32.mrb[0].mxu0
        %939 = vdwg.mxu0
        %v940 = vld [vmem:[%s222 + $0x2] sm:$0xff]
        %v941 = vld [vmem:[%s222 + $0xa] sm:$0xff]
        %v942 = vld [vmem:[%s222 + $0x1a] sm:$0xff]
        %v943 = vld [vmem:[%s222 + $0x22] sm:$0xff]
        %v944 = vld [vmem:[%s222 + $0x32] sm:$0xff]
        %v945 = vld [vmem:[%s222 + $0x3a] sm:$0xff]
        %v946 = vld [vmem:[%s222 + $0x4a] sm:$0xff]
        %v947 = vld [vmem:[%s222 + $0x52] sm:$0xff]
        %v948 = vld [vmem:[%s222 + $0x62] sm:$0xff]
        %v949 = vld [vmem:[%s222 + $0x6a] sm:$0xff]
        %v950 = vld [vmem:[%s222 + $0x7a] sm:$0xff]
        %v951 = vld [vmem:[%s222 + $0x82] sm:$0xff]
        %v952 = vld [vmem:[%s222 + $0x92] sm:$0xff]
        %v953 = vld [vmem:[%s222 + $0x9a] sm:$0xff]
        %v954 = vld [vmem:[%s222 + $0xaa] sm:$0xff]
        %v955 = vld [vmem:[%s222 + $0xb2] sm:$0xff]
        %v956 = vld [vmem:[%s222 + $0xc2] sm:$0xff]
        %v957 = vld [vmem:[%s222 + $0xca] sm:$0xff]
        %v958 = vld [vmem:[%s222 + $0xda] sm:$0xff]
        %v959 = vld [vmem:[%s222 + $0xe2] sm:$0xff]
        %v960 = vld [vmem:[%s222 + $0xf2] sm:$0xff]
        %v961 = vld [vmem:[%s222 + $0xfa] sm:$0xff]
        %v962 = vld [vmem:[%s222 + $0x10a] sm:$0xff]
        %v963 = vld [vmem:[%s222 + $0x112] sm:$0xff]
        %v964 = vld [vmem:[%s222 + $0x122] sm:$0xff]
        %v965 = vld [vmem:[%s222 + $0x12a] sm:$0xff]
        %v966 = vld [vmem:[%s222 + $0x13a] sm:$0xff]
        %v967 = vld [vmem:[%s222 + $0x142] sm:$0xff]
        %v968 = vld [vmem:[%s222 + $0x152] sm:$0xff]
        %v969 = vld [vmem:[%s222 + $0x15a] sm:$0xff]
        %v970 = vld [vmem:[%s222 + $0x16a] sm:$0xff]
        %v971 = vld [vmem:[%s222 + $0x172] sm:$0xff]
        %s972 = scalar_lea.vmem %s1, 8
        %v973 = vld [vmem:[%s972] sm:$0x7]
        %v975 = vsel %vm290, %v940, 0
        %v978 = vsel %vm290, %v941, 0
        %v981 = vsel %vm290, %v942, 0
        %v984 = vsel %vm290, %v943, 0
        %v987 = vsel %vm290, %v944, 0
        %v990 = vsel %vm290, %v945, 0
        %v993 = vsel %vm290, %v946, 0
        %v996 = vsel %vm290, %v947, 0
        %v999 = vsel %vm290, %v948, 0
        %v1002 = vsel %vm290, %v949, 0
        %v1005 = vsel %vm290, %v950, 0
        %v1008 = vsel %vm290, %v951, 0
        %v1011 = vsel %vm290, %v952, 0
        %v1014 = vsel %vm290, %v953, 0
        %v1017 = vsel %vm290, %v954, 0
        %v1020 = vsel %vm290, %v955, 0
        %v1023 = vsel %vm290, %v956, 0
        %v1026 = vsel %vm290, %v957, 0
        %v1029 = vsel %vm290, %v958, 0
        %v1032 = vsel %vm290, %v959, 0
        %v1035 = vsel %vm290, %v960, 0
        %v1038 = vsel %vm290, %v961, 0
        %v1041 = vsel %vm290, %v962, 0
        %v1044 = vsel %vm290, %v963, 0
        %v1047 = vsel %vm290, %v964, 0
        %v1050 = vsel %vm290, %v965, 0
        %v1053 = vsel %vm290, %v966, 0
        %v1056 = vsel %vm290, %v967, 0
        %v1059 = vsel %vm290, %v968, 0
        %v1062 = vsel %vm290, %v969, 0
        %v1065 = vsel %vm290, %v970, 0
        %v1068 = vsel %vm290, %v971, 0
        %v1071 = vsel %vm387, %v973, 0
        %1073 = vmatprep.subr.mxu0 0.0
        %1074 = vmatpush1.msra.mxu0 %v1071
        %1075 = vmatprep.subr.mxu0 0.0
        %1076 = vmatpush1.msra.mxu0 0.0
        %1077 = vmatprep.subr.mxu0 0.0
        %1078 = vmatpush1.msra.mxu0 0.0
        %1079 = vmatprep.subr.mxu0 0.0
        %1080 = vmatpush1.msra.mxu0 0.0
        %1081 = vmatprep.subr.mxu0 0.0
        %1082 = vmatpush1.msra.mxu0 0.0
        %1083 = vmatprep.subr.mxu0 0.0
        %1084 = vmatpush1.msra.mxu0 0.0
        %1085 = vmatprep.subr.mxu0 0.0
        %1086 = vmatpush1.msra.mxu0 0.0
        %1087 = vmatprep.subr.mxu0 0.0
        %1088 = vmatpush1.msra.mxu0 0.0
        %1089 = vmatprep.subr.mxu0 0.0
        %1090 = vmatpush1.msra.mxu0 0.0
        %1091 = vmatprep.subr.mxu0 0.0
        %1092 = vmatpush1.msra.mxu0 0.0
        %1093 = vmatprep.subr.mxu0 0.0
        %1094 = vmatpush1.msra.mxu0 0.0
        %1095 = vmatprep.subr.mxu0 0.0
        %1096 = vmatpush1.msra.mxu0 0.0
        %1097 = vmatprep.subr.mxu0 0.0
        %1098 = vmatpush1.msra.mxu0 0.0
        %1099 = vmatprep.subr.mxu0 0.0
        %1100 = vmatpush1.msra.mxu0 0.0
        %1101 = vmatprep.subr.mxu0 0.0
        %1102 = vmatpush1.msra.mxu0 0.0
        %1103 = vmatprep.subr.mxu0 0.0
        %1104 = vmatpush1.msra.mxu0 0.0
        %1105 = vmatprep.subr.mxu0 0.0
        %1106 = vmatpush1.msra.mxu0 0.0
        %1107 = vmatprep.subr.mxu0 0.0
        %1108 = vmatpush1.msra.mxu0 0.0
        %1109 = vmatprep.subr.mxu0 0.0
        %1110 = vmatpush1.msra.mxu0 0.0
        %1111 = vmatprep.subr.mxu0 0.0
        %1112 = vmatpush1.msra.mxu0 0.0
        %1113 = vmatprep.subr.mxu0 0.0
        %1114 = vmatpush1.msra.mxu0 0.0
        %1115 = vmatprep.subr.mxu0 0.0
        %1116 = vmatpush1.msra.mxu0 0.0
        %1117 = vmatprep.subr.mxu0 0.0
        %1118 = vmatpush1.msra.mxu0 0.0
        %1119 = vmatprep.subr.mxu0 0.0
        %1120 = vmatpush1.msra.mxu0 0.0
        %1121 = vmatprep.subr.mxu0 0.0
        %1122 = vmatpush1.msra.mxu0 0.0
        %1123 = vmatprep.subr.mxu0 0.0
        %1124 = vmatpush1.msra.mxu0 0.0
        %1125 = vmatprep.subr.mxu0 0.0
        %1126 = vmatpush1.msra.mxu0 0.0
        %1127 = vmatprep.subr.mxu0 0.0
        %1128 = vmatpush1.msra.mxu0 0.0
        %1129 = vmatprep.subr.mxu0 0.0
        %1130 = vmatpush1.msra.mxu0 0.0
        %1131 = vmatprep.subr.mxu0 0.0
        %1132 = vmatpush1.msra.mxu0 0.0
        %1133 = vmatprep.subr.mxu0 0.0
        %1134 = vmatpush1.msra.mxu0 0.0
        %1135 = vmatprep.subr.mxu0 0.0
        %1136 = vmatpush1.msra.mxu0 0.0
        %1137 = vmatprep.mubr.f32.mxu0 0.0
        %1138 = vmatmul.mubr.f32.gmra.mrb[0].mxu0 %v975
        %v1139 = vpop.f32.mrb[0].mxu0
        %v1140 = vadd.f32 0.0, %v1139
        %v1141 = vpop.f32.mrb[0].mxu0
        %1142 = vmatprep.mubr.f32.mxu0 0.0
        %1143 = vmatmul.mubr.f32.gmra.mrb[0].mxu0 %v978
        %v1144 = vpop.f32.mrb[0].mxu0
        %v1145 = vadd.f32 0.0, %v1144
        %v1146 = vpop.f32.mrb[0].mxu0
        %1147 = vmatprep.mubr.f32.mxu0 0.0
        %1148 = vmatmul.mubr.f32.gmra.mrb[0].mxu0 %v981
        %v1149 = vpop.f32.mrb[0].mxu0
        %v1150 = vadd.f32 0.0, %v1149
        %v1151 = vpop.f32.mrb[0].mxu0
        %1152 = vmatprep.mubr.f32.mxu0 0.0
        %1153 = vmatmul.mubr.f32.gmra.mrb[0].mxu0 %v984
        %v1154 = vpop.f32.mrb[0].mxu0
        %v1155 = vadd.f32 0.0, %v1154
        %v1156 = vpop.f32.mrb[0].mxu0
        %1157 = vmatprep.mubr.f32.mxu0 0.0
        %1158 = vmatmul.mubr.f32.gmra.mrb[0].mxu0 %v987
        %v1159 = vpop.f32.mrb[0].mxu0
        %v1160 = vadd.f32 0.0, %v1159
        %v1161 = vpop.f32.mrb[0].mxu0
        %1162 = vmatprep.mubr.f32.mxu0 0.0
        %1163 = vmatmul.mubr.f32.gmra.mrb[0].mxu0 %v990
        %v1164 = vpop.f32.mrb[0].mxu0
        %v1165 = vadd.f32 0.0, %v1164
        %v1166 = vpop.f32.mrb[0].mxu0
        %1167 = vmatprep.mubr.f32.mxu0 0.0
        %1168 = vmatmul.mubr.f32.gmra.mrb[0].mxu0 %v993
        %v1169 = vpop.f32.mrb[0].mxu0
        %v1170 = vadd.f32 0.0, %v1169
        %v1171 = vpop.f32.mrb[0].mxu0
        %1172 = vmatprep.mubr.f32.mxu0 0.0
        %1173 = vmatmul.mubr.f32.gmra.mrb[0].mxu0 %v996
        %v1174 = vpop.f32.mrb[0].mxu0
        %v1175 = vadd.f32 0.0, %v1174
        %v1176 = vpop.f32.mrb[0].mxu0
        %1177 = vmatprep.mubr.f32.mxu0 0.0
        %1178 = vmatmul.mubr.f32.gmra.mrb[0].mxu0 %v999
        %v1179 = vpop.f32.mrb[0].mxu0
        %v1180 = vadd.f32 0.0, %v1179
        %v1181 = vpop.f32.mrb[0].mxu0
        %1182 = vmatprep.mubr.f32.mxu0 0.0
        %1183 = vmatmul.mubr.f32.gmra.mrb[0].mxu0 %v1002
        %v1184 = vpop.f32.mrb[0].mxu0
        %v1185 = vadd.f32 0.0, %v1184
        %v1186 = vpop.f32.mrb[0].mxu0
        %1187 = vmatprep.mubr.f32.mxu0 0.0
        %1188 = vmatmul.mubr.f32.gmra.mrb[0].mxu0 %v1005
        %v1189 = vpop.f32.mrb[0].mxu0
        %v1190 = vadd.f32 0.0, %v1189
        %v1191 = vpop.f32.mrb[0].mxu0
        %1192 = vmatprep.mubr.f32.mxu0 0.0
        %1193 = vmatmul.mubr.f32.gmra.mrb[0].mxu0 %v1008
        %v1194 = vpop.f32.mrb[0].mxu0
        %v1195 = vadd.f32 0.0, %v1194
        %v1196 = vpop.f32.mrb[0].mxu0
        %1197 = vmatprep.mubr.f32.mxu0 0.0
        %1198 = vmatmul.mubr.f32.gmra.mrb[0].mxu0 %v1011
        %v1199 = vpop.f32.mrb[0].mxu0
        %v1200 = vadd.f32 0.0, %v1199
        %v1201 = vpop.f32.mrb[0].mxu0
        %1202 = vmatprep.mubr.f32.mxu0 0.0
        %1203 = vmatmul.mubr.f32.gmra.mrb[0].mxu0 %v1014
        %v1204 = vpop.f32.mrb[0].mxu0
        %v1205 = vadd.f32 0.0, %v1204
        %v1206 = vpop.f32.mrb[0].mxu0
        %1207 = vmatprep.mubr.f32.mxu0 0.0
        %1208 = vmatmul.mubr.f32.gmra.mrb[0].mxu0 %v1017
        %v1209 = vpop.f32.mrb[0].mxu0
        %v1210 = vadd.f32 0.0, %v1209
        %v1211 = vpop.f32.mrb[0].mxu0
        %1212 = vmatprep.mubr.f32.mxu0 0.0
        %1213 = vmatmul.mubr.f32.gmra.mrb[0].mxu0 %v1020
        %v1214 = vpop.f32.mrb[0].mxu0
        %v1215 = vadd.f32 0.0, %v1214
        %v1216 = vpop.f32.mrb[0].mxu0
        %1217 = vmatprep.mubr.f32.mxu0 0.0
        %1218 = vmatmul.mubr.f32.gmra.mrb[0].mxu0 %v1023
        %v1219 = vpop.f32.mrb[0].mxu0
        %v1220 = vadd.f32 0.0, %v1219
        %v1221 = vpop.f32.mrb[0].mxu0
        %1222 = vmatprep.mubr.f32.mxu0 0.0
        %1223 = vmatmul.mubr.f32.gmra.mrb[0].mxu0 %v1026
        %v1224 = vpop.f32.mrb[0].mxu0
        %v1225 = vadd.f32 0.0, %v1224
        %v1226 = vpop.f32.mrb[0].mxu0
        %1227 = vmatprep.mubr.f32.mxu0 0.0
        %1228 = vmatmul.mubr.f32.gmra.mrb[0].mxu0 %v1029
        %v1229 = vpop.f32.mrb[0].mxu0
        %v1230 = vadd.f32 0.0, %v1229
        %v1231 = vpop.f32.mrb[0].mxu0
        %1232 = vmatprep.mubr.f32.mxu0 0.0
        %1233 = vmatmul.mubr.f32.gmra.mrb[0].mxu0 %v1032
        %v1234 = vpop.f32.mrb[0].mxu0
        %v1235 = vadd.f32 0.0, %v1234
        %v1236 = vpop.f32.mrb[0].mxu0
        %1237 = vmatprep.mubr.f32.mxu0 0.0
        %1238 = vmatmul.mubr.f32.gmra.mrb[0].mxu0 %v1035
        %v1239 = vpop.f32.mrb[0].mxu0
        %v1240 = vadd.f32 0.0, %v1239
        %v1241 = vpop.f32.mrb[0].mxu0
        %1242 = vmatprep.mubr.f32.mxu0 0.0
        %1243 = vmatmul.mubr.f32.gmra.mrb[0].mxu0 %v1038
        %v1244 = vpop.f32.mrb[0].mxu0
        %v1245 = vadd.f32 0.0, %v1244
        %v1246 = vpop.f32.mrb[0].mxu0
        %1247 = vmatprep.mubr.f32.mxu0 0.0
        %1248 = vmatmul.mubr.f32.gmra.mrb[0].mxu0 %v1041
        %v1249 = vpop.f32.mrb[0].mxu0
        %v1250 = vadd.f32 0.0, %v1249
        %v1251 = vpop.f32.mrb[0].mxu0
        %1252 = vmatprep.mubr.f32.mxu0 0.0
        %1253 = vmatmul.mubr.f32.gmra.mrb[0].mxu0 %v1044
        %v1254 = vpop.f32.mrb[0].mxu0
        %v1255 = vadd.f32 0.0, %v1254
        %v1256 = vpop.f32.mrb[0].mxu0
        %1257 = vmatprep.mubr.f32.mxu0 0.0
        %1258 = vmatmul.mubr.f32.gmra.mrb[0].mxu0 %v1047
        %v1259 = vpop.f32.mrb[0].mxu0
        %v1260 = vadd.f32 0.0, %v1259
        %v1261 = vpop.f32.mrb[0].mxu0
        %1262 = vmatprep.mubr.f32.mxu0 0.0
        %1263 = vmatmul.mubr.f32.gmra.mrb[0].mxu0 %v1050
        %v1264 = vpop.f32.mrb[0].mxu0
        %v1265 = vadd.f32 0.0, %v1264
        %v1266 = vpop.f32.mrb[0].mxu0
        %1267 = vmatprep.mubr.f32.mxu0 0.0
        %1268 = vmatmul.mubr.f32.gmra.mrb[0].mxu0 %v1053
        %v1269 = vpop.f32.mrb[0].mxu0
        %v1270 = vadd.f32 0.0, %v1269
        %v1271 = vpop.f32.mrb[0].mxu0
        %1272 = vmatprep.mubr.f32.mxu0 0.0
        %1273 = vmatmul.mubr.f32.gmra.mrb[0].mxu0 %v1056
        %v1274 = vpop.f32.mrb[0].mxu0
        %v1275 = vadd.f32 0.0, %v1274
        %v1276 = vpop.f32.mrb[0].mxu0
        %1277 = vmatprep.mubr.f32.mxu0 0.0
        %1278 = vmatmul.mubr.f32.gmra.mrb[0].mxu0 %v1059
        %v1279 = vpop.f32.mrb[0].mxu0
        %v1280 = vadd.f32 0.0, %v1279
        %v1281 = vpop.f32.mrb[0].mxu0
        %1282 = vmatprep.mubr.f32.mxu0 0.0
        %1283 = vmatmul.mubr.f32.gmra.mrb[0].mxu0 %v1062
        %v1284 = vpop.f32.mrb[0].mxu0
        %v1285 = vadd.f32 0.0, %v1284
        %v1286 = vpop.f32.mrb[0].mxu0
        %1287 = vmatprep.mubr.f32.mxu0 0.0
        %1288 = vmatmul.mubr.f32.gmra.mrb[0].mxu0 %v1065
        %v1289 = vpop.f32.mrb[0].mxu0
        %v1290 = vadd.f32 0.0, %v1289
        %v1291 = vpop.f32.mrb[0].mxu0
        %1292 = vmatprep.mubr.f32.mxu0 0.0
        %1293 = vmatmul.mubr.f32.gmra.mrb[0].mxu0 %v1068
        %v1294 = vpop.f32.mrb[0].mxu0
        %v1295 = vadd.f32 0.0, %v1294
        %v1296 = vpop.f32.mrb[0].mxu0
        %1297 = vdwg.mxu0
        %v1298 = vadd.f32 %v782, %v1140
        %v1299 = vadd.f32 %v787, %v1145
        %v1300 = vadd.f32 %v792, %v1150
        %v1301 = vadd.f32 %v797, %v1155
        %v1302 = vadd.f32 %v802, %v1160
        %v1303 = vadd.f32 %v807, %v1165
        %v1304 = vadd.f32 %v812, %v1170
        %v1305 = vadd.f32 %v817, %v1175
        %v1306 = vadd.f32 %v822, %v1180
        %v1307 = vadd.f32 %v827, %v1185
        %v1308 = vadd.f32 %v832, %v1190
        %v1309 = vadd.f32 %v837, %v1195
        %v1310 = vadd.f32 %v842, %v1200
        %v1311 = vadd.f32 %v847, %v1205
        %v1312 = vadd.f32 %v852, %v1210
        %v1313 = vadd.f32 %v857, %v1215
        %v1314 = vadd.f32 %v862, %v1220
        %v1315 = vadd.f32 %v867, %v1225
        %v1316 = vadd.f32 %v872, %v1230
        %v1317 = vadd.f32 %v877, %v1235
        %v1318 = vadd.f32 %v882, %v1240
        %v1319 = vadd.f32 %v887, %v1245
        %v1320 = vadd.f32 %v892, %v1250
        %v1321 = vadd.f32 %v897, %v1255
        %v1322 = vadd.f32 %v902, %v1260
        %v1323 = vadd.f32 %v907, %v1265
        %v1324 = vadd.f32 %v912, %v1270
        %v1325 = vadd.f32 %v917, %v1275
        %v1326 = vadd.f32 %v922, %v1280
        %v1327 = vadd.f32 %v927, %v1285
        %v1328 = vadd.f32 %v932, %v1290
        %v1329 = vadd.f32 %v937, %v1295
        %s1330 = scalar_lea.vmem %s222, 24
        %v1331 = vld [vmem:[%s1330] sm:$0xff]
        %v1332 = vld [vmem:[%s1330 + $0x8] sm:$0xff]
        %v1333 = vld [vmem:[%s1330 + $0x18] sm:$0xff]
        %v1334 = vld [vmem:[%s1330 + $0x20] sm:$0xff]
        %v1335 = vld [vmem:[%s1330 + $0x30] sm:$0xff]
        %v1336 = vld [vmem:[%s1330 + $0x38] sm:$0xff]
        %v1337 = vld [vmem:[%s1330 + $0x48] sm:$0xff]
        %v1338 = vld [vmem:[%s1330 + $0x50] sm:$0xff]
        %v1339 = vld [vmem:[%s1330 + $0x60] sm:$0xff]
        %v1340 = vld [vmem:[%s1330 + $0x68] sm:$0xff]
        %v1341 = vld [vmem:[%s1330 + $0x78] sm:$0xff]
        %v1342 = vld [vmem:[%s1330 + $0x80] sm:$0xff]
        %v1343 = vld [vmem:[%s1330 + $0x90] sm:$0xff]
        %v1344 = vld [vmem:[%s1330 + $0x98] sm:$0xff]
        %v1345 = vld [vmem:[%s1330 + $0xa8] sm:$0xff]
        %v1346 = vld [vmem:[%s1330 + $0xb0] sm:$0xff]
        %v1347 = vld [vmem:[%s1330 + $0xc0] sm:$0xff]
        %v1348 = vld [vmem:[%s1330 + $0xc8] sm:$0xff]
        %v1349 = vld [vmem:[%s1330 + $0xd8] sm:$0xff]
        %v1350 = vld [vmem:[%s1330 + $0xe0] sm:$0xff]
        %v1351 = vld [vmem:[%s1330 + $0xf0] sm:$0xff]
        %v1352 = vld [vmem:[%s1330 + $0xf8] sm:$0xff]
        %v1353 = vld [vmem:[%s1330 + $0x108] sm:$0xff]
        %v1354 = vld [vmem:[%s1330 + $0x110] sm:$0xff]
        %v1355 = vld [vmem:[%s1330 + $0x120] sm:$0xff]
        %v1356 = vld [vmem:[%s1330 + $0x128] sm:$0xff]
        %v1357 = vld [vmem:[%s1330 + $0x138] sm:$0xff]
        %v1358 = vld [vmem:[%s1330 + $0x140] sm:$0xff]
        %v1359 = vld [vmem:[%s1330 + $0x150] sm:$0xff]
        %v1360 = vld [vmem:[%s1330 + $0x158] sm:$0xff]
        %v1361 = vld [vmem:[%s1330 + $0x168] sm:$0xff]
        %v1362 = vld [vmem:[%s1330 + $0x170] sm:$0xff]
        %s1363 = scalar_lea.vmem %s1, 12
        %v1364 = vld [vmem:[%s1363] sm:$0x7]
        %v1366 = vsel %vm290, %v1331, 0
        %v1369 = vsel %vm290, %v1332, 0
        %v1372 = vsel %vm290, %v1333, 0
        %v1375 = vsel %vm290, %v1334, 0
        %v1378 = vsel %vm290, %v1335, 0
        %v1381 = vsel %vm290, %v1336, 0
        %v1384 = vsel %vm290, %v1337, 0
        %v1387 = vsel %vm290, %v1338, 0
        %v1390 = vsel %vm290, %v1339, 0
        %v1393 = vsel %vm290, %v1340, 0
        %v1396 = vsel %vm290, %v1341, 0
        %v1399 = vsel %vm290, %v1342, 0
        %v1402 = vsel %vm290, %v1343, 0
        %v1405 = vsel %vm290, %v1344, 0
        %v1408 = vsel %vm290, %v1345, 0
        %v1411 = vsel %vm290, %v1346, 0
        %v1414 = vsel %vm290, %v1347, 0
        %v1417 = vsel %vm290, %v1348, 0
        %v1420 = vsel %vm290, %v1349, 0
        %v1423 = vsel %vm290, %v1350, 0
        %v1426 = vsel %vm290, %v1351, 0
        %v1429 = vsel %vm290, %v1352, 0
        %v1432 = vsel %vm290, %v1353, 0
        %v1435 = vsel %vm290, %v1354, 0
        %v1438 = vsel %vm290, %v1355, 0
        %v1441 = vsel %vm290, %v1356, 0
        %v1444 = vsel %vm290, %v1357, 0
        %v1447 = vsel %vm290, %v1358, 0
        %v1450 = vsel %vm290, %v1359, 0
        %v1453 = vsel %vm290, %v1360, 0
        %v1456 = vsel %vm290, %v1361, 0
        %v1459 = vsel %vm290, %v1362, 0
        %v1462 = vsel %vm387, %v1364, 0
        %1464 = vmatprep.subr.mxu0 0.0
        %1465 = vmatpush1.msra.mxu0 %v1462
        %1466 = vmatprep.subr.mxu0 0.0
        %1467 = vmatpush1.msra.mxu0 0.0
        %1468 = vmatprep.subr.mxu0 0.0
        %1469 = vmatpush1.msra.mxu0 0.0
        %1470 = vmatprep.subr.mxu0 0.0
        %1471 = vmatpush1.msra.mxu0 0.0
        %1472 = vmatprep.subr.mxu0 0.0
        %1473 = vmatpush1.msra.mxu0 0.0
        %1474 = vmatprep.subr.mxu0 0.0
        %1475 = vmatpush1.msra.mxu0 0.0
        %1476 = vmatprep.subr.mxu0 0.0
        %1477 = vmatpush1.msra.mxu0 0.0
        %1478 = vmatprep.subr.mxu0 0.0
        %1479 = vmatpush1.msra.mxu0 0.0
        %1480 = vmatprep.subr.mxu0 0.0
        %1481 = vmatpush1.msra.mxu0 0.0
        %1482 = vmatprep.subr.mxu0 0.0
        %1483 = vmatpush1.msra.mxu0 0.0
        %1484 = vmatprep.subr.mxu0 0.0
        %1485 = vmatpush1.msra.mxu0 0.0
        %1486 = vmatprep.subr.mxu0 0.0
        %1487 = vmatpush1.msra.mxu0 0.0
        %1488 = vmatprep.subr.mxu0 0.0
        %1489 = vmatpush1.msra.mxu0 0.0
        %1490 = vmatprep.subr.mxu0 0.0
        %1491 = vmatpush1.msra.mxu0 0.0
        %1492 = vmatprep.subr.mxu0 0.0
        %1493 = vmatpush1.msra.mxu0 0.0
        %1494 = vmatprep.subr.mxu0 0.0
        %1495 = vmatpush1.msra.mxu0 0.0
        %1496 = vmatprep.subr.mxu0 0.0
        %1497 = vmatpush1.msra.mxu0 0.0
        %1498 = vmatprep.subr.mxu0 0.0
        %1499 = vmatpush1.msra.mxu0 0.0
        %1500 = vmatprep.subr.mxu0 0.0
        %1501 = vmatpush1.msra.mxu0 0.0
        %1502 = vmatprep.subr.mxu0 0.0
        %1503 = vmatpush1.msra.mxu0 0.0
        %1504 = vmatprep.subr.mxu0 0.0
        %1505 = vmatpush1.msra.mxu0 0.0
        %1506 = vmatprep.subr.mxu0 0.0
        %1507 = vmatpush1.msra.mxu0 0.0
        %1508 = vmatprep.subr.mxu0 0.0
        %1509 = vmatpush1.msra.mxu0 0.0
        %1510 = vmatprep.subr.mxu0 0.0
        %1511 = vmatpush1.msra.mxu0 0.0
        %1512 = vmatprep.subr.mxu0 0.0
        %1513 = vmatpush1.msra.mxu0 0.0
        %1514 = vmatprep.subr.mxu0 0.0
        %1515 = vmatpush1.msra.mxu0 0.0
        %1516 = vmatprep.subr.mxu0 0.0
        %1517 = vmatpush1.msra.mxu0 0.0
        %1518 = vmatprep.subr.mxu0 0.0
        %1519 = vmatpush1.msra.mxu0 0.0
        %1520 = vmatprep.subr.mxu0 0.0
        %1521 = vmatpush1.msra.mxu0 0.0
        %1522 = vmatprep.subr.mxu0 0.0
        %1523 = vmatpush1.msra.mxu0 0.0
        %1524 = vmatprep.subr.mxu0 0.0
        %1525 = vmatpush1.msra.mxu0 0.0
        %1526 = vmatprep.subr.mxu0 0.0
        %1527 = vmatpush1.msra.mxu0 0.0
        %1528 = vmatprep.mubr.f32.mxu0 0.0
        %1529 = vmatmul.mubr.f32.gmra.mrb[0].mxu0 %v1366
        %v1530 = vpop.f32.mrb[0].mxu0
        %v1531 = vadd.f32 0.0, %v1530
        %v1532 = vpop.f32.mrb[0].mxu0
        %1533 = vmatprep.mubr.f32.mxu0 0.0
        %1534 = vmatmul.mubr.f32.gmra.mrb[0].mxu0 %v1369
        %v1535 = vpop.f32.mrb[0].mxu0
        %v1536 = vadd.f32 0.0, %v1535
        %v1537 = vpop.f32.mrb[0].mxu0
        %1538 = vmatprep.mubr.f32.mxu0 0.0
        %1539 = vmatmul.mubr.f32.gmra.mrb[0].mxu0 %v1372
        %v1540 = vpop.f32.mrb[0].mxu0
        %v1541 = vadd.f32 0.0, %v1540
        %v1542 = vpop.f32.mrb[0].mxu0
        %1543 = vmatprep.mubr.f32.mxu0 0.0
        %1544 = vmatmul.mubr.f32.gmra.mrb[0].mxu0 %v1375
        %v1545 = vpop.f32.mrb[0].mxu0
        %v1546 = vadd.f32 0.0, %v1545
        %v1547 = vpop.f32.mrb[0].mxu0
        %1548 = vmatprep.mubr.f32.mxu0 0.0
        %1549 = vmatmul.mubr.f32.gmra.mrb[0].mxu0 %v1378
        %v1550 = vpop.f32.mrb[0].mxu0
        %v1551 = vadd.f32 0.0, %v1550
        %v1552 = vpop.f32.mrb[0].mxu0
        %1553 = vmatprep.mubr.f32.mxu0 0.0
        %1554 = vmatmul.mubr.f32.gmra.mrb[0].mxu0 %v1381
        %v1555 = vpop.f32.mrb[0].mxu0
        %v1556 = vadd.f32 0.0, %v1555
        %v1557 = vpop.f32.mrb[0].mxu0
        %1558 = vmatprep.mubr.f32.mxu0 0.0
        %1559 = vmatmul.mubr.f32.gmra.mrb[0].mxu0 %v1384
        %v1560 = vpop.f32.mrb[0].mxu0
        %v1561 = vadd.f32 0.0, %v1560
        %v1562 = vpop.f32.mrb[0].mxu0
        %1563 = vmatprep.mubr.f32.mxu0 0.0
        %1564 = vmatmul.mubr.f32.gmra.mrb[0].mxu0 %v1387
        %v1565 = vpop.f32.mrb[0].mxu0
        %v1566 = vadd.f32 0.0, %v1565
        %v1567 = vpop.f32.mrb[0].mxu0
        %1568 = vmatprep.mubr.f32.mxu0 0.0
        %1569 = vmatmul.mubr.f32.gmra.mrb[0].mxu0 %v1390
        %v1570 = vpop.f32.mrb[0].mxu0
        %v1571 = vadd.f32 0.0, %v1570
        %v1572 = vpop.f32.mrb[0].mxu0
        %1573 = vmatprep.mubr.f32.mxu0 0.0
        %1574 = vmatmul.mubr.f32.gmra.mrb[0].mxu0 %v1393
        %v1575 = vpop.f32.mrb[0].mxu0
        %v1576 = vadd.f32 0.0, %v1575
        %v1577 = vpop.f32.mrb[0].mxu0
        %1578 = vmatprep.mubr.f32.mxu0 0.0
        %1579 = vmatmul.mubr.f32.gmra.mrb[0].mxu0 %v1396
        %v1580 = vpop.f32.mrb[0].mxu0
        %v1581 = vadd.f32 0.0, %v1580
        %v1582 = vpop.f32.mrb[0].mxu0
        %1583 = vmatprep.mubr.f32.mxu0 0.0
        %1584 = vmatmul.mubr.f32.gmra.mrb[0].mxu0 %v1399
        %v1585 = vpop.f32.mrb[0].mxu0
        %v1586 = vadd.f32 0.0, %v1585
        %v1587 = vpop.f32.mrb[0].mxu0
        %1588 = vmatprep.mubr.f32.mxu0 0.0
        %1589 = vmatmul.mubr.f32.gmra.mrb[0].mxu0 %v1402
        %v1590 = vpop.f32.mrb[0].mxu0
        %v1591 = vadd.f32 0.0, %v1590
        %v1592 = vpop.f32.mrb[0].mxu0
        %1593 = vmatprep.mubr.f32.mxu0 0.0
        %1594 = vmatmul.mubr.f32.gmra.mrb[0].mxu0 %v1405
        %v1595 = vpop.f32.mrb[0].mxu0
        %v1596 = vadd.f32 0.0, %v1595
        %v1597 = vpop.f32.mrb[0].mxu0
        %1598 = vmatprep.mubr.f32.mxu0 0.0
        %1599 = vmatmul.mubr.f32.gmra.mrb[0].mxu0 %v1408
        %v1600 = vpop.f32.mrb[0].mxu0
        %v1601 = vadd.f32 0.0, %v1600
        %v1602 = vpop.f32.mrb[0].mxu0
        %1603 = vmatprep.mubr.f32.mxu0 0.0
        %1604 = vmatmul.mubr.f32.gmra.mrb[0].mxu0 %v1411
        %v1605 = vpop.f32.mrb[0].mxu0
        %v1606 = vadd.f32 0.0, %v1605
        %v1607 = vpop.f32.mrb[0].mxu0
        %1608 = vmatprep.mubr.f32.mxu0 0.0
        %1609 = vmatmul.mubr.f32.gmra.mrb[0].mxu0 %v1414
        %v1610 = vpop.f32.mrb[0].mxu0
        %v1611 = vadd.f32 0.0, %v1610
        %v1612 = vpop.f32.mrb[0].mxu0
        %1613 = vmatprep.mubr.f32.mxu0 0.0
        %1614 = vmatmul.mubr.f32.gmra.mrb[0].mxu0 %v1417
        %v1615 = vpop.f32.mrb[0].mxu0
        %v1616 = vadd.f32 0.0, %v1615
        %v1617 = vpop.f32.mrb[0].mxu0
        %1618 = vmatprep.mubr.f32.mxu0 0.0
        %1619 = vmatmul.mubr.f32.gmra.mrb[0].mxu0 %v1420
        %v1620 = vpop.f32.mrb[0].mxu0
        %v1621 = vadd.f32 0.0, %v1620
        %v1622 = vpop.f32.mrb[0].mxu0
        %1623 = vmatprep.mubr.f32.mxu0 0.0
        %1624 = vmatmul.mubr.f32.gmra.mrb[0].mxu0 %v1423
        %v1625 = vpop.f32.mrb[0].mxu0
        %v1626 = vadd.f32 0.0, %v1625
        %v1627 = vpop.f32.mrb[0].mxu0
        %1628 = vmatprep.mubr.f32.mxu0 0.0
        %1629 = vmatmul.mubr.f32.gmra.mrb[0].mxu0 %v1426
        %v1630 = vpop.f32.mrb[0].mxu0
        %v1631 = vadd.f32 0.0, %v1630
        %v1632 = vpop.f32.mrb[0].mxu0
        %1633 = vmatprep.mubr.f32.mxu0 0.0
        %1634 = vmatmul.mubr.f32.gmra.mrb[0].mxu0 %v1429
        %v1635 = vpop.f32.mrb[0].mxu0
        %v1636 = vadd.f32 0.0, %v1635
        %v1637 = vpop.f32.mrb[0].mxu0
        %1638 = vmatprep.mubr.f32.mxu0 0.0
        %1639 = vmatmul.mubr.f32.gmra.mrb[0].mxu0 %v1432
        %v1640 = vpop.f32.mrb[0].mxu0
        %v1641 = vadd.f32 0.0, %v1640
        %v1642 = vpop.f32.mrb[0].mxu0
        %1643 = vmatprep.mubr.f32.mxu0 0.0
        %1644 = vmatmul.mubr.f32.gmra.mrb[0].mxu0 %v1435
        %v1645 = vpop.f32.mrb[0].mxu0
        %v1646 = vadd.f32 0.0, %v1645
        %v1647 = vpop.f32.mrb[0].mxu0
        %1648 = vmatprep.mubr.f32.mxu0 0.0
        %1649 = vmatmul.mubr.f32.gmra.mrb[0].mxu0 %v1438
        %v1650 = vpop.f32.mrb[0].mxu0
        %v1651 = vadd.f32 0.0, %v1650
        %v1652 = vpop.f32.mrb[0].mxu0
        %1653 = vmatprep.mubr.f32.mxu0 0.0
        %1654 = vmatmul.mubr.f32.gmra.mrb[0].mxu0 %v1441
        %v1655 = vpop.f32.mrb[0].mxu0
        %v1656 = vadd.f32 0.0, %v1655
        %v1657 = vpop.f32.mrb[0].mxu0
        %1658 = vmatprep.mubr.f32.mxu0 0.0
        %1659 = vmatmul.mubr.f32.gmra.mrb[0].mxu0 %v1444
        %v1660 = vpop.f32.mrb[0].mxu0
        %v1661 = vadd.f32 0.0, %v1660
        %v1662 = vpop.f32.mrb[0].mxu0
        %1663 = vmatprep.mubr.f32.mxu0 0.0
        %1664 = vmatmul.mubr.f32.gmra.mrb[0].mxu0 %v1447
        %v1665 = vpop.f32.mrb[0].mxu0
        %v1666 = vadd.f32 0.0, %v1665
        %v1667 = vpop.f32.mrb[0].mxu0
        %1668 = vmatprep.mubr.f32.mxu0 0.0
        %1669 = vmatmul.mubr.f32.gmra.mrb[0].mxu0 %v1450
        %v1670 = vpop.f32.mrb[0].mxu0
        %v1671 = vadd.f32 0.0, %v1670
        %v1672 = vpop.f32.mrb[0].mxu0
        %1673 = vmatprep.mubr.f32.mxu0 0.0
        %1674 = vmatmul.mubr.f32.gmra.mrb[0].mxu0 %v1453
        %v1675 = vpop.f32.mrb[0].mxu0
        %v1676 = vadd.f32 0.0, %v1675
        %v1677 = vpop.f32.mrb[0].mxu0
        %1678 = vmatprep.mubr.f32.mxu0 0.0
        %1679 = vmatmul.mubr.f32.gmra.mrb[0].mxu0 %v1456
        %v1680 = vpop.f32.mrb[0].mxu0
        %v1681 = vadd.f32 0.0, %v1680
        %v1682 = vpop.f32.mrb[0].mxu0
        %1683 = vmatprep.mubr.f32.mxu0 0.0
        %1684 = vmatmul.mubr.f32.gmra.mrb[0].mxu0 %v1459
        %v1685 = vpop.f32.mrb[0].mxu0
        %v1686 = vadd.f32 0.0, %v1685
        %v1687 = vpop.f32.mrb[0].mxu0
        %1688 = vdwg.mxu0
        %v1689 = vadd.f32 %v1298, %v1531
        %v1690 = vadd.f32 %v1299, %v1536
        %v1691 = vadd.f32 %v1300, %v1541
        %v1692 = vadd.f32 %v1301, %v1546
        %v1693 = vadd.f32 %v1302, %v1551
        %v1694 = vadd.f32 %v1303, %v1556
        %v1695 = vadd.f32 %v1304, %v1561
        %v1696 = vadd.f32 %v1305, %v1566
        %v1697 = vadd.f32 %v1306, %v1571
        %v1698 = vadd.f32 %v1307, %v1576
        %v1699 = vadd.f32 %v1308, %v1581
        %v1700 = vadd.f32 %v1309, %v1586
        %v1701 = vadd.f32 %v1310, %v1591
        %v1702 = vadd.f32 %v1311, %v1596
        %v1703 = vadd.f32 %v1312, %v1601
        %v1704 = vadd.f32 %v1313, %v1606
        %v1705 = vadd.f32 %v1314, %v1611
        %v1706 = vadd.f32 %v1315, %v1616
        %v1707 = vadd.f32 %v1316, %v1621
        %v1708 = vadd.f32 %v1317, %v1626
        %v1709 = vadd.f32 %v1318, %v1631
        %v1710 = vadd.f32 %v1319, %v1636
        %v1711 = vadd.f32 %v1320, %v1641
        %v1712 = vadd.f32 %v1321, %v1646
        %v1713 = vadd.f32 %v1322, %v1651
        %v1714 = vadd.f32 %v1323, %v1656
        %v1715 = vadd.f32 %v1324, %v1661
        %v1716 = vadd.f32 %v1325, %v1666
        %v1717 = vadd.f32 %v1326, %v1671
        %v1718 = vadd.f32 %v1327, %v1676
        %v1719 = vadd.f32 %v1328, %v1681
        %v1720 = vadd.f32 %v1329, %v1686
        %v1721 = vld [vmem:[%s1330 + $0x1] sm:$0xff]
        %v1722 = vld [vmem:[%s1330 + $0x9] sm:$0xff]
        %v1723 = vld [vmem:[%s1330 + $0x19] sm:$0xff]
        %v1724 = vld [vmem:[%s1330 + $0x21] sm:$0xff]
        %v1725 = vld [vmem:[%s1330 + $0x31] sm:$0xff]
        %v1726 = vld [vmem:[%s1330 + $0x39] sm:$0xff]
        %v1727 = vld [vmem:[%s1330 + $0x49] sm:$0xff]
        %v1728 = vld [vmem:[%s1330 + $0x51] sm:$0xff]
        %v1729 = vld [vmem:[%s1330 + $0x61] sm:$0xff]
        %v1730 = vld [vmem:[%s1330 + $0x69] sm:$0xff]
        %v1731 = vld [vmem:[%s1330 + $0x79] sm:$0xff]
        %v1732 = vld [vmem:[%s1330 + $0x81] sm:$0xff]
        %v1733 = vld [vmem:[%s1330 + $0x91] sm:$0xff]
        %v1734 = vld [vmem:[%s1330 + $0x99] sm:$0xff]
        %v1735 = vld [vmem:[%s1330 + $0xa9] sm:$0xff]
        %v1736 = vld [vmem:[%s1330 + $0xb1] sm:$0xff]
        %v1737 = vld [vmem:[%s1330 + $0xc1] sm:$0xff]
        %v1738 = vld [vmem:[%s1330 + $0xc9] sm:$0xff]
        %v1739 = vld [vmem:[%s1330 + $0xd9] sm:$0xff]
        %v1740 = vld [vmem:[%s1330 + $0xe1] sm:$0xff]
        %v1741 = vld [vmem:[%s1330 + $0xf1] sm:$0xff]
        %v1742 = vld [vmem:[%s1330 + $0xf9] sm:$0xff]
        %v1743 = vld [vmem:[%s1330 + $0x109] sm:$0xff]
        %v1744 = vld [vmem:[%s1330 + $0x111] sm:$0xff]
        %v1745 = vld [vmem:[%s1330 + $0x121] sm:$0xff]
        %v1746 = vld [vmem:[%s1330 + $0x129] sm:$0xff]
        %v1747 = vld [vmem:[%s1330 + $0x139] sm:$0xff]
        %v1748 = vld [vmem:[%s1330 + $0x141] sm:$0xff]
        %v1749 = vld [vmem:[%s1330 + $0x151] sm:$0xff]
        %v1750 = vld [vmem:[%s1330 + $0x159] sm:$0xff]
        %v1751 = vld [vmem:[%s1330 + $0x169] sm:$0xff]
        %v1752 = vld [vmem:[%s1330 + $0x171] sm:$0xff]
        %s1753 = scalar_lea.vmem %s1, 16
        %v1754 = vld [vmem:[%s1753] sm:$0x7]
        %v1756 = vsel %vm290, %v1721, 0
        %v1759 = vsel %vm290, %v1722, 0
        %v1762 = vsel %vm290, %v1723, 0
        %v1765 = vsel %vm290, %v1724, 0
        %v1768 = vsel %vm290, %v1725, 0
        %v1771 = vsel %vm290, %v1726, 0
        %v1774 = vsel %vm290, %v1727, 0
        %v1777 = vsel %vm290, %v1728, 0
        %v1780 = vsel %vm290, %v1729, 0
        %v1783 = vsel %vm290, %v1730, 0
        %v1786 = vsel %vm290, %v1731, 0
        %v1789 = vsel %vm290, %v1732, 0
        %v1792 = vsel %vm290, %v1733, 0
        %v1795 = vsel %vm290, %v1734, 0
        %v1798 = vsel %vm290, %v1735, 0
        %v1801 = vsel %vm290, %v1736, 0
        %v1804 = vsel %vm290, %v1737, 0
        %v1807 = vsel %vm290, %v1738, 0
        %v1810 = vsel %vm290, %v1739, 0
        %v1813 = vsel %vm290, %v1740, 0
        %v1816 = vsel %vm290, %v1741, 0
        %v1819 = vsel %vm290, %v1742, 0
        %v1822 = vsel %vm290, %v1743, 0
        %v1825 = vsel %vm290, %v1744, 0
        %v1828 = vsel %vm290, %v1745, 0
        %v1831 = vsel %vm290, %v1746, 0
        %v1834 = vsel %vm290, %v1747, 0
        %v1837 = vsel %vm290, %v1748, 0
        %v1840 = vsel %vm290, %v1749, 0
        %v1843 = vsel %vm290, %v1750, 0
        %v1846 = vsel %vm290, %v1751, 0
        %v1849 = vsel %vm290, %v1752, 0
        %v1852 = vsel %vm387, %v1754, 0
        %1854 = vmatprep.subr.mxu0 0.0
        %1855 = vmatpush1.msra.mxu0 %v1852
        %1856 = vmatprep.subr.mxu0 0.0
        %1857 = vmatpush1.msra.mxu0 0.0
        %1858 = vmatprep.subr.mxu0 0.0
        %1859 = vmatpush1.msra.mxu0 0.0
        %1860 = vmatprep.subr.mxu0 0.0
        %1861 = vmatpush1.msra.mxu0 0.0
        %1862 = vmatprep.subr.mxu0 0.0
        %1863 = vmatpush1.msra.mxu0 0.0
        %1864 = vmatprep.subr.mxu0 0.0
        %1865 = vmatpush1.msra.mxu0 0.0
        %1866 = vmatprep.subr.mxu0 0.0
        %1867 = vmatpush1.msra.mxu0 0.0
        %1868 = vmatprep.subr.mxu0 0.0
        %1869 = vmatpush1.msra.mxu0 0.0
        %1870 = vmatprep.subr.mxu0 0.0
        %1871 = vmatpush1.msra.mxu0 0.0
        %1872 = vmatprep.subr.mxu0 0.0
        %1873 = vmatpush1.msra.mxu0 0.0
        %1874 = vmatprep.subr.mxu0 0.0
        %1875 = vmatpush1.msra.mxu0 0.0
        %1876 = vmatprep.subr.mxu0 0.0
        %1877 = vmatpush1.msra.mxu0 0.0
        %1878 = vmatprep.subr.mxu0 0.0
        %1879 = vmatpush1.msra.mxu0 0.0
        %1880 = vmatprep.subr.mxu0 0.0
        %1881 = vmatpush1.msra.mxu0 0.0
        %1882 = vmatprep.subr.mxu0 0.0
        %1883 = vmatpush1.msra.mxu0 0.0
        %1884 = vmatprep.subr.mxu0 0.0
        %1885 = vmatpush1.msra.mxu0 0.0
        %1886 = vmatprep.subr.mxu0 0.0
        %1887 = vmatpush1.msra.mxu0 0.0
        %1888 = vmatprep.subr.mxu0 0.0
        %1889 = vmatpush1.msra.mxu0 0.0
        %1890 = vmatprep.subr.mxu0 0.0
        %1891 = vmatpush1.msra.mxu0 0.0
        %1892 = vmatprep.subr.mxu0 0.0
        %1893 = vmatpush1.msra.mxu0 0.0
        %1894 = vmatprep.subr.mxu0 0.0
        %1895 = vmatpush1.msra.mxu0 0.0
        %1896 = vmatprep.subr.mxu0 0.0
        %1897 = vmatpush1.msra.mxu0 0.0
        %1898 = vmatprep.subr.mxu0 0.0
        %1899 = vmatpush1.msra.mxu0 0.0
        %1900 = vmatprep.subr.mxu0 0.0
        %1901 = vmatpush1.msra.mxu0 0.0
        %1902 = vmatprep.subr.mxu0 0.0
        %1903 = vmatpush1.msra.mxu0 0.0
        %1904 = vmatprep.subr.mxu0 0.0
        %1905 = vmatpush1.msra.mxu0 0.0
        %1906 = vmatprep.subr.mxu0 0.0
        %1907 = vmatpush1.msra.mxu0 0.0
        %1908 = vmatprep.subr.mxu0 0.0
        %1909 = vmatpush1.msra.mxu0 0.0
        %1910 = vmatprep.subr.mxu0 0.0
        %1911 = vmatpush1.msra.mxu0 0.0
        %1912 = vmatprep.subr.mxu0 0.0
        %1913 = vmatpush1.msra.mxu0 0.0
        %1914 = vmatprep.subr.mxu0 0.0
        %1915 = vmatpush1.msra.mxu0 0.0
        %1916 = vmatprep.subr.mxu0 0.0
        %1917 = vmatpush1.msra.mxu0 0.0
        %1918 = vmatprep.mubr.f32.mxu0 0.0
        %1919 = vmatmul.mubr.f32.gmra.mrb[0].mxu0 %v1756
        %v1920 = vpop.f32.mrb[0].mxu0
        %v1921 = vadd.f32 0.0, %v1920
        %v1922 = vpop.f32.mrb[0].mxu0
        %1923 = vmatprep.mubr.f32.mxu0 0.0
        %1924 = vmatmul.mubr.f32.gmra.mrb[0].mxu0 %v1759
        %v1925 = vpop.f32.mrb[0].mxu0
        %v1926 = vadd.f32 0.0, %v1925
        %v1927 = vpop.f32.mrb[0].mxu0
        %1928 = vmatprep.mubr.f32.mxu0 0.0
        %1929 = vmatmul.mubr.f32.gmra.mrb[0].mxu0 %v1762
        %v1930 = vpop.f32.mrb[0].mxu0
        %v1931 = vadd.f32 0.0, %v1930
        %v1932 = vpop.f32.mrb[0].mxu0
        %1933 = vmatprep.mubr.f32.mxu0 0.0
        %1934 = vmatmul.mubr.f32.gmra.mrb[0].mxu0 %v1765
        %v1935 = vpop.f32.mrb[0].mxu0
        %v1936 = vadd.f32 0.0, %v1935
        %v1937 = vpop.f32.mrb[0].mxu0
        %1938 = vmatprep.mubr.f32.mxu0 0.0
        %1939 = vmatmul.mubr.f32.gmra.mrb[0].mxu0 %v1768
        %v1940 = vpop.f32.mrb[0].mxu0
        %v1941 = vadd.f32 0.0, %v1940
        %v1942 = vpop.f32.mrb[0].mxu0
        %1943 = vmatprep.mubr.f32.mxu0 0.0
        %1944 = vmatmul.mubr.f32.gmra.mrb[0].mxu0 %v1771
        %v1945 = vpop.f32.mrb[0].mxu0
        %v1946 = vadd.f32 0.0, %v1945
        %v1947 = vpop.f32.mrb[0].mxu0
        %1948 = vmatprep.mubr.f32.mxu0 0.0
        %1949 = vmatmul.mubr.f32.gmra.mrb[0].mxu0 %v1774
        %v1950 = vpop.f32.mrb[0].mxu0
        %v1951 = vadd.f32 0.0, %v1950
        %v1952 = vpop.f32.mrb[0].mxu0
        %1953 = vmatprep.mubr.f32.mxu0 0.0
        %1954 = vmatmul.mubr.f32.gmra.mrb[0].mxu0 %v1777
        %v1955 = vpop.f32.mrb[0].mxu0
        %v1956 = vadd.f32 0.0, %v1955
        %v1957 = vpop.f32.mrb[0].mxu0
        %1958 = vmatprep.mubr.f32.mxu0 0.0
        %1959 = vmatmul.mubr.f32.gmra.mrb[0].mxu0 %v1780
        %v1960 = vpop.f32.mrb[0].mxu0
        %v1961 = vadd.f32 0.0, %v1960
        %v1962 = vpop.f32.mrb[0].mxu0
        %1963 = vmatprep.mubr.f32.mxu0 0.0
        %1964 = vmatmul.mubr.f32.gmra.mrb[0].mxu0 %v1783
        %v1965 = vpop.f32.mrb[0].mxu0
        %v1966 = vadd.f32 0.0, %v1965
        %v1967 = vpop.f32.mrb[0].mxu0
        %1968 = vmatprep.mubr.f32.mxu0 0.0
        %1969 = vmatmul.mubr.f32.gmra.mrb[0].mxu0 %v1786
        %v1970 = vpop.f32.mrb[0].mxu0
        %v1971 = vadd.f32 0.0, %v1970
        %v1972 = vpop.f32.mrb[0].mxu0
        %1973 = vmatprep.mubr.f32.mxu0 0.0
        %1974 = vmatmul.mubr.f32.gmra.mrb[0].mxu0 %v1789
        %v1975 = vpop.f32.mrb[0].mxu0
        %v1976 = vadd.f32 0.0, %v1975
        %v1977 = vpop.f32.mrb[0].mxu0
        %1978 = vmatprep.mubr.f32.mxu0 0.0
        %1979 = vmatmul.mubr.f32.gmra.mrb[0].mxu0 %v1792
        %v1980 = vpop.f32.mrb[0].mxu0
        %v1981 = vadd.f32 0.0, %v1980
        %v1982 = vpop.f32.mrb[0].mxu0
        %1983 = vmatprep.mubr.f32.mxu0 0.0
        %1984 = vmatmul.mubr.f32.gmra.mrb[0].mxu0 %v1795
        %v1985 = vpop.f32.mrb[0].mxu0
        %v1986 = vadd.f32 0.0, %v1985
        %v1987 = vpop.f32.mrb[0].mxu0
        %1988 = vmatprep.mubr.f32.mxu0 0.0
        %1989 = vmatmul.mubr.f32.gmra.mrb[0].mxu0 %v1798
        %v1990 = vpop.f32.mrb[0].mxu0
        %v1991 = vadd.f32 0.0, %v1990
        %v1992 = vpop.f32.mrb[0].mxu0
        %1993 = vmatprep.mubr.f32.mxu0 0.0
        %1994 = vmatmul.mubr.f32.gmra.mrb[0].mxu0 %v1801
        %v1995 = vpop.f32.mrb[0].mxu0
        %v1996 = vadd.f32 0.0, %v1995
        %v1997 = vpop.f32.mrb[0].mxu0
        %1998 = vmatprep.mubr.f32.mxu0 0.0
        %1999 = vmatmul.mubr.f32.gmra.mrb[0].mxu0 %v1804
        %v2000 = vpop.f32.mrb[0].mxu0
        %v2001 = vadd.f32 0.0, %v2000
        %v2002 = vpop.f32.mrb[0].mxu0
        %2003 = vmatprep.mubr.f32.mxu0 0.0
        %2004 = vmatmul.mubr.f32.gmra.mrb[0].mxu0 %v1807
        %v2005 = vpop.f32.mrb[0].mxu0
        %v2006 = vadd.f32 0.0, %v2005
        %v2007 = vpop.f32.mrb[0].mxu0
        %2008 = vmatprep.mubr.f32.mxu0 0.0
        %2009 = vmatmul.mubr.f32.gmra.mrb[0].mxu0 %v1810
        %v2010 = vpop.f32.mrb[0].mxu0
        %v2011 = vadd.f32 0.0, %v2010
        %v2012 = vpop.f32.mrb[0].mxu0
        %2013 = vmatprep.mubr.f32.mxu0 0.0
        %2014 = vmatmul.mubr.f32.gmra.mrb[0].mxu0 %v1813
        %v2015 = vpop.f32.mrb[0].mxu0
        %v2016 = vadd.f32 0.0, %v2015
        %v2017 = vpop.f32.mrb[0].mxu0
        %2018 = vmatprep.mubr.f32.mxu0 0.0
        %2019 = vmatmul.mubr.f32.gmra.mrb[0].mxu0 %v1816
        %v2020 = vpop.f32.mrb[0].mxu0
        %v2021 = vadd.f32 0.0, %v2020
        %v2022 = vpop.f32.mrb[0].mxu0
        %2023 = vmatprep.mubr.f32.mxu0 0.0
        %2024 = vmatmul.mubr.f32.gmra.mrb[0].mxu0 %v1819
        %v2025 = vpop.f32.mrb[0].mxu0
        %v2026 = vadd.f32 0.0, %v2025
        %v2027 = vpop.f32.mrb[0].mxu0
        %2028 = vmatprep.mubr.f32.mxu0 0.0
        %2029 = vmatmul.mubr.f32.gmra.mrb[0].mxu0 %v1822
        %v2030 = vpop.f32.mrb[0].mxu0
        %v2031 = vadd.f32 0.0, %v2030
        %v2032 = vpop.f32.mrb[0].mxu0
        %2033 = vmatprep.mubr.f32.mxu0 0.0
        %2034 = vmatmul.mubr.f32.gmra.mrb[0].mxu0 %v1825
        %v2035 = vpop.f32.mrb[0].mxu0
        %v2036 = vadd.f32 0.0, %v2035
        %v2037 = vpop.f32.mrb[0].mxu0
        %2038 = vmatprep.mubr.f32.mxu0 0.0
        %2039 = vmatmul.mubr.f32.gmra.mrb[0].mxu0 %v1828
        %v2040 = vpop.f32.mrb[0].mxu0
        %v2041 = vadd.f32 0.0, %v2040
        %v2042 = vpop.f32.mrb[0].mxu0
        %2043 = vmatprep.mubr.f32.mxu0 0.0
        %2044 = vmatmul.mubr.f32.gmra.mrb[0].mxu0 %v1831
        %v2045 = vpop.f32.mrb[0].mxu0
        %v2046 = vadd.f32 0.0, %v2045
        %v2047 = vpop.f32.mrb[0].mxu0
        %2048 = vmatprep.mubr.f32.mxu0 0.0
        %2049 = vmatmul.mubr.f32.gmra.mrb[0].mxu0 %v1834
        %v2050 = vpop.f32.mrb[0].mxu0
        %v2051 = vadd.f32 0.0, %v2050
        %v2052 = vpop.f32.mrb[0].mxu0
        %2053 = vmatprep.mubr.f32.mxu0 0.0
        %2054 = vmatmul.mubr.f32.gmra.mrb[0].mxu0 %v1837
        %v2055 = vpop.f32.mrb[0].mxu0
        %v2056 = vadd.f32 0.0, %v2055
        %v2057 = vpop.f32.mrb[0].mxu0
        %2058 = vmatprep.mubr.f32.mxu0 0.0
        %2059 = vmatmul.mubr.f32.gmra.mrb[0].mxu0 %v1840
        %v2060 = vpop.f32.mrb[0].mxu0
        %v2061 = vadd.f32 0.0, %v2060
        %v2062 = vpop.f32.mrb[0].mxu0
        %2063 = vmatprep.mubr.f32.mxu0 0.0
        %2064 = vmatmul.mubr.f32.gmra.mrb[0].mxu0 %v1843
        %v2065 = vpop.f32.mrb[0].mxu0
        %v2066 = vadd.f32 0.0, %v2065
        %v2067 = vpop.f32.mrb[0].mxu0
        %2068 = vmatprep.mubr.f32.mxu0 0.0
        %2069 = vmatmul.mubr.f32.gmra.mrb[0].mxu0 %v1846
        %v2070 = vpop.f32.mrb[0].mxu0
        %v2071 = vadd.f32 0.0, %v2070
        %v2072 = vpop.f32.mrb[0].mxu0
        %2073 = vmatprep.mubr.f32.mxu0 0.0
        %2074 = vmatmul.mubr.f32.gmra.mrb[0].mxu0 %v1849
        %v2075 = vpop.f32.mrb[0].mxu0
        %v2076 = vadd.f32 0.0, %v2075
        %v2077 = vpop.f32.mrb[0].mxu0
        %2078 = vdwg.mxu0
        %v2079 = vadd.f32 %v1689, %v1921
        %v2080 = vadd.f32 %v1690, %v1926
        %v2081 = vadd.f32 %v1691, %v1931
        %v2082 = vadd.f32 %v1692, %v1936
        %v2083 = vadd.f32 %v1693, %v1941
        %v2084 = vadd.f32 %v1694, %v1946
        %v2085 = vadd.f32 %v1695, %v1951
        %v2086 = vadd.f32 %v1696, %v1956
        %v2087 = vadd.f32 %v1697, %v1961
        %v2088 = vadd.f32 %v1698, %v1966
        %v2089 = vadd.f32 %v1699, %v1971
        %v2090 = vadd.f32 %v1700, %v1976
        %v2091 = vadd.f32 %v1701, %v1981
        %v2092 = vadd.f32 %v1702, %v1986
        %v2093 = vadd.f32 %v1703, %v1991
        %v2094 = vadd.f32 %v1704, %v1996
        %v2095 = vadd.f32 %v1705, %v2001
        %v2096 = vadd.f32 %v1706, %v2006
        %v2097 = vadd.f32 %v1707, %v2011
        %v2098 = vadd.f32 %v1708, %v2016
        %v2099 = vadd.f32 %v1709, %v2021
        %v2100 = vadd.f32 %v1710, %v2026
        %v2101 = vadd.f32 %v1711, %v2031
        %v2102 = vadd.f32 %v1712, %v2036
        %v2103 = vadd.f32 %v1713, %v2041
        %v2104 = vadd.f32 %v1714, %v2046
        %v2105 = vadd.f32 %v1715, %v2051
        %v2106 = vadd.f32 %v1716, %v2056
        %v2107 = vadd.f32 %v1717, %v2061
        %v2108 = vadd.f32 %v1718, %v2066
        %v2109 = vadd.f32 %v1719, %v2071
        %v2110 = vadd.f32 %v1720, %v2076
        %v2111 = vld [vmem:[%s1330 + $0x2] sm:$0xff]
        %v2112 = vld [vmem:[%s1330 + $0xa] sm:$0xff]
        %v2113 = vld [vmem:[%s1330 + $0x1a] sm:$0xff]
        %v2114 = vld [vmem:[%s1330 + $0x22] sm:$0xff]
        %v2115 = vld [vmem:[%s1330 + $0x32] sm:$0xff]
        %v2116 = vld [vmem:[%s1330 + $0x3a] sm:$0xff]
        %v2117 = vld [vmem:[%s1330 + $0x4a] sm:$0xff]
        %v2118 = vld [vmem:[%s1330 + $0x52] sm:$0xff]
        %v2119 = vld [vmem:[%s1330 + $0x62] sm:$0xff]
        %v2120 = vld [vmem:[%s1330 + $0x6a] sm:$0xff]
        %v2121 = vld [vmem:[%s1330 + $0x7a] sm:$0xff]
        %v2122 = vld [vmem:[%s1330 + $0x82] sm:$0xff]
        %v2123 = vld [vmem:[%s1330 + $0x92] sm:$0xff]
        %v2124 = vld [vmem:[%s1330 + $0x9a] sm:$0xff]
        %v2125 = vld [vmem:[%s1330 + $0xaa] sm:$0xff]
        %v2126 = vld [vmem:[%s1330 + $0xb2] sm:$0xff]
        %v2127 = vld [vmem:[%s1330 + $0xc2] sm:$0xff]
        %v2128 = vld [vmem:[%s1330 + $0xca] sm:$0xff]
        %v2129 = vld [vmem:[%s1330 + $0xda] sm:$0xff]
        %v2130 = vld [vmem:[%s1330 + $0xe2] sm:$0xff]
        %v2131 = vld [vmem:[%s1330 + $0xf2] sm:$0xff]
        %v2132 = vld [vmem:[%s1330 + $0xfa] sm:$0xff]
        %v2133 = vld [vmem:[%s1330 + $0x10a] sm:$0xff]
        %v2134 = vld [vmem:[%s1330 + $0x112] sm:$0xff]
        %v2135 = vld [vmem:[%s1330 + $0x122] sm:$0xff]
        %v2136 = vld [vmem:[%s1330 + $0x12a] sm:$0xff]
        %v2137 = vld [vmem:[%s1330 + $0x13a] sm:$0xff]
        %v2138 = vld [vmem:[%s1330 + $0x142] sm:$0xff]
        %v2139 = vld [vmem:[%s1330 + $0x152] sm:$0xff]
        %v2140 = vld [vmem:[%s1330 + $0x15a] sm:$0xff]
        %v2141 = vld [vmem:[%s1330 + $0x16a] sm:$0xff]
        %v2142 = vld [vmem:[%s1330 + $0x172] sm:$0xff]
        %s2143 = scalar_lea.vmem %s1, 20
        %v2144 = vld [vmem:[%s2143] sm:$0x7]
        %v2146 = vsel %vm290, %v2111, 0
        %v2149 = vsel %vm290, %v2112, 0
        %v2152 = vsel %vm290, %v2113, 0
        %v2155 = vsel %vm290, %v2114, 0
        %v2158 = vsel %vm290, %v2115, 0
        %v2161 = vsel %vm290, %v2116, 0
        %v2164 = vsel %vm290, %v2117, 0
        %v2167 = vsel %vm290, %v2118, 0
        %v2170 = vsel %vm290, %v2119, 0
        %v2173 = vsel %vm290, %v2120, 0
        %v2176 = vsel %vm290, %v2121, 0
        %v2179 = vsel %vm290, %v2122, 0
        %v2182 = vsel %vm290, %v2123, 0
        %v2185 = vsel %vm290, %v2124, 0
        %v2188 = vsel %vm290, %v2125, 0
        %v2191 = vsel %vm290, %v2126, 0
        %v2194 = vsel %vm290, %v2127, 0
        %v2197 = vsel %vm290, %v2128, 0
        %v2200 = vsel %vm290, %v2129, 0
        %v2203 = vsel %vm290, %v2130, 0
        %v2206 = vsel %vm290, %v2131, 0
        %v2209 = vsel %vm290, %v2132, 0
        %v2212 = vsel %vm290, %v2133, 0
        %v2215 = vsel %vm290, %v2134, 0
        %v2218 = vsel %vm290, %v2135, 0
        %v2221 = vsel %vm290, %v2136, 0
        %v2224 = vsel %vm290, %v2137, 0
        %v2227 = vsel %vm290, %v2138, 0
        %v2230 = vsel %vm290, %v2139, 0
        %v2233 = vsel %vm290, %v2140, 0
        %v2236 = vsel %vm290, %v2141, 0
        %v2239 = vsel %vm290, %v2142, 0
        %v2242 = vsel %vm387, %v2144, 0
        %2244 = vmatprep.subr.mxu0 0.0
        %2245 = vmatpush1.msra.mxu0 %v2242
        %2246 = vmatprep.subr.mxu0 0.0
        %2247 = vmatpush1.msra.mxu0 0.0
        %2248 = vmatprep.subr.mxu0 0.0
        %2249 = vmatpush1.msra.mxu0 0.0
        %2250 = vmatprep.subr.mxu0 0.0
        %2251 = vmatpush1.msra.mxu0 0.0
        %2252 = vmatprep.subr.mxu0 0.0
        %2253 = vmatpush1.msra.mxu0 0.0
        %2254 = vmatprep.subr.mxu0 0.0
        %2255 = vmatpush1.msra.mxu0 0.0
        %2256 = vmatprep.subr.mxu0 0.0
        %2257 = vmatpush1.msra.mxu0 0.0
        %2258 = vmatprep.subr.mxu0 0.0
        %2259 = vmatpush1.msra.mxu0 0.0
        %2260 = vmatprep.subr.mxu0 0.0
        %2261 = vmatpush1.msra.mxu0 0.0
        %2262 = vmatprep.subr.mxu0 0.0
        %2263 = vmatpush1.msra.mxu0 0.0
        %2264 = vmatprep.subr.mxu0 0.0
        %2265 = vmatpush1.msra.mxu0 0.0
        %2266 = vmatprep.subr.mxu0 0.0
        %2267 = vmatpush1.msra.mxu0 0.0
        %2268 = vmatprep.subr.mxu0 0.0
        %2269 = vmatpush1.msra.mxu0 0.0
        %2270 = vmatprep.subr.mxu0 0.0
        %2271 = vmatpush1.msra.mxu0 0.0
        %2272 = vmatprep.subr.mxu0 0.0
        %2273 = vmatpush1.msra.mxu0 0.0
        %2274 = vmatprep.subr.mxu0 0.0
        %2275 = vmatpush1.msra.mxu0 0.0
        %2276 = vmatprep.subr.mxu0 0.0
        %2277 = vmatpush1.msra.mxu0 0.0
        %2278 = vmatprep.subr.mxu0 0.0
        %2279 = vmatpush1.msra.mxu0 0.0
        %2280 = vmatprep.subr.mxu0 0.0
        %2281 = vmatpush1.msra.mxu0 0.0
        %2282 = vmatprep.subr.mxu0 0.0
        %2283 = vmatpush1.msra.mxu0 0.0
        %2284 = vmatprep.subr.mxu0 0.0
        %2285 = vmatpush1.msra.mxu0 0.0
        %2286 = vmatprep.subr.mxu0 0.0
        %2287 = vmatpush1.msra.mxu0 0.0
        %2288 = vmatprep.subr.mxu0 0.0
        %2289 = vmatpush1.msra.mxu0 0.0
        %2290 = vmatprep.subr.mxu0 0.0
        %2291 = vmatpush1.msra.mxu0 0.0
        %2292 = vmatprep.subr.mxu0 0.0
        %2293 = vmatpush1.msra.mxu0 0.0
        %2294 = vmatprep.subr.mxu0 0.0
        %2295 = vmatpush1.msra.mxu0 0.0
        %2296 = vmatprep.subr.mxu0 0.0
        %2297 = vmatpush1.msra.mxu0 0.0
        %2298 = vmatprep.subr.mxu0 0.0
        %2299 = vmatpush1.msra.mxu0 0.0
        %2300 = vmatprep.subr.mxu0 0.0
        %2301 = vmatpush1.msra.mxu0 0.0
        %2302 = vmatprep.subr.mxu0 0.0
        %2303 = vmatpush1.msra.mxu0 0.0
        %2304 = vmatprep.subr.mxu0 0.0
        %2305 = vmatpush1.msra.mxu0 0.0
        %2306 = vmatprep.subr.mxu0 0.0
        %2307 = vmatpush1.msra.mxu0 0.0
        %2308 = vmatprep.mubr.f32.mxu0 0.0
        %2309 = vmatmul.mubr.f32.gmra.mrb[0].mxu0 %v2146
        %v2310 = vpop.f32.mrb[0].mxu0
        %v2311 = vadd.f32 0.0, %v2310
        %v2312 = vpop.f32.mrb[0].mxu0
        %2313 = vmatprep.mubr.f32.mxu0 0.0
        %2314 = vmatmul.mubr.f32.gmra.mrb[0].mxu0 %v2149
        %v2315 = vpop.f32.mrb[0].mxu0
        %v2316 = vadd.f32 0.0, %v2315
        %v2317 = vpop.f32.mrb[0].mxu0
        %2318 = vmatprep.mubr.f32.mxu0 0.0
        %2319 = vmatmul.mubr.f32.gmra.mrb[0].mxu0 %v2152
        %v2320 = vpop.f32.mrb[0].mxu0
        %v2321 = vadd.f32 0.0, %v2320
        %v2322 = vpop.f32.mrb[0].mxu0
        %2323 = vmatprep.mubr.f32.mxu0 0.0
        %2324 = vmatmul.mubr.f32.gmra.mrb[0].mxu0 %v2155
        %v2325 = vpop.f32.mrb[0].mxu0
        %v2326 = vadd.f32 0.0, %v2325
        %v2327 = vpop.f32.mrb[0].mxu0
        %2328 = vmatprep.mubr.f32.mxu0 0.0
        %2329 = vmatmul.mubr.f32.gmra.mrb[0].mxu0 %v2158
        %v2330 = vpop.f32.mrb[0].mxu0
        %v2331 = vadd.f32 0.0, %v2330
        %v2332 = vpop.f32.mrb[0].mxu0
        %2333 = vmatprep.mubr.f32.mxu0 0.0
        %2334 = vmatmul.mubr.f32.gmra.mrb[0].mxu0 %v2161
        %v2335 = vpop.f32.mrb[0].mxu0
        %v2336 = vadd.f32 0.0, %v2335
        %v2337 = vpop.f32.mrb[0].mxu0
        %2338 = vmatprep.mubr.f32.mxu0 0.0
        %2339 = vmatmul.mubr.f32.gmra.mrb[0].mxu0 %v2164
        %v2340 = vpop.f32.mrb[0].mxu0
        %v2341 = vadd.f32 0.0, %v2340
        %v2342 = vpop.f32.mrb[0].mxu0
        %2343 = vmatprep.mubr.f32.mxu0 0.0
        %2344 = vmatmul.mubr.f32.gmra.mrb[0].mxu0 %v2167
        %v2345 = vpop.f32.mrb[0].mxu0
        %v2346 = vadd.f32 0.0, %v2345
        %v2347 = vpop.f32.mrb[0].mxu0
        %2348 = vmatprep.mubr.f32.mxu0 0.0
        %2349 = vmatmul.mubr.f32.gmra.mrb[0].mxu0 %v2170
        %v2350 = vpop.f32.mrb[0].mxu0
        %v2351 = vadd.f32 0.0, %v2350
        %v2352 = vpop.f32.mrb[0].mxu0
        %2353 = vmatprep.mubr.f32.mxu0 0.0
        %2354 = vmatmul.mubr.f32.gmra.mrb[0].mxu0 %v2173
        %v2355 = vpop.f32.mrb[0].mxu0
        %v2356 = vadd.f32 0.0, %v2355
        %v2357 = vpop.f32.mrb[0].mxu0
        %2358 = vmatprep.mubr.f32.mxu0 0.0
        %2359 = vmatmul.mubr.f32.gmra.mrb[0].mxu0 %v2176
        %v2360 = vpop.f32.mrb[0].mxu0
        %v2361 = vadd.f32 0.0, %v2360
        %v2362 = vpop.f32.mrb[0].mxu0
        %2363 = vmatprep.mubr.f32.mxu0 0.0
        %2364 = vmatmul.mubr.f32.gmra.mrb[0].mxu0 %v2179
        %v2365 = vpop.f32.mrb[0].mxu0
        %v2366 = vadd.f32 0.0, %v2365
        %v2367 = vpop.f32.mrb[0].mxu0
        %2368 = vmatprep.mubr.f32.mxu0 0.0
        %2369 = vmatmul.mubr.f32.gmra.mrb[0].mxu0 %v2182
        %v2370 = vpop.f32.mrb[0].mxu0
        %v2371 = vadd.f32 0.0, %v2370
        %v2372 = vpop.f32.mrb[0].mxu0
        %2373 = vmatprep.mubr.f32.mxu0 0.0
        %2374 = vmatmul.mubr.f32.gmra.mrb[0].mxu0 %v2185
        %v2375 = vpop.f32.mrb[0].mxu0
        %v2376 = vadd.f32 0.0, %v2375
        %v2377 = vpop.f32.mrb[0].mxu0
        %2378 = vmatprep.mubr.f32.mxu0 0.0
        %2379 = vmatmul.mubr.f32.gmra.mrb[0].mxu0 %v2188
        %v2380 = vpop.f32.mrb[0].mxu0
        %v2381 = vadd.f32 0.0, %v2380
        %v2382 = vpop.f32.mrb[0].mxu0
        %2383 = vmatprep.mubr.f32.mxu0 0.0
        %2384 = vmatmul.mubr.f32.gmra.mrb[0].mxu0 %v2191
        %v2385 = vpop.f32.mrb[0].mxu0
        %v2386 = vadd.f32 0.0, %v2385
        %v2387 = vpop.f32.mrb[0].mxu0
        %2388 = vmatprep.mubr.f32.mxu0 0.0
        %2389 = vmatmul.mubr.f32.gmra.mrb[0].mxu0 %v2194
        %v2390 = vpop.f32.mrb[0].mxu0
        %v2391 = vadd.f32 0.0, %v2390
        %v2392 = vpop.f32.mrb[0].mxu0
        %2393 = vmatprep.mubr.f32.mxu0 0.0
        %2394 = vmatmul.mubr.f32.gmra.mrb[0].mxu0 %v2197
        %v2395 = vpop.f32.mrb[0].mxu0
        %v2396 = vadd.f32 0.0, %v2395
        %v2397 = vpop.f32.mrb[0].mxu0
        %2398 = vmatprep.mubr.f32.mxu0 0.0
        %2399 = vmatmul.mubr.f32.gmra.mrb[0].mxu0 %v2200
        %v2400 = vpop.f32.mrb[0].mxu0
        %v2401 = vadd.f32 0.0, %v2400
        %v2402 = vpop.f32.mrb[0].mxu0
        %2403 = vmatprep.mubr.f32.mxu0 0.0
        %2404 = vmatmul.mubr.f32.gmra.mrb[0].mxu0 %v2203
        %v2405 = vpop.f32.mrb[0].mxu0
        %v2406 = vadd.f32 0.0, %v2405
        %v2407 = vpop.f32.mrb[0].mxu0
        %2408 = vmatprep.mubr.f32.mxu0 0.0
        %2409 = vmatmul.mubr.f32.gmra.mrb[0].mxu0 %v2206
        %v2410 = vpop.f32.mrb[0].mxu0
        %v2411 = vadd.f32 0.0, %v2410
        %v2412 = vpop.f32.mrb[0].mxu0
        %2413 = vmatprep.mubr.f32.mxu0 0.0
        %2414 = vmatmul.mubr.f32.gmra.mrb[0].mxu0 %v2209
        %v2415 = vpop.f32.mrb[0].mxu0
        %v2416 = vadd.f32 0.0, %v2415
        %v2417 = vpop.f32.mrb[0].mxu0
        %2418 = vmatprep.mubr.f32.mxu0 0.0
        %2419 = vmatmul.mubr.f32.gmra.mrb[0].mxu0 %v2212
        %v2420 = vpop.f32.mrb[0].mxu0
        %v2421 = vadd.f32 0.0, %v2420
        %v2422 = vpop.f32.mrb[0].mxu0
        %2423 = vmatprep.mubr.f32.mxu0 0.0
        %2424 = vmatmul.mubr.f32.gmra.mrb[0].mxu0 %v2215
        %v2425 = vpop.f32.mrb[0].mxu0
        %v2426 = vadd.f32 0.0, %v2425
        %v2427 = vpop.f32.mrb[0].mxu0
        %2428 = vmatprep.mubr.f32.mxu0 0.0
        %2429 = vmatmul.mubr.f32.gmra.mrb[0].mxu0 %v2218
        %v2430 = vpop.f32.mrb[0].mxu0
        %v2431 = vadd.f32 0.0, %v2430
        %v2432 = vpop.f32.mrb[0].mxu0
        %2433 = vmatprep.mubr.f32.mxu0 0.0
        %2434 = vmatmul.mubr.f32.gmra.mrb[0].mxu0 %v2221
        %v2435 = vpop.f32.mrb[0].mxu0
        %v2436 = vadd.f32 0.0, %v2435
        %v2437 = vpop.f32.mrb[0].mxu0
        %2438 = vmatprep.mubr.f32.mxu0 0.0
        %2439 = vmatmul.mubr.f32.gmra.mrb[0].mxu0 %v2224
        %v2440 = vpop.f32.mrb[0].mxu0
        %v2441 = vadd.f32 0.0, %v2440
        %v2442 = vpop.f32.mrb[0].mxu0
        %2443 = vmatprep.mubr.f32.mxu0 0.0
        %2444 = vmatmul.mubr.f32.gmra.mrb[0].mxu0 %v2227
        %v2445 = vpop.f32.mrb[0].mxu0
        %v2446 = vadd.f32 0.0, %v2445
        %v2447 = vpop.f32.mrb[0].mxu0
        %2448 = vmatprep.mubr.f32.mxu0 0.0
        %2449 = vmatmul.mubr.f32.gmra.mrb[0].mxu0 %v2230
        %v2450 = vpop.f32.mrb[0].mxu0
        %v2451 = vadd.f32 0.0, %v2450
        %v2452 = vpop.f32.mrb[0].mxu0
        %2453 = vmatprep.mubr.f32.mxu0 0.0
        %2454 = vmatmul.mubr.f32.gmra.mrb[0].mxu0 %v2233
        %v2455 = vpop.f32.mrb[0].mxu0
        %v2456 = vadd.f32 0.0, %v2455
        %v2457 = vpop.f32.mrb[0].mxu0
        %2458 = vmatprep.mubr.f32.mxu0 0.0
        %2459 = vmatmul.mubr.f32.gmra.mrb[0].mxu0 %v2236
        %v2460 = vpop.f32.mrb[0].mxu0
        %v2461 = vadd.f32 0.0, %v2460
        %v2462 = vpop.f32.mrb[0].mxu0
        %2463 = vmatprep.mubr.f32.mxu0 0.0
        %2464 = vmatmul.mubr.f32.gmra.mrb[0].mxu0 %v2239
        %v2465 = vpop.f32.mrb[0].mxu0
        %v2466 = vadd.f32 0.0, %v2465
        %v2467 = vpop.f32.mrb[0].mxu0
        %2468 = vdwg.mxu0
        %v2469 = vadd.f32 %v2079, %v2311
        %v2470 = vadd.f32 %v2080, %v2316
        %v2471 = vadd.f32 %v2081, %v2321
        %v2472 = vadd.f32 %v2082, %v2326
        %v2473 = vadd.f32 %v2083, %v2331
        %v2474 = vadd.f32 %v2084, %v2336
        %v2475 = vadd.f32 %v2085, %v2341
        %v2476 = vadd.f32 %v2086, %v2346
        %v2477 = vadd.f32 %v2087, %v2351
        %v2478 = vadd.f32 %v2088, %v2356
        %v2479 = vadd.f32 %v2089, %v2361
        %v2480 = vadd.f32 %v2090, %v2366
        %v2481 = vadd.f32 %v2091, %v2371
        %v2482 = vadd.f32 %v2092, %v2376
        %v2483 = vadd.f32 %v2093, %v2381
        %v2484 = vadd.f32 %v2094, %v2386
        %v2485 = vadd.f32 %v2095, %v2391
        %v2486 = vadd.f32 %v2096, %v2396
        %v2487 = vadd.f32 %v2097, %v2401
        %v2488 = vadd.f32 %v2098, %v2406
        %v2489 = vadd.f32 %v2099, %v2411
        %v2490 = vadd.f32 %v2100, %v2416
        %v2491 = vadd.f32 %v2101, %v2421
        %v2492 = vadd.f32 %v2102, %v2426
        %v2493 = vadd.f32 %v2103, %v2431
        %v2494 = vadd.f32 %v2104, %v2436
        %v2495 = vadd.f32 %v2105, %v2441
        %v2496 = vadd.f32 %v2106, %v2446
        %v2497 = vadd.f32 %v2107, %v2451
        %v2498 = vadd.f32 %v2108, %v2456
        %v2499 = vadd.f32 %v2109, %v2461
        %v2500 = vadd.f32 %v2110, %v2466
        %s2501 = scalar_lea.vmem %s222, 48
        %v2502 = vld [vmem:[%s2501] sm:$0xff]
        %v2503 = vld [vmem:[%s2501 + $0x8] sm:$0xff]
        %v2504 = vld [vmem:[%s2501 + $0x18] sm:$0xff]
        %v2505 = vld [vmem:[%s2501 + $0x20] sm:$0xff]
        %v2506 = vld [vmem:[%s2501 + $0x30] sm:$0xff]
        %v2507 = vld [vmem:[%s2501 + $0x38] sm:$0xff]
        %v2508 = vld [vmem:[%s2501 + $0x48] sm:$0xff]
        %v2509 = vld [vmem:[%s2501 + $0x50] sm:$0xff]
        %v2510 = vld [vmem:[%s2501 + $0x60] sm:$0xff]
        %v2511 = vld [vmem:[%s2501 + $0x68] sm:$0xff]
        %v2512 = vld [vmem:[%s2501 + $0x78] sm:$0xff]
        %v2513 = vld [vmem:[%s2501 + $0x80] sm:$0xff]
        %v2514 = vld [vmem:[%s2501 + $0x90] sm:$0xff]
        %v2515 = vld [vmem:[%s2501 + $0x98] sm:$0xff]
        %v2516 = vld [vmem:[%s2501 + $0xa8] sm:$0xff]
        %v2517 = vld [vmem:[%s2501 + $0xb0] sm:$0xff]
        %v2518 = vld [vmem:[%s2501 + $0xc0] sm:$0xff]
        %v2519 = vld [vmem:[%s2501 + $0xc8] sm:$0xff]
        %v2520 = vld [vmem:[%s2501 + $0xd8] sm:$0xff]
        %v2521 = vld [vmem:[%s2501 + $0xe0] sm:$0xff]
        %v2522 = vld [vmem:[%s2501 + $0xf0] sm:$0xff]
        %v2523 = vld [vmem:[%s2501 + $0xf8] sm:$0xff]
        %v2524 = vld [vmem:[%s2501 + $0x108] sm:$0xff]
        %v2525 = vld [vmem:[%s2501 + $0x110] sm:$0xff]
        %v2526 = vld [vmem:[%s2501 + $0x120] sm:$0xff]
        %v2527 = vld [vmem:[%s2501 + $0x128] sm:$0xff]
        %v2528 = vld [vmem:[%s2501 + $0x138] sm:$0xff]
        %v2529 = vld [vmem:[%s2501 + $0x140] sm:$0xff]
        %v2530 = vld [vmem:[%s2501 + $0x150] sm:$0xff]
        %v2531 = vld [vmem:[%s2501 + $0x158] sm:$0xff]
        %v2532 = vld [vmem:[%s2501 + $0x168] sm:$0xff]
        %v2533 = vld [vmem:[%s2501 + $0x170] sm:$0xff]
        %s2534 = scalar_lea.vmem %s1, 24
        %v2535 = vld [vmem:[%s2534] sm:$0x7]
        %v2537 = vsel %vm290, %v2502, 0
        %v2540 = vsel %vm290, %v2503, 0
        %v2543 = vsel %vm290, %v2504, 0
        %v2546 = vsel %vm290, %v2505, 0
        %v2549 = vsel %vm290, %v2506, 0
        %v2552 = vsel %vm290, %v2507, 0
        %v2555 = vsel %vm290, %v2508, 0
        %v2558 = vsel %vm290, %v2509, 0
        %v2561 = vsel %vm290, %v2510, 0
        %v2564 = vsel %vm290, %v2511, 0
        %v2567 = vsel %vm290, %v2512, 0
        %v2570 = vsel %vm290, %v2513, 0
        %v2573 = vsel %vm290, %v2514, 0
        %v2576 = vsel %vm290, %v2515, 0
        %v2579 = vsel %vm290, %v2516, 0
        %v2582 = vsel %vm290, %v2517, 0
        %v2585 = vsel %vm290, %v2518, 0
        %v2588 = vsel %vm290, %v2519, 0
        %v2591 = vsel %vm290, %v2520, 0
        %v2594 = vsel %vm290, %v2521, 0
        %v2597 = vsel %vm290, %v2522, 0
        %v2600 = vsel %vm290, %v2523, 0
        %v2603 = vsel %vm290, %v2524, 0
        %v2606 = vsel %vm290, %v2525, 0
        %v2609 = vsel %vm290, %v2526, 0
        %v2612 = vsel %vm290, %v2527, 0
        %v2615 = vsel %vm290, %v2528, 0
        %v2618 = vsel %vm290, %v2529, 0
        %v2621 = vsel %vm290, %v2530, 0
        %v2624 = vsel %vm290, %v2531, 0
        %v2627 = vsel %vm290, %v2532, 0
        %v2630 = vsel %vm290, %v2533, 0
        %v2633 = vsel %vm387, %v2535, 0
        %2635 = vmatprep.subr.mxu0 0.0
        %2636 = vmatpush1.msra.mxu0 %v2633
        %2637 = vmatprep.subr.mxu0 0.0
        %2638 = vmatpush1.msra.mxu0 0.0
        %2639 = vmatprep.subr.mxu0 0.0
        %2640 = vmatpush1.msra.mxu0 0.0
        %2641 = vmatprep.subr.mxu0 0.0
        %2642 = vmatpush1.msra.mxu0 0.0
        %2643 = vmatprep.subr.mxu0 0.0
        %2644 = vmatpush1.msra.mxu0 0.0
        %2645 = vmatprep.subr.mxu0 0.0
        %2646 = vmatpush1.msra.mxu0 0.0
        %2647 = vmatprep.subr.mxu0 0.0
        %2648 = vmatpush1.msra.mxu0 0.0
        %2649 = vmatprep.subr.mxu0 0.0
        %2650 = vmatpush1.msra.mxu0 0.0
        %2651 = vmatprep.subr.mxu0 0.0
        %2652 = vmatpush1.msra.mxu0 0.0
        %2653 = vmatprep.subr.mxu0 0.0
        %2654 = vmatpush1.msra.mxu0 0.0
        %2655 = vmatprep.subr.mxu0 0.0
        %2656 = vmatpush1.msra.mxu0 0.0
        %2657 = vmatprep.subr.mxu0 0.0
        %2658 = vmatpush1.msra.mxu0 0.0
        %2659 = vmatprep.subr.mxu0 0.0
        %2660 = vmatpush1.msra.mxu0 0.0
        %2661 = vmatprep.subr.mxu0 0.0
        %2662 = vmatpush1.msra.mxu0 0.0
        %2663 = vmatprep.subr.mxu0 0.0
        %2664 = vmatpush1.msra.mxu0 0.0
        %2665 = vmatprep.subr.mxu0 0.0
        %2666 = vmatpush1.msra.mxu0 0.0
        %2667 = vmatprep.subr.mxu0 0.0
        %2668 = vmatpush1.msra.mxu0 0.0
        %2669 = vmatprep.subr.mxu0 0.0
        %2670 = vmatpush1.msra.mxu0 0.0
        %2671 = vmatprep.subr.mxu0 0.0
        %2672 = vmatpush1.msra.mxu0 0.0
        %2673 = vmatprep.subr.mxu0 0.0
        %2674 = vmatpush1.msra.mxu0 0.0
        %2675 = vmatprep.subr.mxu0 0.0
        %2676 = vmatpush1.msra.mxu0 0.0
        %2677 = vmatprep.subr.mxu0 0.0
        %2678 = vmatpush1.msra.mxu0 0.0
        %2679 = vmatprep.subr.mxu0 0.0
        %2680 = vmatpush1.msra.mxu0 0.0
        %2681 = vmatprep.subr.mxu0 0.0
        %2682 = vmatpush1.msra.mxu0 0.0
        %2683 = vmatprep.subr.mxu0 0.0
        %2684 = vmatpush1.msra.mxu0 0.0
        %2685 = vmatprep.subr.mxu0 0.0
        %2686 = vmatpush1.msra.mxu0 0.0
        %2687 = vmatprep.subr.mxu0 0.0
        %2688 = vmatpush1.msra.mxu0 0.0
        %2689 = vmatprep.subr.mxu0 0.0
        %2690 = vmatpush1.msra.mxu0 0.0
        %2691 = vmatprep.subr.mxu0 0.0
        %2692 = vmatpush1.msra.mxu0 0.0
        %2693 = vmatprep.subr.mxu0 0.0
        %2694 = vmatpush1.msra.mxu0 0.0
        %2695 = vmatprep.subr.mxu0 0.0
        %2696 = vmatpush1.msra.mxu0 0.0
        %2697 = vmatprep.subr.mxu0 0.0
        %2698 = vmatpush1.msra.mxu0 0.0
        %2699 = vmatprep.mubr.f32.mxu0 0.0
        %2700 = vmatmul.mubr.f32.gmra.mrb[0].mxu0 %v2537
        %v2701 = vpop.f32.mrb[0].mxu0
        %v2702 = vadd.f32 0.0, %v2701
        %v2703 = vpop.f32.mrb[0].mxu0
        %2704 = vmatprep.mubr.f32.mxu0 0.0
        %2705 = vmatmul.mubr.f32.gmra.mrb[0].mxu0 %v2540
        %v2706 = vpop.f32.mrb[0].mxu0
        %v2707 = vadd.f32 0.0, %v2706
        %v2708 = vpop.f32.mrb[0].mxu0
        %2709 = vmatprep.mubr.f32.mxu0 0.0
        %2710 = vmatmul.mubr.f32.gmra.mrb[0].mxu0 %v2543
        %v2711 = vpop.f32.mrb[0].mxu0
        %v2712 = vadd.f32 0.0, %v2711
        %v2713 = vpop.f32.mrb[0].mxu0
        %2714 = vmatprep.mubr.f32.mxu0 0.0
        %2715 = vmatmul.mubr.f32.gmra.mrb[0].mxu0 %v2546
        %v2716 = vpop.f32.mrb[0].mxu0
        %v2717 = vadd.f32 0.0, %v2716
        %v2718 = vpop.f32.mrb[0].mxu0
        %2719 = vmatprep.mubr.f32.mxu0 0.0
        %2720 = vmatmul.mubr.f32.gmra.mrb[0].mxu0 %v2549
        %v2721 = vpop.f32.mrb[0].mxu0
        %v2722 = vadd.f32 0.0, %v2721
        %v2723 = vpop.f32.mrb[0].mxu0
        %2724 = vmatprep.mubr.f32.mxu0 0.0
        %2725 = vmatmul.mubr.f32.gmra.mrb[0].mxu0 %v2552
        %v2726 = vpop.f32.mrb[0].mxu0
        %v2727 = vadd.f32 0.0, %v2726
        %v2728 = vpop.f32.mrb[0].mxu0
        %2729 = vmatprep.mubr.f32.mxu0 0.0
        %2730 = vmatmul.mubr.f32.gmra.mrb[0].mxu0 %v2555
        %v2731 = vpop.f32.mrb[0].mxu0
        %v2732 = vadd.f32 0.0, %v2731
        %v2733 = vpop.f32.mrb[0].mxu0
        %2734 = vmatprep.mubr.f32.mxu0 0.0
        %2735 = vmatmul.mubr.f32.gmra.mrb[0].mxu0 %v2558
        %v2736 = vpop.f32.mrb[0].mxu0
        %v2737 = vadd.f32 0.0, %v2736
        %v2738 = vpop.f32.mrb[0].mxu0
        %2739 = vmatprep.mubr.f32.mxu0 0.0
        %2740 = vmatmul.mubr.f32.gmra.mrb[0].mxu0 %v2561
        %v2741 = vpop.f32.mrb[0].mxu0
        %v2742 = vadd.f32 0.0, %v2741
        %v2743 = vpop.f32.mrb[0].mxu0
        %2744 = vmatprep.mubr.f32.mxu0 0.0
        %2745 = vmatmul.mubr.f32.gmra.mrb[0].mxu0 %v2564
        %v2746 = vpop.f32.mrb[0].mxu0
        %v2747 = vadd.f32 0.0, %v2746
        %v2748 = vpop.f32.mrb[0].mxu0
        %2749 = vmatprep.mubr.f32.mxu0 0.0
        %2750 = vmatmul.mubr.f32.gmra.mrb[0].mxu0 %v2567
        %v2751 = vpop.f32.mrb[0].mxu0
        %v2752 = vadd.f32 0.0, %v2751
        %v2753 = vpop.f32.mrb[0].mxu0
        %2754 = vmatprep.mubr.f32.mxu0 0.0
        %2755 = vmatmul.mubr.f32.gmra.mrb[0].mxu0 %v2570
        %v2756 = vpop.f32.mrb[0].mxu0
        %v2757 = vadd.f32 0.0, %v2756
        %v2758 = vpop.f32.mrb[0].mxu0
        %2759 = vmatprep.mubr.f32.mxu0 0.0
        %2760 = vmatmul.mubr.f32.gmra.mrb[0].mxu0 %v2573
        %v2761 = vpop.f32.mrb[0].mxu0
        %v2762 = vadd.f32 0.0, %v2761
        %v2763 = vpop.f32.mrb[0].mxu0
        %2764 = vmatprep.mubr.f32.mxu0 0.0
        %2765 = vmatmul.mubr.f32.gmra.mrb[0].mxu0 %v2576
        %v2766 = vpop.f32.mrb[0].mxu0
        %v2767 = vadd.f32 0.0, %v2766
        %v2768 = vpop.f32.mrb[0].mxu0
        %2769 = vmatprep.mubr.f32.mxu0 0.0
        %2770 = vmatmul.mubr.f32.gmra.mrb[0].mxu0 %v2579
        %v2771 = vpop.f32.mrb[0].mxu0
        %v2772 = vadd.f32 0.0, %v2771
        %v2773 = vpop.f32.mrb[0].mxu0
        %2774 = vmatprep.mubr.f32.mxu0 0.0
        %2775 = vmatmul.mubr.f32.gmra.mrb[0].mxu0 %v2582
        %v2776 = vpop.f32.mrb[0].mxu0
        %v2777 = vadd.f32 0.0, %v2776
        %v2778 = vpop.f32.mrb[0].mxu0
        %2779 = vmatprep.mubr.f32.mxu0 0.0
        %2780 = vmatmul.mubr.f32.gmra.mrb[0].mxu0 %v2585
        %v2781 = vpop.f32.mrb[0].mxu0
        %v2782 = vadd.f32 0.0, %v2781
        %v2783 = vpop.f32.mrb[0].mxu0
        %2784 = vmatprep.mubr.f32.mxu0 0.0
        %2785 = vmatmul.mubr.f32.gmra.mrb[0].mxu0 %v2588
        %v2786 = vpop.f32.mrb[0].mxu0
        %v2787 = vadd.f32 0.0, %v2786
        %v2788 = vpop.f32.mrb[0].mxu0
        %2789 = vmatprep.mubr.f32.mxu0 0.0
        %2790 = vmatmul.mubr.f32.gmra.mrb[0].mxu0 %v2591
        %v2791 = vpop.f32.mrb[0].mxu0
        %v2792 = vadd.f32 0.0, %v2791
        %v2793 = vpop.f32.mrb[0].mxu0
        %2794 = vmatprep.mubr.f32.mxu0 0.0
        %2795 = vmatmul.mubr.f32.gmra.mrb[0].mxu0 %v2594
        %v2796 = vpop.f32.mrb[0].mxu0
        %v2797 = vadd.f32 0.0, %v2796
        %v2798 = vpop.f32.mrb[0].mxu0
        %2799 = vmatprep.mubr.f32.mxu0 0.0
        %2800 = vmatmul.mubr.f32.gmra.mrb[0].mxu0 %v2597
        %v2801 = vpop.f32.mrb[0].mxu0
        %v2802 = vadd.f32 0.0, %v2801
        %v2803 = vpop.f32.mrb[0].mxu0
        %2804 = vmatprep.mubr.f32.mxu0 0.0
        %2805 = vmatmul.mubr.f32.gmra.mrb[0].mxu0 %v2600
        %v2806 = vpop.f32.mrb[0].mxu0
        %v2807 = vadd.f32 0.0, %v2806
        %v2808 = vpop.f32.mrb[0].mxu0
        %2809 = vmatprep.mubr.f32.mxu0 0.0
        %2810 = vmatmul.mubr.f32.gmra.mrb[0].mxu0 %v2603
        %v2811 = vpop.f32.mrb[0].mxu0
        %v2812 = vadd.f32 0.0, %v2811
        %v2813 = vpop.f32.mrb[0].mxu0
        %2814 = vmatprep.mubr.f32.mxu0 0.0
        %2815 = vmatmul.mubr.f32.gmra.mrb[0].mxu0 %v2606
        %v2816 = vpop.f32.mrb[0].mxu0
        %v2817 = vadd.f32 0.0, %v2816
        %v2818 = vpop.f32.mrb[0].mxu0
        %2819 = vmatprep.mubr.f32.mxu0 0.0
        %2820 = vmatmul.mubr.f32.gmra.mrb[0].mxu0 %v2609
        %v2821 = vpop.f32.mrb[0].mxu0
        %v2822 = vadd.f32 0.0, %v2821
        %v2823 = vpop.f32.mrb[0].mxu0
        %2824 = vmatprep.mubr.f32.mxu0 0.0
        %2825 = vmatmul.mubr.f32.gmra.mrb[0].mxu0 %v2612
        %v2826 = vpop.f32.mrb[0].mxu0
        %v2827 = vadd.f32 0.0, %v2826
        %v2828 = vpop.f32.mrb[0].mxu0
        %2829 = vmatprep.mubr.f32.mxu0 0.0
        %2830 = vmatmul.mubr.f32.gmra.mrb[0].mxu0 %v2615
        %v2831 = vpop.f32.mrb[0].mxu0
        %v2832 = vadd.f32 0.0, %v2831
        %v2833 = vpop.f32.mrb[0].mxu0
        %2834 = vmatprep.mubr.f32.mxu0 0.0
        %2835 = vmatmul.mubr.f32.gmra.mrb[0].mxu0 %v2618
        %v2836 = vpop.f32.mrb[0].mxu0
        %v2837 = vadd.f32 0.0, %v2836
        %v2838 = vpop.f32.mrb[0].mxu0
        %2839 = vmatprep.mubr.f32.mxu0 0.0
        %2840 = vmatmul.mubr.f32.gmra.mrb[0].mxu0 %v2621
        %v2841 = vpop.f32.mrb[0].mxu0
        %v2842 = vadd.f32 0.0, %v2841
        %v2843 = vpop.f32.mrb[0].mxu0
        %2844 = vmatprep.mubr.f32.mxu0 0.0
        %2845 = vmatmul.mubr.f32.gmra.mrb[0].mxu0 %v2624
        %v2846 = vpop.f32.mrb[0].mxu0
        %v2847 = vadd.f32 0.0, %v2846
        %v2848 = vpop.f32.mrb[0].mxu0
        %2849 = vmatprep.mubr.f32.mxu0 0.0
        %2850 = vmatmul.mubr.f32.gmra.mrb[0].mxu0 %v2627
        %v2851 = vpop.f32.mrb[0].mxu0
        %v2852 = vadd.f32 0.0, %v2851
        %v2853 = vpop.f32.mrb[0].mxu0
        %2854 = vmatprep.mubr.f32.mxu0 0.0
        %2855 = vmatmul.mubr.f32.gmra.mrb[0].mxu0 %v2630
        %v2856 = vpop.f32.mrb[0].mxu0
        %v2857 = vadd.f32 0.0, %v2856
        %v2858 = vpop.f32.mrb[0].mxu0
        %2859 = vdwg.mxu0
        %v2860 = vadd.f32 %v2469, %v2702
        %v2861 = vadd.f32 %v2470, %v2707
        %v2862 = vadd.f32 %v2471, %v2712
        %v2863 = vadd.f32 %v2472, %v2717
        %v2864 = vadd.f32 %v2473, %v2722
        %v2865 = vadd.f32 %v2474, %v2727
        %v2866 = vadd.f32 %v2475, %v2732
        %v2867 = vadd.f32 %v2476, %v2737
        %v2868 = vadd.f32 %v2477, %v2742
        %v2869 = vadd.f32 %v2478, %v2747
        %v2870 = vadd.f32 %v2479, %v2752
        %v2871 = vadd.f32 %v2480, %v2757
        %v2872 = vadd.f32 %v2481, %v2762
        %v2873 = vadd.f32 %v2482, %v2767
        %v2874 = vadd.f32 %v2483, %v2772
        %v2875 = vadd.f32 %v2484, %v2777
        %v2876 = vadd.f32 %v2485, %v2782
        %v2877 = vadd.f32 %v2486, %v2787
        %v2878 = vadd.f32 %v2487, %v2792
        %v2879 = vadd.f32 %v2488, %v2797
        %v2880 = vadd.f32 %v2489, %v2802
        %v2881 = vadd.f32 %v2490, %v2807
        %v2882 = vadd.f32 %v2491, %v2812
        %v2883 = vadd.f32 %v2492, %v2817
        %v2884 = vadd.f32 %v2493, %v2822
        %v2885 = vadd.f32 %v2494, %v2827
        %v2886 = vadd.f32 %v2495, %v2832
        %v2887 = vadd.f32 %v2496, %v2837
        %v2888 = vadd.f32 %v2497, %v2842
        %v2889 = vadd.f32 %v2498, %v2847
        %v2890 = vadd.f32 %v2499, %v2852
        %v2891 = vadd.f32 %v2500, %v2857
        %v2892 = vld [vmem:[%s2501 + $0x1] sm:$0xff]
        %v2893 = vld [vmem:[%s2501 + $0x9] sm:$0xff]
        %v2894 = vld [vmem:[%s2501 + $0x19] sm:$0xff]
        %v2895 = vld [vmem:[%s2501 + $0x21] sm:$0xff]
        %v2896 = vld [vmem:[%s2501 + $0x31] sm:$0xff]
        %v2897 = vld [vmem:[%s2501 + $0x39] sm:$0xff]
        %v2898 = vld [vmem:[%s2501 + $0x49] sm:$0xff]
        %v2899 = vld [vmem:[%s2501 + $0x51] sm:$0xff]
        %v2900 = vld [vmem:[%s2501 + $0x61] sm:$0xff]
        %v2901 = vld [vmem:[%s2501 + $0x69] sm:$0xff]
        %v2902 = vld [vmem:[%s2501 + $0x79] sm:$0xff]
        %v2903 = vld [vmem:[%s2501 + $0x81] sm:$0xff]
        %v2904 = vld [vmem:[%s2501 + $0x91] sm:$0xff]
        %v2905 = vld [vmem:[%s2501 + $0x99] sm:$0xff]
        %v2906 = vld [vmem:[%s2501 + $0xa9] sm:$0xff]
        %v2907 = vld [vmem:[%s2501 + $0xb1] sm:$0xff]
        %v2908 = vld [vmem:[%s2501 + $0xc1] sm:$0xff]
        %v2909 = vld [vmem:[%s2501 + $0xc9] sm:$0xff]
        %v2910 = vld [vmem:[%s2501 + $0xd9] sm:$0xff]
        %v2911 = vld [vmem:[%s2501 + $0xe1] sm:$0xff]
        %v2912 = vld [vmem:[%s2501 + $0xf1] sm:$0xff]
        %v2913 = vld [vmem:[%s2501 + $0xf9] sm:$0xff]
        %v2914 = vld [vmem:[%s2501 + $0x109] sm:$0xff]
        %v2915 = vld [vmem:[%s2501 + $0x111] sm:$0xff]
        %v2916 = vld [vmem:[%s2501 + $0x121] sm:$0xff]
        %v2917 = vld [vmem:[%s2501 + $0x129] sm:$0xff]
        %v2918 = vld [vmem:[%s2501 + $0x139] sm:$0xff]
        %v2919 = vld [vmem:[%s2501 + $0x141] sm:$0xff]
        %v2920 = vld [vmem:[%s2501 + $0x151] sm:$0xff]
        %v2921 = vld [vmem:[%s2501 + $0x159] sm:$0xff]
        %v2922 = vld [vmem:[%s2501 + $0x169] sm:$0xff]
        %v2923 = vld [vmem:[%s2501 + $0x171] sm:$0xff]
        %s2924 = scalar_lea.vmem %s1, 28
        %v2925 = vld [vmem:[%s2924] sm:$0x7]
        %v2927 = vsel %vm290, %v2892, 0
        %v2930 = vsel %vm290, %v2893, 0
        %v2933 = vsel %vm290, %v2894, 0
        %v2936 = vsel %vm290, %v2895, 0
        %v2939 = vsel %vm290, %v2896, 0
        %v2942 = vsel %vm290, %v2897, 0
        %v2945 = vsel %vm290, %v2898, 0
        %v2948 = vsel %vm290, %v2899, 0
        %v2951 = vsel %vm290, %v2900, 0
        %v2954 = vsel %vm290, %v2901, 0
        %v2957 = vsel %vm290, %v2902, 0
        %v2960 = vsel %vm290, %v2903, 0
        %v2963 = vsel %vm290, %v2904, 0
        %v2966 = vsel %vm290, %v2905, 0
        %v2969 = vsel %vm290, %v2906, 0
        %v2972 = vsel %vm290, %v2907, 0
        %v2975 = vsel %vm290, %v2908, 0
        %v2978 = vsel %vm290, %v2909, 0
        %v2981 = vsel %vm290, %v2910, 0
        %v2984 = vsel %vm290, %v2911, 0
        %v2987 = vsel %vm290, %v2912, 0
        %v2990 = vsel %vm290, %v2913, 0
        %v2993 = vsel %vm290, %v2914, 0
        %v2996 = vsel %vm290, %v2915, 0
        %v2999 = vsel %vm290, %v2916, 0
        %v3002 = vsel %vm290, %v2917, 0
        %v3005 = vsel %vm290, %v2918, 0
        %v3008 = vsel %vm290, %v2919, 0
        %v3011 = vsel %vm290, %v2920, 0
        %v3014 = vsel %vm290, %v2921, 0
        %v3017 = vsel %vm290, %v2922, 0
        %v3020 = vsel %vm290, %v2923, 0
        %v3023 = vsel %vm387, %v2925, 0
        %3025 = vmatprep.subr.mxu0 0.0
        %3026 = vmatpush1.msra.mxu0 %v3023
        %3027 = vmatprep.subr.mxu0 0.0
        %3028 = vmatpush1.msra.mxu0 0.0
        %3029 = vmatprep.subr.mxu0 0.0
        %3030 = vmatpush1.msra.mxu0 0.0
        %3031 = vmatprep.subr.mxu0 0.0
        %3032 = vmatpush1.msra.mxu0 0.0
        %3033 = vmatprep.subr.mxu0 0.0
        %3034 = vmatpush1.msra.mxu0 0.0
        %3035 = vmatprep.subr.mxu0 0.0
        %3036 = vmatpush1.msra.mxu0 0.0
        %3037 = vmatprep.subr.mxu0 0.0
        %3038 = vmatpush1.msra.mxu0 0.0
        %3039 = vmatprep.subr.mxu0 0.0
        %3040 = vmatpush1.msra.mxu0 0.0
        %3041 = vmatprep.subr.mxu0 0.0
        %3042 = vmatpush1.msra.mxu0 0.0
        %3043 = vmatprep.subr.mxu0 0.0
        %3044 = vmatpush1.msra.mxu0 0.0
        %3045 = vmatprep.subr.mxu0 0.0
        %3046 = vmatpush1.msra.mxu0 0.0
        %3047 = vmatprep.subr.mxu0 0.0
        %3048 = vmatpush1.msra.mxu0 0.0
        %3049 = vmatprep.subr.mxu0 0.0
        %3050 = vmatpush1.msra.mxu0 0.0
        %3051 = vmatprep.subr.mxu0 0.0
        %3052 = vmatpush1.msra.mxu0 0.0
        %3053 = vmatprep.subr.mxu0 0.0
        %3054 = vmatpush1.msra.mxu0 0.0
        %3055 = vmatprep.subr.mxu0 0.0
        %3056 = vmatpush1.msra.mxu0 0.0
        %3057 = vmatprep.subr.mxu0 0.0
        %3058 = vmatpush1.msra.mxu0 0.0
        %3059 = vmatprep.subr.mxu0 0.0
        %3060 = vmatpush1.msra.mxu0 0.0
        %3061 = vmatprep.subr.mxu0 0.0
        %3062 = vmatpush1.msra.mxu0 0.0
        %3063 = vmatprep.subr.mxu0 0.0
        %3064 = vmatpush1.msra.mxu0 0.0
        %3065 = vmatprep.subr.mxu0 0.0
        %3066 = vmatpush1.msra.mxu0 0.0
        %3067 = vmatprep.subr.mxu0 0.0
        %3068 = vmatpush1.msra.mxu0 0.0
        %3069 = vmatprep.subr.mxu0 0.0
        %3070 = vmatpush1.msra.mxu0 0.0
        %3071 = vmatprep.subr.mxu0 0.0
        %3072 = vmatpush1.msra.mxu0 0.0
        %3073 = vmatprep.subr.mxu0 0.0
        %3074 = vmatpush1.msra.mxu0 0.0
        %3075 = vmatprep.subr.mxu0 0.0
        %3076 = vmatpush1.msra.mxu0 0.0
        %3077 = vmatprep.subr.mxu0 0.0
        %3078 = vmatpush1.msra.mxu0 0.0
        %3079 = vmatprep.subr.mxu0 0.0
        %3080 = vmatpush1.msra.mxu0 0.0
        %3081 = vmatprep.subr.mxu0 0.0
        %3082 = vmatpush1.msra.mxu0 0.0
        %3083 = vmatprep.subr.mxu0 0.0
        %3084 = vmatpush1.msra.mxu0 0.0
        %3085 = vmatprep.subr.mxu0 0.0
        %3086 = vmatpush1.msra.mxu0 0.0
        %3087 = vmatprep.subr.mxu0 0.0
        %3088 = vmatpush1.msra.mxu0 0.0
        %3089 = vmatprep.mubr.f32.mxu0 0.0
        %3090 = vmatmul.mubr.f32.gmra.mrb[0].mxu0 %v2927
        %v3091 = vpop.f32.mrb[0].mxu0
        %v3092 = vadd.f32 0.0, %v3091
        %v3093 = vpop.f32.mrb[0].mxu0
        %3094 = vmatprep.mubr.f32.mxu0 0.0
        %3095 = vmatmul.mubr.f32.gmra.mrb[0].mxu0 %v2930
        %v3096 = vpop.f32.mrb[0].mxu0
        %v3097 = vadd.f32 0.0, %v3096
        %v3098 = vpop.f32.mrb[0].mxu0
        %3099 = vmatprep.mubr.f32.mxu0 0.0
        %3100 = vmatmul.mubr.f32.gmra.mrb[0].mxu0 %v2933
        %v3101 = vpop.f32.mrb[0].mxu0
        %v3102 = vadd.f32 0.0, %v3101
        %v3103 = vpop.f32.mrb[0].mxu0
        %3104 = vmatprep.mubr.f32.mxu0 0.0
        %3105 = vmatmul.mubr.f32.gmra.mrb[0].mxu0 %v2936
        %v3106 = vpop.f32.mrb[0].mxu0
        %v3107 = vadd.f32 0.0, %v3106
        %v3108 = vpop.f32.mrb[0].mxu0
        %3109 = vmatprep.mubr.f32.mxu0 0.0
        %3110 = vmatmul.mubr.f32.gmra.mrb[0].mxu0 %v2939
        %v3111 = vpop.f32.mrb[0].mxu0
        %v3112 = vadd.f32 0.0, %v3111
        %v3113 = vpop.f32.mrb[0].mxu0
        %3114 = vmatprep.mubr.f32.mxu0 0.0
        %3115 = vmatmul.mubr.f32.gmra.mrb[0].mxu0 %v2942
        %v3116 = vpop.f32.mrb[0].mxu0
        %v3117 = vadd.f32 0.0, %v3116
        %v3118 = vpop.f32.mrb[0].mxu0
        %3119 = vmatprep.mubr.f32.mxu0 0.0
        %3120 = vmatmul.mubr.f32.gmra.mrb[0].mxu0 %v2945
        %v3121 = vpop.f32.mrb[0].mxu0
        %v3122 = vadd.f32 0.0, %v3121
        %v3123 = vpop.f32.mrb[0].mxu0
        %3124 = vmatprep.mubr.f32.mxu0 0.0
        %3125 = vmatmul.mubr.f32.gmra.mrb[0].mxu0 %v2948
        %v3126 = vpop.f32.mrb[0].mxu0
        %v3127 = vadd.f32 0.0, %v3126
        %v3128 = vpop.f32.mrb[0].mxu0
        %3129 = vmatprep.mubr.f32.mxu0 0.0
        %3130 = vmatmul.mubr.f32.gmra.mrb[0].mxu0 %v2951
        %v3131 = vpop.f32.mrb[0].mxu0
        %v3132 = vadd.f32 0.0, %v3131
        %v3133 = vpop.f32.mrb[0].mxu0
        %3134 = vmatprep.mubr.f32.mxu0 0.0
        %3135 = vmatmul.mubr.f32.gmra.mrb[0].mxu0 %v2954
        %v3136 = vpop.f32.mrb[0].mxu0
        %v3137 = vadd.f32 0.0, %v3136
        %v3138 = vpop.f32.mrb[0].mxu0
        %3139 = vmatprep.mubr.f32.mxu0 0.0
        %3140 = vmatmul.mubr.f32.gmra.mrb[0].mxu0 %v2957
        %v3141 = vpop.f32.mrb[0].mxu0
        %v3142 = vadd.f32 0.0, %v3141
        %v3143 = vpop.f32.mrb[0].mxu0
        %3144 = vmatprep.mubr.f32.mxu0 0.0
        %3145 = vmatmul.mubr.f32.gmra.mrb[0].mxu0 %v2960
        %v3146 = vpop.f32.mrb[0].mxu0
        %v3147 = vadd.f32 0.0, %v3146
        %v3148 = vpop.f32.mrb[0].mxu0
        %3149 = vmatprep.mubr.f32.mxu0 0.0
        %3150 = vmatmul.mubr.f32.gmra.mrb[0].mxu0 %v2963
        %v3151 = vpop.f32.mrb[0].mxu0
        %v3152 = vadd.f32 0.0, %v3151
        %v3153 = vpop.f32.mrb[0].mxu0
        %3154 = vmatprep.mubr.f32.mxu0 0.0
        %3155 = vmatmul.mubr.f32.gmra.mrb[0].mxu0 %v2966
        %v3156 = vpop.f32.mrb[0].mxu0
        %v3157 = vadd.f32 0.0, %v3156
        %v3158 = vpop.f32.mrb[0].mxu0
        %3159 = vmatprep.mubr.f32.mxu0 0.0
        %3160 = vmatmul.mubr.f32.gmra.mrb[0].mxu0 %v2969
        %v3161 = vpop.f32.mrb[0].mxu0
        %v3162 = vadd.f32 0.0, %v3161
        %v3163 = vpop.f32.mrb[0].mxu0
        %3164 = vmatprep.mubr.f32.mxu0 0.0
        %3165 = vmatmul.mubr.f32.gmra.mrb[0].mxu0 %v2972
        %v3166 = vpop.f32.mrb[0].mxu0
        %v3167 = vadd.f32 0.0, %v3166
        %v3168 = vpop.f32.mrb[0].mxu0
        %3169 = vmatprep.mubr.f32.mxu0 0.0
        %3170 = vmatmul.mubr.f32.gmra.mrb[0].mxu0 %v2975
        %v3171 = vpop.f32.mrb[0].mxu0
        %v3172 = vadd.f32 0.0, %v3171
        %v3173 = vpop.f32.mrb[0].mxu0
        %3174 = vmatprep.mubr.f32.mxu0 0.0
        %3175 = vmatmul.mubr.f32.gmra.mrb[0].mxu0 %v2978
        %v3176 = vpop.f32.mrb[0].mxu0
        %v3177 = vadd.f32 0.0, %v3176
        %v3178 = vpop.f32.mrb[0].mxu0
        %3179 = vmatprep.mubr.f32.mxu0 0.0
        %3180 = vmatmul.mubr.f32.gmra.mrb[0].mxu0 %v2981
        %v3181 = vpop.f32.mrb[0].mxu0
        %v3182 = vadd.f32 0.0, %v3181
        %v3183 = vpop.f32.mrb[0].mxu0
        %3184 = vmatprep.mubr.f32.mxu0 0.0
        %3185 = vmatmul.mubr.f32.gmra.mrb[0].mxu0 %v2984
        %v3186 = vpop.f32.mrb[0].mxu0
        %v3187 = vadd.f32 0.0, %v3186
        %v3188 = vpop.f32.mrb[0].mxu0
        %3189 = vmatprep.mubr.f32.mxu0 0.0
        %3190 = vmatmul.mubr.f32.gmra.mrb[0].mxu0 %v2987
        %v3191 = vpop.f32.mrb[0].mxu0
        %v3192 = vadd.f32 0.0, %v3191
        %v3193 = vpop.f32.mrb[0].mxu0
        %3194 = vmatprep.mubr.f32.mxu0 0.0
        %3195 = vmatmul.mubr.f32.gmra.mrb[0].mxu0 %v2990
        %v3196 = vpop.f32.mrb[0].mxu0
        %v3197 = vadd.f32 0.0, %v3196
        %v3198 = vpop.f32.mrb[0].mxu0
        %3199 = vmatprep.mubr.f32.mxu0 0.0
        %3200 = vmatmul.mubr.f32.gmra.mrb[0].mxu0 %v2993
        %v3201 = vpop.f32.mrb[0].mxu0
        %v3202 = vadd.f32 0.0, %v3201
        %v3203 = vpop.f32.mrb[0].mxu0
        %3204 = vmatprep.mubr.f32.mxu0 0.0
        %3205 = vmatmul.mubr.f32.gmra.mrb[0].mxu0 %v2996
        %v3206 = vpop.f32.mrb[0].mxu0
        %v3207 = vadd.f32 0.0, %v3206
        %v3208 = vpop.f32.mrb[0].mxu0
        %3209 = vmatprep.mubr.f32.mxu0 0.0
        %3210 = vmatmul.mubr.f32.gmra.mrb[0].mxu0 %v2999
        %v3211 = vpop.f32.mrb[0].mxu0
        %v3212 = vadd.f32 0.0, %v3211
        %v3213 = vpop.f32.mrb[0].mxu0
        %3214 = vmatprep.mubr.f32.mxu0 0.0
        %3215 = vmatmul.mubr.f32.gmra.mrb[0].mxu0 %v3002
        %v3216 = vpop.f32.mrb[0].mxu0
        %v3217 = vadd.f32 0.0, %v3216
        %v3218 = vpop.f32.mrb[0].mxu0
        %3219 = vmatprep.mubr.f32.mxu0 0.0
        %3220 = vmatmul.mubr.f32.gmra.mrb[0].mxu0 %v3005
        %v3221 = vpop.f32.mrb[0].mxu0
        %v3222 = vadd.f32 0.0, %v3221
        %v3223 = vpop.f32.mrb[0].mxu0
        %3224 = vmatprep.mubr.f32.mxu0 0.0
        %3225 = vmatmul.mubr.f32.gmra.mrb[0].mxu0 %v3008
        %v3226 = vpop.f32.mrb[0].mxu0
        %v3227 = vadd.f32 0.0, %v3226
        %v3228 = vpop.f32.mrb[0].mxu0
        %3229 = vmatprep.mubr.f32.mxu0 0.0
        %3230 = vmatmul.mubr.f32.gmra.mrb[0].mxu0 %v3011
        %v3231 = vpop.f32.mrb[0].mxu0
        %v3232 = vadd.f32 0.0, %v3231
        %v3233 = vpop.f32.mrb[0].mxu0
        %3234 = vmatprep.mubr.f32.mxu0 0.0
        %3235 = vmatmul.mubr.f32.gmra.mrb[0].mxu0 %v3014
        %v3236 = vpop.f32.mrb[0].mxu0
        %v3237 = vadd.f32 0.0, %v3236
        %v3238 = vpop.f32.mrb[0].mxu0
        %3239 = vmatprep.mubr.f32.mxu0 0.0
        %3240 = vmatmul.mubr.f32.gmra.mrb[0].mxu0 %v3017
        %v3241 = vpop.f32.mrb[0].mxu0
        %v3242 = vadd.f32 0.0, %v3241
        %v3243 = vpop.f32.mrb[0].mxu0
        %3244 = vmatprep.mubr.f32.mxu0 0.0
        %3245 = vmatmul.mubr.f32.gmra.mrb[0].mxu0 %v3020
        %v3246 = vpop.f32.mrb[0].mxu0
        %v3247 = vadd.f32 0.0, %v3246
        %v3248 = vpop.f32.mrb[0].mxu0
        %3249 = vdwg.mxu0
        %v3250 = vadd.f32 %v2860, %v3092
        %v3251 = vadd.f32 %v2861, %v3097
        %v3252 = vadd.f32 %v2862, %v3102
        %v3253 = vadd.f32 %v2863, %v3107
        %v3254 = vadd.f32 %v2864, %v3112
        %v3255 = vadd.f32 %v2865, %v3117
        %v3256 = vadd.f32 %v2866, %v3122
        %v3257 = vadd.f32 %v2867, %v3127
        %v3258 = vadd.f32 %v2868, %v3132
        %v3259 = vadd.f32 %v2869, %v3137
        %v3260 = vadd.f32 %v2870, %v3142
        %v3261 = vadd.f32 %v2871, %v3147
        %v3262 = vadd.f32 %v2872, %v3152
        %v3263 = vadd.f32 %v2873, %v3157
        %v3264 = vadd.f32 %v2874, %v3162
        %v3265 = vadd.f32 %v2875, %v3167
        %v3266 = vadd.f32 %v2876, %v3172
        %v3267 = vadd.f32 %v2877, %v3177
        %v3268 = vadd.f32 %v2878, %v3182
        %v3269 = vadd.f32 %v2879, %v3187
        %v3270 = vadd.f32 %v2880, %v3192
        %v3271 = vadd.f32 %v2881, %v3197
        %v3272 = vadd.f32 %v2882, %v3202
        %v3273 = vadd.f32 %v2883, %v3207
        %v3274 = vadd.f32 %v2884, %v3212
        %v3275 = vadd.f32 %v2885, %v3217
        %v3276 = vadd.f32 %v2886, %v3222
        %v3277 = vadd.f32 %v2887, %v3227
        %v3278 = vadd.f32 %v2888, %v3232
        %v3279 = vadd.f32 %v2889, %v3237
        %v3280 = vadd.f32 %v2890, %v3242
        %v3281 = vadd.f32 %v2891, %v3247
        %v3282 = vld [vmem:[%s2501 + $0x2] sm:$0xff]
        %v3283 = vld [vmem:[%s2501 + $0xa] sm:$0xff]
        %v3284 = vld [vmem:[%s2501 + $0x1a] sm:$0xff]
        %v3285 = vld [vmem:[%s2501 + $0x22] sm:$0xff]
        %v3286 = vld [vmem:[%s2501 + $0x32] sm:$0xff]
        %v3287 = vld [vmem:[%s2501 + $0x3a] sm:$0xff]
        %v3288 = vld [vmem:[%s2501 + $0x4a] sm:$0xff]
        %v3289 = vld [vmem:[%s2501 + $0x52] sm:$0xff]
        %v3290 = vld [vmem:[%s2501 + $0x62] sm:$0xff]
        %v3291 = vld [vmem:[%s2501 + $0x6a] sm:$0xff]
        %v3292 = vld [vmem:[%s2501 + $0x7a] sm:$0xff]
        %v3293 = vld [vmem:[%s2501 + $0x82] sm:$0xff]
        %v3294 = vld [vmem:[%s2501 + $0x92] sm:$0xff]
        %v3295 = vld [vmem:[%s2501 + $0x9a] sm:$0xff]
        %v3296 = vld [vmem:[%s2501 + $0xaa] sm:$0xff]
        %v3297 = vld [vmem:[%s2501 + $0xb2] sm:$0xff]
        %v3298 = vld [vmem:[%s2501 + $0xc2] sm:$0xff]
        %v3299 = vld [vmem:[%s2501 + $0xca] sm:$0xff]
        %v3300 = vld [vmem:[%s2501 + $0xda] sm:$0xff]
        %v3301 = vld [vmem:[%s2501 + $0xe2] sm:$0xff]
        %v3302 = vld [vmem:[%s2501 + $0xf2] sm:$0xff]
        %v3303 = vld [vmem:[%s2501 + $0xfa] sm:$0xff]
        %v3304 = vld [vmem:[%s2501 + $0x10a] sm:$0xff]
        %v3305 = vld [vmem:[%s2501 + $0x112] sm:$0xff]
        %v3306 = vld [vmem:[%s2501 + $0x122] sm:$0xff]
        %v3307 = vld [vmem:[%s2501 + $0x12a] sm:$0xff]
        %v3308 = vld [vmem:[%s2501 + $0x13a] sm:$0xff]
        %v3309 = vld [vmem:[%s2501 + $0x142] sm:$0xff]
        %v3310 = vld [vmem:[%s2501 + $0x152] sm:$0xff]
        %v3311 = vld [vmem:[%s2501 + $0x15a] sm:$0xff]
        %v3312 = vld [vmem:[%s2501 + $0x16a] sm:$0xff]
        %v3313 = vld [vmem:[%s2501 + $0x172] sm:$0xff]
        %s3314 = scalar_lea.vmem %s1, 32
        %v3315 = vld [vmem:[%s3314] sm:$0x7]
        %v3317 = vsel %vm290, %v3282, 0
        %v3320 = vsel %vm290, %v3283, 0
        %v3323 = vsel %vm290, %v3284, 0
        %v3326 = vsel %vm290, %v3285, 0
        %v3329 = vsel %vm290, %v3286, 0
        %v3332 = vsel %vm290, %v3287, 0
        %v3335 = vsel %vm290, %v3288, 0
        %v3338 = vsel %vm290, %v3289, 0
        %v3341 = vsel %vm290, %v3290, 0
        %v3344 = vsel %vm290, %v3291, 0
        %v3347 = vsel %vm290, %v3292, 0
        %v3350 = vsel %vm290, %v3293, 0
        %v3353 = vsel %vm290, %v3294, 0
        %v3356 = vsel %vm290, %v3295, 0
        %v3359 = vsel %vm290, %v3296, 0
        %v3362 = vsel %vm290, %v3297, 0
        %v3365 = vsel %vm290, %v3298, 0
        %v3368 = vsel %vm290, %v3299, 0
        %v3371 = vsel %vm290, %v3300, 0
        %v3374 = vsel %vm290, %v3301, 0
        %v3377 = vsel %vm290, %v3302, 0
        %v3380 = vsel %vm290, %v3303, 0
        %v3383 = vsel %vm290, %v3304, 0
        %v3386 = vsel %vm290, %v3305, 0
        %v3389 = vsel %vm290, %v3306, 0
        %v3392 = vsel %vm290, %v3307, 0
        %v3395 = vsel %vm290, %v3308, 0
        %v3398 = vsel %vm290, %v3309, 0
        %v3401 = vsel %vm290, %v3310, 0
        %v3404 = vsel %vm290, %v3311, 0
        %v3407 = vsel %vm290, %v3312, 0
        %v3410 = vsel %vm290, %v3313, 0
        %v3413 = vsel %vm387, %v3315, 0
        %3415 = vmatprep.subr.mxu0 0.0
        %3416 = vmatpush1.msra.mxu0 %v3413
        %3417 = vmatprep.subr.mxu0 0.0
        %3418 = vmatpush1.msra.mxu0 0.0
        %3419 = vmatprep.subr.mxu0 0.0
        %3420 = vmatpush1.msra.mxu0 0.0
        %3421 = vmatprep.subr.mxu0 0.0
        %3422 = vmatpush1.msra.mxu0 0.0
        %3423 = vmatprep.subr.mxu0 0.0
        %3424 = vmatpush1.msra.mxu0 0.0
        %3425 = vmatprep.subr.mxu0 0.0
        %3426 = vmatpush1.msra.mxu0 0.0
        %3427 = vmatprep.subr.mxu0 0.0
        %3428 = vmatpush1.msra.mxu0 0.0
        %3429 = vmatprep.subr.mxu0 0.0
        %3430 = vmatpush1.msra.mxu0 0.0
        %3431 = vmatprep.subr.mxu0 0.0
        %3432 = vmatpush1.msra.mxu0 0.0
        %3433 = vmatprep.subr.mxu0 0.0
        %3434 = vmatpush1.msra.mxu0 0.0
        %3435 = vmatprep.subr.mxu0 0.0
        %3436 = vmatpush1.msra.mxu0 0.0
        %3437 = vmatprep.subr.mxu0 0.0
        %3438 = vmatpush1.msra.mxu0 0.0
        %3439 = vmatprep.subr.mxu0 0.0
        %3440 = vmatpush1.msra.mxu0 0.0
        %3441 = vmatprep.subr.mxu0 0.0
        %3442 = vmatpush1.msra.mxu0 0.0
        %3443 = vmatprep.subr.mxu0 0.0
        %3444 = vmatpush1.msra.mxu0 0.0
        %3445 = vmatprep.subr.mxu0 0.0
        %3446 = vmatpush1.msra.mxu0 0.0
        %3447 = vmatprep.subr.mxu0 0.0
        %3448 = vmatpush1.msra.mxu0 0.0
        %3449 = vmatprep.subr.mxu0 0.0
        %3450 = vmatpush1.msra.mxu0 0.0
        %3451 = vmatprep.subr.mxu0 0.0
        %3452 = vmatpush1.msra.mxu0 0.0
        %3453 = vmatprep.subr.mxu0 0.0
        %3454 = vmatpush1.msra.mxu0 0.0
        %3455 = vmatprep.subr.mxu0 0.0
        %3456 = vmatpush1.msra.mxu0 0.0
        %3457 = vmatprep.subr.mxu0 0.0
        %3458 = vmatpush1.msra.mxu0 0.0
        %3459 = vmatprep.subr.mxu0 0.0
        %3460 = vmatpush1.msra.mxu0 0.0
        %3461 = vmatprep.subr.mxu0 0.0
        %3462 = vmatpush1.msra.mxu0 0.0
        %3463 = vmatprep.subr.mxu0 0.0
        %3464 = vmatpush1.msra.mxu0 0.0
        %3465 = vmatprep.subr.mxu0 0.0
        %3466 = vmatpush1.msra.mxu0 0.0
        %3467 = vmatprep.subr.mxu0 0.0
        %3468 = vmatpush1.msra.mxu0 0.0
        %3469 = vmatprep.subr.mxu0 0.0
        %3470 = vmatpush1.msra.mxu0 0.0
        %3471 = vmatprep.subr.mxu0 0.0
        %3472 = vmatpush1.msra.mxu0 0.0
        %3473 = vmatprep.subr.mxu0 0.0
        %3474 = vmatpush1.msra.mxu0 0.0
        %3475 = vmatprep.subr.mxu0 0.0
        %3476 = vmatpush1.msra.mxu0 0.0
        %3477 = vmatprep.subr.mxu0 0.0
        %3478 = vmatpush1.msra.mxu0 0.0
        %3479 = vmatprep.mubr.f32.mxu0 0.0
        %3480 = vmatmul.mubr.f32.gmra.mrb[0].mxu0 %v3317
        %v3481 = vpop.f32.mrb[0].mxu0
        %v3482 = vadd.f32 0.0, %v3481
        %v3483 = vpop.f32.mrb[0].mxu0
        %3484 = vmatprep.mubr.f32.mxu0 0.0
        %3485 = vmatmul.mubr.f32.gmra.mrb[0].mxu0 %v3320
        %v3486 = vpop.f32.mrb[0].mxu0
        %v3487 = vadd.f32 0.0, %v3486
        %v3488 = vpop.f32.mrb[0].mxu0
        %3489 = vmatprep.mubr.f32.mxu0 0.0
        %3490 = vmatmul.mubr.f32.gmra.mrb[0].mxu0 %v3323
        %v3491 = vpop.f32.mrb[0].mxu0
        %v3492 = vadd.f32 0.0, %v3491
        %v3493 = vpop.f32.mrb[0].mxu0
        %3494 = vmatprep.mubr.f32.mxu0 0.0
        %3495 = vmatmul.mubr.f32.gmra.mrb[0].mxu0 %v3326
        %v3496 = vpop.f32.mrb[0].mxu0
        %v3497 = vadd.f32 0.0, %v3496
        %v3498 = vpop.f32.mrb[0].mxu0
        %3499 = vmatprep.mubr.f32.mxu0 0.0
        %3500 = vmatmul.mubr.f32.gmra.mrb[0].mxu0 %v3329
        %v3501 = vpop.f32.mrb[0].mxu0
        %v3502 = vadd.f32 0.0, %v3501
        %v3503 = vpop.f32.mrb[0].mxu0
        %3504 = vmatprep.mubr.f32.mxu0 0.0
        %3505 = vmatmul.mubr.f32.gmra.mrb[0].mxu0 %v3332
        %v3506 = vpop.f32.mrb[0].mxu0
        %v3507 = vadd.f32 0.0, %v3506
        %v3508 = vpop.f32.mrb[0].mxu0
        %3509 = vmatprep.mubr.f32.mxu0 0.0
        %3510 = vmatmul.mubr.f32.gmra.mrb[0].mxu0 %v3335
        %v3511 = vpop.f32.mrb[0].mxu0
        %v3512 = vadd.f32 0.0, %v3511
        %v3513 = vpop.f32.mrb[0].mxu0
        %3514 = vmatprep.mubr.f32.mxu0 0.0
        %3515 = vmatmul.mubr.f32.gmra.mrb[0].mxu0 %v3338
        %v3516 = vpop.f32.mrb[0].mxu0
        %v3517 = vadd.f32 0.0, %v3516
        %v3518 = vpop.f32.mrb[0].mxu0
        %3519 = vmatprep.mubr.f32.mxu0 0.0
        %3520 = vmatmul.mubr.f32.gmra.mrb[0].mxu0 %v3341
        %v3521 = vpop.f32.mrb[0].mxu0
        %v3522 = vadd.f32 0.0, %v3521
        %v3523 = vpop.f32.mrb[0].mxu0
        %3524 = vmatprep.mubr.f32.mxu0 0.0
        %3525 = vmatmul.mubr.f32.gmra.mrb[0].mxu0 %v3344
        %v3526 = vpop.f32.mrb[0].mxu0
        %v3527 = vadd.f32 0.0, %v3526
        %v3528 = vpop.f32.mrb[0].mxu0
        %3529 = vmatprep.mubr.f32.mxu0 0.0
        %3530 = vmatmul.mubr.f32.gmra.mrb[0].mxu0 %v3347
        %v3531 = vpop.f32.mrb[0].mxu0
        %v3532 = vadd.f32 0.0, %v3531
        %v3533 = vpop.f32.mrb[0].mxu0
        %3534 = vmatprep.mubr.f32.mxu0 0.0
        %3535 = vmatmul.mubr.f32.gmra.mrb[0].mxu0 %v3350
        %v3536 = vpop.f32.mrb[0].mxu0
        %v3537 = vadd.f32 0.0, %v3536
        %v3538 = vpop.f32.mrb[0].mxu0
        %3539 = vmatprep.mubr.f32.mxu0 0.0
        %3540 = vmatmul.mubr.f32.gmra.mrb[0].mxu0 %v3353
        %v3541 = vpop.f32.mrb[0].mxu0
        %v3542 = vadd.f32 0.0, %v3541
        %v3543 = vpop.f32.mrb[0].mxu0
        %3544 = vmatprep.mubr.f32.mxu0 0.0
        %3545 = vmatmul.mubr.f32.gmra.mrb[0].mxu0 %v3356
        %v3546 = vpop.f32.mrb[0].mxu0
        %v3547 = vadd.f32 0.0, %v3546
        %v3548 = vpop.f32.mrb[0].mxu0
        %3549 = vmatprep.mubr.f32.mxu0 0.0
        %3550 = vmatmul.mubr.f32.gmra.mrb[0].mxu0 %v3359
        %v3551 = vpop.f32.mrb[0].mxu0
        %v3552 = vadd.f32 0.0, %v3551
        %v3553 = vpop.f32.mrb[0].mxu0
        %3554 = vmatprep.mubr.f32.mxu0 0.0
        %3555 = vmatmul.mubr.f32.gmra.mrb[0].mxu0 %v3362
        %v3556 = vpop.f32.mrb[0].mxu0
        %v3557 = vadd.f32 0.0, %v3556
        %v3558 = vpop.f32.mrb[0].mxu0
        %3559 = vmatprep.mubr.f32.mxu0 0.0
        %3560 = vmatmul.mubr.f32.gmra.mrb[0].mxu0 %v3365
        %v3561 = vpop.f32.mrb[0].mxu0
        %v3562 = vadd.f32 0.0, %v3561
        %v3563 = vpop.f32.mrb[0].mxu0
        %3564 = vmatprep.mubr.f32.mxu0 0.0
        %3565 = vmatmul.mubr.f32.gmra.mrb[0].mxu0 %v3368
        %v3566 = vpop.f32.mrb[0].mxu0
        %v3567 = vadd.f32 0.0, %v3566
        %v3568 = vpop.f32.mrb[0].mxu0
        %3569 = vmatprep.mubr.f32.mxu0 0.0
        %3570 = vmatmul.mubr.f32.gmra.mrb[0].mxu0 %v3371
        %v3571 = vpop.f32.mrb[0].mxu0
        %v3572 = vadd.f32 0.0, %v3571
        %v3573 = vpop.f32.mrb[0].mxu0
        %3574 = vmatprep.mubr.f32.mxu0 0.0
        %3575 = vmatmul.mubr.f32.gmra.mrb[0].mxu0 %v3374
        %v3576 = vpop.f32.mrb[0].mxu0
        %v3577 = vadd.f32 0.0, %v3576
        %v3578 = vpop.f32.mrb[0].mxu0
        %3579 = vmatprep.mubr.f32.mxu0 0.0
        %3580 = vmatmul.mubr.f32.gmra.mrb[0].mxu0 %v3377
        %v3581 = vpop.f32.mrb[0].mxu0
        %v3582 = vadd.f32 0.0, %v3581
        %v3583 = vpop.f32.mrb[0].mxu0
        %3584 = vmatprep.mubr.f32.mxu0 0.0
        %3585 = vmatmul.mubr.f32.gmra.mrb[0].mxu0 %v3380
        %v3586 = vpop.f32.mrb[0].mxu0
        %v3587 = vadd.f32 0.0, %v3586
        %v3588 = vpop.f32.mrb[0].mxu0
        %3589 = vmatprep.mubr.f32.mxu0 0.0
        %3590 = vmatmul.mubr.f32.gmra.mrb[0].mxu0 %v3383
        %v3591 = vpop.f32.mrb[0].mxu0
        %v3592 = vadd.f32 0.0, %v3591
        %v3593 = vpop.f32.mrb[0].mxu0
        %3594 = vmatprep.mubr.f32.mxu0 0.0
        %3595 = vmatmul.mubr.f32.gmra.mrb[0].mxu0 %v3386
        %v3596 = vpop.f32.mrb[0].mxu0
        %v3597 = vadd.f32 0.0, %v3596
        %v3598 = vpop.f32.mrb[0].mxu0
        %3599 = vmatprep.mubr.f32.mxu0 0.0
        %3600 = vmatmul.mubr.f32.gmra.mrb[0].mxu0 %v3389
        %v3601 = vpop.f32.mrb[0].mxu0
        %v3602 = vadd.f32 0.0, %v3601
        %v3603 = vpop.f32.mrb[0].mxu0
        %3604 = vmatprep.mubr.f32.mxu0 0.0
        %3605 = vmatmul.mubr.f32.gmra.mrb[0].mxu0 %v3392
        %v3606 = vpop.f32.mrb[0].mxu0
        %v3607 = vadd.f32 0.0, %v3606
        %v3608 = vpop.f32.mrb[0].mxu0
        %3609 = vmatprep.mubr.f32.mxu0 0.0
        %3610 = vmatmul.mubr.f32.gmra.mrb[0].mxu0 %v3395
        %v3611 = vpop.f32.mrb[0].mxu0
        %v3612 = vadd.f32 0.0, %v3611
        %v3613 = vpop.f32.mrb[0].mxu0
        %3614 = vmatprep.mubr.f32.mxu0 0.0
        %3615 = vmatmul.mubr.f32.gmra.mrb[0].mxu0 %v3398
        %v3616 = vpop.f32.mrb[0].mxu0
        %v3617 = vadd.f32 0.0, %v3616
        %v3618 = vpop.f32.mrb[0].mxu0
        %3619 = vmatprep.mubr.f32.mxu0 0.0
        %3620 = vmatmul.mubr.f32.gmra.mrb[0].mxu0 %v3401
        %v3621 = vpop.f32.mrb[0].mxu0
        %v3622 = vadd.f32 0.0, %v3621
        %v3623 = vpop.f32.mrb[0].mxu0
        %3624 = vmatprep.mubr.f32.mxu0 0.0
        %3625 = vmatmul.mubr.f32.gmra.mrb[0].mxu0 %v3404
        %v3626 = vpop.f32.mrb[0].mxu0
        %v3627 = vadd.f32 0.0, %v3626
        %v3628 = vpop.f32.mrb[0].mxu0
        %3629 = vmatprep.mubr.f32.mxu0 0.0
        %3630 = vmatmul.mubr.f32.gmra.mrb[0].mxu0 %v3407
        %v3631 = vpop.f32.mrb[0].mxu0
        %v3632 = vadd.f32 0.0, %v3631
        %v3633 = vpop.f32.mrb[0].mxu0
        %3634 = vmatprep.mubr.f32.mxu0 0.0
        %3635 = vmatmul.mubr.f32.gmra.mrb[0].mxu0 %v3410
        %v3636 = vpop.f32.mrb[0].mxu0
        %v3637 = vadd.f32 0.0, %v3636
        %v3638 = vpop.f32.mrb[0].mxu0
        %3639 = vdwg.mxu0
        %v3640 = vadd.f32 %v3250, %v3482
        %v3641 = vadd.f32 %v3251, %v3487
        %v3642 = vadd.f32 %v3252, %v3492
        %v3643 = vadd.f32 %v3253, %v3497
        %v3644 = vadd.f32 %v3254, %v3502
        %v3645 = vadd.f32 %v3255, %v3507
        %v3646 = vadd.f32 %v3256, %v3512
        %v3647 = vadd.f32 %v3257, %v3517
        %v3648 = vadd.f32 %v3258, %v3522
        %v3649 = vadd.f32 %v3259, %v3527
        %v3650 = vadd.f32 %v3260, %v3532
        %v3651 = vadd.f32 %v3261, %v3537
        %v3652 = vadd.f32 %v3262, %v3542
        %v3653 = vadd.f32 %v3263, %v3547
        %v3654 = vadd.f32 %v3264, %v3552
        %v3655 = vadd.f32 %v3265, %v3557
        %v3656 = vadd.f32 %v3266, %v3562
        %v3657 = vadd.f32 %v3267, %v3567
        %v3658 = vadd.f32 %v3268, %v3572
        %v3659 = vadd.f32 %v3269, %v3577
        %v3660 = vadd.f32 %v3270, %v3582
        %v3661 = vadd.f32 %v3271, %v3587
        %v3662 = vadd.f32 %v3272, %v3592
        %v3663 = vadd.f32 %v3273, %v3597
        %v3664 = vadd.f32 %v3274, %v3602
        %v3665 = vadd.f32 %v3275, %v3607
        %v3666 = vadd.f32 %v3276, %v3612
        %v3667 = vadd.f32 %v3277, %v3617
        %v3668 = vadd.f32 %v3278, %v3622
        %v3669 = vadd.f32 %v3279, %v3627
        %v3670 = vadd.f32 %v3280, %v3632
        %v3671 = vadd.f32 %v3281, %v3637
        %v3672 = vld [vmem:[%s2] sm:$0x1]
        %v3674 = vlaneseq
        %v3675 = vshrl.u32 %v3674, 7
        %v3676 = vsub.s32 0, %v3675
        %v3677 = vrot.slane %v3672, %v3676
        %v3679 = vadd.f32 %v3640, %v3677
        %v3680 = vadd.f32 %v3641, %v3677
        %v3681 = vadd.f32 %v3642, %v3677
        %v3682 = vadd.f32 %v3643, %v3677
        %v3683 = vadd.f32 %v3644, %v3677
        %v3684 = vadd.f32 %v3645, %v3677
        %v3685 = vadd.f32 %v3646, %v3677
        %v3686 = vadd.f32 %v3647, %v3677
        %v3687 = vadd.f32 %v3648, %v3677
        %v3688 = vadd.f32 %v3649, %v3677
        %v3689 = vadd.f32 %v3650, %v3677
        %v3690 = vadd.f32 %v3651, %v3677
        %v3691 = vadd.f32 %v3652, %v3677
        %v3692 = vadd.f32 %v3653, %v3677
        %v3693 = vadd.f32 %v3654, %v3677
        %v3694 = vadd.f32 %v3655, %v3677
        %v3695 = vadd.f32 %v3656, %v3677
        %v3696 = vadd.f32 %v3657, %v3677
        %v3697 = vadd.f32 %v3658, %v3677
        %v3698 = vadd.f32 %v3659, %v3677
        %v3699 = vadd.f32 %v3660, %v3677
        %v3700 = vadd.f32 %v3661, %v3677
        %v3701 = vadd.f32 %v3662, %v3677
        %v3702 = vadd.f32 %v3663, %v3677
        %v3703 = vadd.f32 %v3664, %v3677
        %v3704 = vadd.f32 %v3665, %v3677
        %v3705 = vadd.f32 %v3666, %v3677
        %v3706 = vadd.f32 %v3667, %v3677
        %v3707 = vadd.f32 %v3668, %v3677
        %v3708 = vadd.f32 %v3669, %v3677
        %v3709 = vadd.f32 %v3670, %v3677
        %v3710 = vadd.f32 %v3671, %v3677
        %v3711 = vmax.f32 %v3679, 0.0
        %v3712 = vmax.f32 %v3680, 0.0
        %v3713 = vmax.f32 %v3681, 0.0
        %v3714 = vmax.f32 %v3682, 0.0
        %v3715 = vmax.f32 %v3683, 0.0
        %v3716 = vmax.f32 %v3684, 0.0
        %v3717 = vmax.f32 %v3685, 0.0
        %v3718 = vmax.f32 %v3686, 0.0
        %v3719 = vmax.f32 %v3687, 0.0
        %v3720 = vmax.f32 %v3688, 0.0
        %v3721 = vmax.f32 %v3689, 0.0
        %v3722 = vmax.f32 %v3690, 0.0
        %v3723 = vmax.f32 %v3691, 0.0
        %v3724 = vmax.f32 %v3692, 0.0
        %v3725 = vmax.f32 %v3693, 0.0
        %v3726 = vmax.f32 %v3694, 0.0
        %v3727 = vmax.f32 %v3695, 0.0
        %v3728 = vmax.f32 %v3696, 0.0
        %v3729 = vmax.f32 %v3697, 0.0
        %v3730 = vmax.f32 %v3698, 0.0
        %v3731 = vmax.f32 %v3699, 0.0
        %v3732 = vmax.f32 %v3700, 0.0
        %v3733 = vmax.f32 %v3701, 0.0
        %v3734 = vmax.f32 %v3702, 0.0
        %v3735 = vmax.f32 %v3703, 0.0
        %v3736 = vmax.f32 %v3704, 0.0
        %v3737 = vmax.f32 %v3705, 0.0
        %v3738 = vmax.f32 %v3706, 0.0
        %v3739 = vmax.f32 %v3707, 0.0
        %v3740 = vmax.f32 %v3708, 0.0
        %v3741 = vmax.f32 %v3709, 0.0
        %v3742 = vmax.f32 %v3710, 0.0
        %vm3743 = vcmask 130048
        %3744 = vst.msk [vmem:[#allocation2] sm:$0xff] %vm3743, %v3711
        %3745 = vst.msk [vmem:[#allocation2 + $0x8] sm:$0xff] %vm3743, %v3712
        %3746 = vst.msk [vmem:[#allocation2 + $0x10] sm:$0xff] %vm3743, %v3713
        %3747 = vst.msk [vmem:[#allocation2 + $0x18] sm:$0xff] %vm3743, %v3714
        %3748 = vst.msk [vmem:[#allocation2 + $0x20] sm:$0xff] %vm3743, %v3715
        %3749 = vst.msk [vmem:[#allocation2 + $0x28] sm:$0xff] %vm3743, %v3716
        %3750 = vst.msk [vmem:[#allocation2 + $0x30] sm:$0xff] %vm3743, %v3717
        %3751 = vst.msk [vmem:[#allocation2 + $0x38] sm:$0xff] %vm3743, %v3718
        %3752 = vst.msk [vmem:[#allocation2 + $0x40] sm:$0xff] %vm3743, %v3719
        %3753 = vst.msk [vmem:[#allocation2 + $0x48] sm:$0xff] %vm3743, %v3720
        %3754 = vst.msk [vmem:[#allocation2 + $0x50] sm:$0xff] %vm3743, %v3721
        %3755 = vst.msk [vmem:[#allocation2 + $0x58] sm:$0xff] %vm3743, %v3722
        %3756 = vst.msk [vmem:[#allocation2 + $0x60] sm:$0xff] %vm3743, %v3723
        %3757 = vst.msk [vmem:[#allocation2 + $0x68] sm:$0xff] %vm3743, %v3724
        %3758 = vst.msk [vmem:[#allocation2 + $0x70] sm:$0xff] %vm3743, %v3725
        %3759 = vst.msk [vmem:[#allocation2 + $0x78] sm:$0xff] %vm3743, %v3726
        %3760 = vst.msk [vmem:[#allocation2 + $0x80] sm:$0xff] %vm3743, %v3727
        %3761 = vst.msk [vmem:[#allocation2 + $0x88] sm:$0xff] %vm3743, %v3728
        %3762 = vst.msk [vmem:[#allocation2 + $0x90] sm:$0xff] %vm3743, %v3729
        %3763 = vst.msk [vmem:[#allocation2 + $0x98] sm:$0xff] %vm3743, %v3730
        %3764 = vst.msk [vmem:[#allocation2 + $0xa0] sm:$0xff] %vm3743, %v3731
        %3765 = vst.msk [vmem:[#allocation2 + $0xa8] sm:$0xff] %vm3743, %v3732
        %3766 = vst.msk [vmem:[#allocation2 + $0xb0] sm:$0xff] %vm3743, %v3733
        %3767 = vst.msk [vmem:[#allocation2 + $0xb8] sm:$0xff] %vm3743, %v3734
        %3768 = vst.msk [vmem:[#allocation2 + $0xc0] sm:$0xff] %vm3743, %v3735
        %3769 = vst.msk [vmem:[#allocation2 + $0xc8] sm:$0xff] %vm3743, %v3736
        %3770 = vst.msk [vmem:[#allocation2 + $0xd0] sm:$0xff] %vm3743, %v3737
        %3771 = vst.msk [vmem:[#allocation2 + $0xd8] sm:$0xff] %vm3743, %v3738
        %3772 = vst.msk [vmem:[#allocation2 + $0xe0] sm:$0xff] %vm3743, %v3739
        %3773 = vst.msk [vmem:[#allocation2 + $0xe8] sm:$0xff] %vm3743, %v3740
        %3774 = vst.msk [vmem:[#allocation2 + $0xf0] sm:$0xff] %vm3743, %v3741
        %3775 = vst.msk [vmem:[#allocation2 + $0xf8] sm:$0xff] %vm3743, %v3742
        %v3776 = vld [vmem:[#allocation2] ss:$2 sm:$0xff]
        %s3777 = scalar_lea.vmem [#allocation2], 16
        %v3778 = vld [vmem:[%s3777] ss:$2 sm:$0xff]
        %s3779 = scalar_lea.vmem [#allocation2], 32
        %v3780 = vld [vmem:[%s3779] ss:$2 sm:$0xff]
        %s3781 = scalar_lea.vmem [#allocation2], 48
        %v3782 = vld [vmem:[%s3781] ss:$2 sm:$0xff]
        %s3783 = scalar_lea.vmem [#allocation2], 64
        %v3784 = vld [vmem:[%s3783] ss:$2 sm:$0xff]
        %s3785 = scalar_lea.vmem [#allocation2], 80
        %v3786 = vld [vmem:[%s3785] ss:$2 sm:$0xff]
        %s3787 = scalar_lea.vmem [#allocation2], 96
        %v3788 = vld [vmem:[%s3787] ss:$2 sm:$0xff]
        %s3789 = scalar_lea.vmem [#allocation2], 112
        %v3790 = vld [vmem:[%s3789] ss:$2 sm:$0xff]
        %s3791 = scalar_lea.vmem [#allocation2], 128
        %v3792 = vld [vmem:[%s3791] ss:$2 sm:$0xff]
        %s3793 = scalar_lea.vmem [#allocation2], 144
        %v3794 = vld [vmem:[%s3793] ss:$2 sm:$0xff]
        %s3795 = scalar_lea.vmem [#allocation2], 160
        %v3796 = vld [vmem:[%s3795] ss:$2 sm:$0xff]
        %s3797 = scalar_lea.vmem [#allocation2], 176
        %v3798 = vld [vmem:[%s3797] ss:$2 sm:$0xff]
        %s3799 = scalar_lea.vmem [#allocation2], 192
        %v3800 = vld [vmem:[%s3799] ss:$2 sm:$0xff]
        %s3801 = scalar_lea.vmem [#allocation2], 208
        %v3802 = vld [vmem:[%s3801] ss:$2 sm:$0xff]
        %s3803 = scalar_lea.vmem [#allocation2], 224
        %v3804 = vld [vmem:[%s3803] ss:$2 sm:$0xff]
        %s3805 = scalar_lea.vmem [#allocation2], 240
        %v3806 = vld [vmem:[%s3805] ss:$2 sm:$0xff]
        %s3807 = scalar_lea.vmem [#allocation2], 1
        %v3808 = vld [vmem:[%s3807] ss:$2 sm:$0xff]
        %s3809 = scalar_lea.vmem [#allocation2], 17
        %v3810 = vld [vmem:[%s3809] ss:$2 sm:$0xff]
        %s3811 = scalar_lea.vmem [#allocation2], 33
        %v3812 = vld [vmem:[%s3811] ss:$2 sm:$0xff]
        %s3813 = scalar_lea.vmem [#allocation2], 49
        %v3814 = vld [vmem:[%s3813] ss:$2 sm:$0xff]
        %s3815 = scalar_lea.vmem [#allocation2], 65
        %v3816 = vld [vmem:[%s3815] ss:$2 sm:$0xff]
        %s3817 = scalar_lea.vmem [#allocation2], 81
        %v3818 = vld [vmem:[%s3817] ss:$2 sm:$0xff]
        %s3819 = scalar_lea.vmem [#allocation2], 97
        %v3820 = vld [vmem:[%s3819] ss:$2 sm:$0xff]
        %s3821 = scalar_lea.vmem [#allocation2], 113
        %v3822 = vld [vmem:[%s3821] ss:$2 sm:$0xff]
        %s3823 = scalar_lea.vmem [#allocation2], 129
        %v3824 = vld [vmem:[%s3823] ss:$2 sm:$0xff]
        %s3825 = scalar_lea.vmem [#allocation2], 145
        %v3826 = vld [vmem:[%s3825] ss:$2 sm:$0xff]
        %s3827 = scalar_lea.vmem [#allocation2], 161
        %v3828 = vld [vmem:[%s3827] ss:$2 sm:$0xff]
        %s3829 = scalar_lea.vmem [#allocation2], 177
        %v3830 = vld [vmem:[%s3829] ss:$2 sm:$0xff]
        %s3831 = scalar_lea.vmem [#allocation2], 193
        %v3832 = vld [vmem:[%s3831] ss:$2 sm:$0xff]
        %s3833 = scalar_lea.vmem [#allocation2], 209
        %v3834 = vld [vmem:[%s3833] ss:$2 sm:$0xff]
        %s3835 = scalar_lea.vmem [#allocation2], 225
        %v3836 = vld [vmem:[%s3835] ss:$2 sm:$0xff]
        %s3837 = scalar_lea.vmem [#allocation2], 241
        %v3838 = vld [vmem:[%s3837] ss:$2 sm:$0xff]
        %v3839 = vmax.f32 %v3776, %v3808
        %v3840 = vmax.f32 %v3778, %v3810
        %v3841 = vmax.f32 %v3780, %v3812
        %v3842 = vmax.f32 %v3782, %v3814
        %v3843 = vmax.f32 %v3784, %v3816
        %v3844 = vmax.f32 %v3786, %v3818
        %v3845 = vmax.f32 %v3788, %v3820
        %v3846 = vmax.f32 %v3790, %v3822
        %v3847 = vmax.f32 %v3792, %v3824
        %v3848 = vmax.f32 %v3794, %v3826
        %v3849 = vmax.f32 %v3796, %v3828
        %v3850 = vmax.f32 %v3798, %v3830
        %v3851 = vmax.f32 %v3800, %v3832
        %v3852 = vmax.f32 %v3802, %v3834
        %v3853 = vmax.f32 %v3804, %v3836
        %v3854 = vmax.f32 %v3806, %v3838
        %v3855 = vmax.f32 %v3839, %v3840
        %v3856 = vmax.f32 %v3841, %v3842
        %v3857 = vmax.f32 %v3843, %v3844
        %v3858 = vmax.f32 %v3845, %v3846
        %v3859 = vmax.f32 %v3847, %v3848
        %v3860 = vmax.f32 %v3849, %v3850
        %v3861 = vmax.f32 %v3851, %v3852
        %v3862 = vmax.f32 %v3853, %v3854
        %3863 = vst.msk [vmem:[#allocation3] sm:$0xff] %vm3743, 0.0
        %3864 = vst.msk [vmem:[#allocation3 + $0x8] sm:$0xff] %vm3743, 0.0
        %3865 = vst.msk [vmem:[#allocation3 + $0x10] sm:$0xff] %vm3743, 0.0
        %3866 = vst.msk [vmem:[#allocation3 + $0x18] sm:$0xff] %vm3743, 0.0
        %3867 = vst.msk [vmem:[#allocation3 + $0x20] sm:$0xff] %vm3743, 0.0
        %3868 = vst.msk [vmem:[#allocation3 + $0x28] sm:$0xff] %vm3743, 0.0
        %3869 = vst.msk [vmem:[#allocation3 + $0x30] sm:$0xff] %vm3743, 0.0
        %3870 = vst.msk [vmem:[#allocation3 + $0x38] sm:$0xff] %vm3743, 0.0
        %3871 = vst.msk [vmem:[#allocation3 + $0x40] sm:$0xff] %vm3743, 0.0
        %3872 = vst.msk [vmem:[#allocation3 + $0x48] sm:$0xff] %vm3743, 0.0
        %3873 = vst.msk [vmem:[#allocation3 + $0x50] sm:$0xff] %vm3743, 0.0
        %3874 = vst.msk [vmem:[#allocation3 + $0x58] sm:$0xff] %vm3743, 0.0
        %3875 = vst.msk [vmem:[#allocation3 + $0x60] sm:$0xff] %vm3743, 0.0
        %3876 = vst.msk [vmem:[#allocation3 + $0x68] sm:$0xff] %vm3743, 0.0
        %3877 = vst.msk [vmem:[#allocation3 + $0x70] sm:$0xff] %vm3743, 0.0
        %3878 = vst.msk [vmem:[#allocation3 + $0x78] sm:$0xff] %vm3743, 0.0
        %3879 = vst.msk [vmem:[#allocation3 + $0x80] sm:$0xff] %vm3743, 0.0
        %3880 = vst.msk [vmem:[#allocation3 + $0x88] sm:$0xff] %vm3743, 0.0
        %3881 = vst.msk [vmem:[#allocation3 + $0x90] sm:$0xff] %vm3743, 0.0
        %3882 = vst.msk [vmem:[#allocation3 + $0x98] sm:$0xff] %vm3743, 0.0
        %3883 = vst.msk [vmem:[#allocation3 + $0xa0] sm:$0xff] %vm3743, 0.0
        %3884 = vst.msk [vmem:[#allocation3 + $0xa8] sm:$0xff] %vm3743, 0.0
        %3885 = vst.msk [vmem:[#allocation3 + $0xb0] sm:$0xff] %vm3743, 0.0
        %3886 = vst.msk [vmem:[#allocation3 + $0xb8] sm:$0xff] %vm3743, 0.0
        %3887 = vst.msk [vmem:[#allocation3 + $0xc0] sm:$0xff] %vm3743, 0.0
        %3888 = vst.msk [vmem:[#allocation3 + $0xc8] sm:$0xff] %vm3743, 0.0
        %3889 = vst.msk [vmem:[#allocation3 + $0xd0] sm:$0xff] %vm3743, 0.0
        %3890 = vst.msk [vmem:[#allocation3 + $0xd8] sm:$0xff] %vm3743, 0.0
        %3891 = vst.msk [vmem:[#allocation3 + $0xe0] sm:$0xff] %vm3743, 0.0
        %3892 = vst.msk [vmem:[#allocation3 + $0xe8] sm:$0xff] %vm3743, 0.0
        %s3893 = scalar_lea.vmem [#allocation3], 24
        %3894 = vst.msk [vmem:[%s3893 + $0x8] sm:$0xff] %vm3743, %v3855
        %3895 = vst.msk [vmem:[%s3893 + $0x20] sm:$0xff] %vm3743, %v3856
        %3896 = vst.msk [vmem:[%s3893 + $0x38] sm:$0xff] %vm3743, %v3857
        %3897 = vst.msk [vmem:[%s3893 + $0x50] sm:$0xff] %vm3743, %v3858
        %3898 = vst.msk [vmem:[%s3893 + $0x68] sm:$0xff] %vm3743, %v3859
        %3899 = vst.msk [vmem:[%s3893 + $0x80] sm:$0xff] %vm3743, %v3860
        %3900 = vst.msk [vmem:[%s3893 + $0x98] sm:$0xff] %vm3743, %v3861
        %3901 = vst.msk [vmem:[%s3893 + $0xb0] sm:$0xff] %vm3743, %v3862
        %v3902 = vld [vmem:[#allocation3 + $0x7] sm:$0xff]
        %v3903 = vld [vmem:[#allocation3 + $0x1f] sm:$0xff]
        %v3904 = vld [vmem:[#allocation3 + $0x37] sm:$0xff]
        %v3905 = vld [vmem:[#allocation3 + $0x4f] sm:$0xff]
        %v3906 = vld [vmem:[#allocation3 + $0x67] sm:$0xff]
        %v3907 = vld [vmem:[#allocation3 + $0x7f] sm:$0xff]
        %v3908 = vld [vmem:[#allocation3 + $0x97] sm:$0xff]
        %v3909 = vld [vmem:[#allocation3 + $0xaf] sm:$0xff]
        %v3910 = vld [vmem:[%s3] sm:$0xff]
        %v3911 = vld [vmem:[%s3 + $0x8] sm:$0xff]
        %v3912 = vld [vmem:[#allocation3 + $0x8] sm:$0xff]
        %v3913 = vld [vmem:[#allocation3 + $0x20] sm:$0xff]
        %v3914 = vld [vmem:[#allocation3 + $0x38] sm:$0xff]
        %v3915 = vld [vmem:[#allocation3 + $0x50] sm:$0xff]
        %v3916 = vld [vmem:[#allocation3 + $0x68] sm:$0xff]
        %v3917 = vld [vmem:[#allocation3 + $0x80] sm:$0xff]
        %v3918 = vld [vmem:[#allocation3 + $0x98] sm:$0xff]
        %v3919 = vld [vmem:[#allocation3 + $0xb0] sm:$0xff]
        %s3920 = scalar_lea.vmem %s3, 16
        %v3921 = vld [vmem:[%s3920] sm:$0xff]
        %v3922 = vld [vmem:[%s3920 + $0x8] sm:$0xff]
        %v3924 = vsel %vm3743, %v3912, 0
        %v3927 = vsel %vm3743, %v3913, 0
        %v3930 = vsel %vm3743, %v3914, 0
        %v3933 = vsel %vm3743, %v3915, 0
        %v3936 = vsel %vm3743, %v3916, 0
        %v3939 = vsel %vm3743, %v3917, 0
        %v3942 = vsel %vm3743, %v3918, 0
        %v3945 = vsel %vm3743, %v3919, 0
        %3947 = vmatprep.subr.mxu0 0.0
        %3948 = vmatpush1.msra.mxu0 %v3921
        %3949 = vmatprep.subr.mxu0 0.0
        %3950 = vmatpush1.msra.mxu0 %v3922
        %3951 = vmatprep.subr.mxu0 0.0
        %3952 = vmatpush1.msra.mxu0 0.0
        %3953 = vmatprep.subr.mxu0 0.0
        %3954 = vmatpush1.msra.mxu0 0.0
        %3955 = vmatprep.subr.mxu0 0.0
        %3956 = vmatpush1.msra.mxu0 0.0
        %3957 = vmatprep.subr.mxu0 0.0
        %3958 = vmatpush1.msra.mxu0 0.0
        %3959 = vmatprep.subr.mxu0 0.0
        %3960 = vmatpush1.msra.mxu0 0.0
        %3961 = vmatprep.subr.mxu0 0.0
        %3962 = vmatpush1.msra.mxu0 0.0
        %3963 = vmatprep.subr.mxu0 0.0
        %3964 = vmatpush1.msra.mxu0 0.0
        %3965 = vmatprep.subr.mxu0 0.0
        %3966 = vmatpush1.msra.mxu0 0.0
        %3967 = vmatprep.subr.mxu0 0.0
        %3968 = vmatpush1.msra.mxu0 0.0
        %3969 = vmatprep.subr.mxu0 0.0
        %3970 = vmatpush1.msra.mxu0 0.0
        %3971 = vmatprep.subr.mxu0 0.0
        %3972 = vmatpush1.msra.mxu0 0.0
        %3973 = vmatprep.subr.mxu0 0.0
        %3974 = vmatpush1.msra.mxu0 0.0
        %3975 = vmatprep.subr.mxu0 0.0
        %3976 = vmatpush1.msra.mxu0 0.0
        %3977 = vmatprep.subr.mxu0 0.0
        %3978 = vmatpush1.msra.mxu0 0.0
        %3979 = vmatprep.subr.mxu0 0.0
        %3980 = vmatpush1.msra.mxu0 0.0
        %3981 = vmatprep.subr.mxu0 0.0
        %3982 = vmatpush1.msra.mxu0 0.0
        %3983 = vmatprep.subr.mxu0 0.0
        %3984 = vmatpush1.msra.mxu0 0.0
        %3985 = vmatprep.subr.mxu0 0.0
        %3986 = vmatpush1.msra.mxu0 0.0
        %3987 = vmatprep.subr.mxu0 0.0
        %3988 = vmatpush1.msra.mxu0 0.0
        %3989 = vmatprep.subr.mxu0 0.0
        %3990 = vmatpush1.msra.mxu0 0.0
        %3991 = vmatprep.subr.mxu0 0.0
        %3992 = vmatpush1.msra.mxu0 0.0
        %3993 = vmatprep.subr.mxu0 0.0
        %3994 = vmatpush1.msra.mxu0 0.0
        %3995 = vmatprep.subr.mxu0 0.0
        %3996 = vmatpush1.msra.mxu0 0.0
        %3997 = vmatprep.subr.mxu0 0.0
        %3998 = vmatpush1.msra.mxu0 0.0
        %3999 = vmatprep.subr.mxu0 0.0
        %4000 = vmatpush1.msra.mxu0 0.0
        %4001 = vmatprep.subr.mxu0 0.0
        %4002 = vmatpush1.msra.mxu0 0.0
        %4003 = vmatprep.subr.mxu0 0.0
        %4004 = vmatpush1.msra.mxu0 0.0
        %4005 = vmatprep.subr.mxu0 0.0
        %4006 = vmatpush1.msra.mxu0 0.0
        %4007 = vmatprep.subr.mxu0 0.0
        %4008 = vmatpush1.msra.mxu0 0.0
        %4009 = vmatprep.subr.mxu0 0.0
        %4010 = vmatpush1.msra.mxu0 0.0
        %4011 = vmatprep.mubr.f32.mxu0 0.0
        %4012 = vmatmul.mubr.f32.gmra.mrb[0].mxu0 %v3924
        %v4013 = vpop.f32.mrb[0].mxu0
        %v4014 = vadd.f32 0.0, %v4013
        %v4015 = vpop.f32.mrb[0].mxu0
        %4016 = vmatprep.mubr.f32.mxu0 0.0
        %4017 = vmatmul.mubr.f32.gmra.mrb[0].mxu0 %v3927
        %v4018 = vpop.f32.mrb[0].mxu0
        %v4019 = vadd.f32 0.0, %v4018
        %v4020 = vpop.f32.mrb[0].mxu0
        %4021 = vmatprep.mubr.f32.mxu0 0.0
        %4022 = vmatmul.mubr.f32.gmra.mrb[0].mxu0 %v3930
        %v4023 = vpop.f32.mrb[0].mxu0
        %v4024 = vadd.f32 0.0, %v4023
        %v4025 = vpop.f32.mrb[0].mxu0
        %4026 = vmatprep.mubr.f32.mxu0 0.0
        %4027 = vmatmul.mubr.f32.gmra.mrb[0].mxu0 %v3933
        %v4028 = vpop.f32.mrb[0].mxu0
        %v4029 = vadd.f32 0.0, %v4028
        %v4030 = vpop.f32.mrb[0].mxu0
        %4031 = vmatprep.mubr.f32.mxu0 0.0
        %4032 = vmatmul.mubr.f32.gmra.mrb[0].mxu0 %v3936
        %v4033 = vpop.f32.mrb[0].mxu0
        %v4034 = vadd.f32 0.0, %v4033
        %v4035 = vpop.f32.mrb[0].mxu0
        %4036 = vmatprep.mubr.f32.mxu0 0.0
        %4037 = vmatmul.mubr.f32.gmra.mrb[0].mxu0 %v3939
        %v4038 = vpop.f32.mrb[0].mxu0
        %v4039 = vadd.f32 0.0, %v4038
        %v4040 = vpop.f32.mrb[0].mxu0
        %4041 = vmatprep.mubr.f32.mxu0 0.0
        %4042 = vmatmul.mubr.f32.gmra.mrb[0].mxu0 %v3942
        %v4043 = vpop.f32.mrb[0].mxu0
        %v4044 = vadd.f32 0.0, %v4043
        %v4045 = vpop.f32.mrb[0].mxu0
        %4046 = vmatprep.mubr.f32.mxu0 0.0
        %4047 = vmatmul.mubr.f32.gmra.mrb[0].mxu0 %v3945
        %v4048 = vpop.f32.mrb[0].mxu0
        %v4049 = vadd.f32 0.0, %v4048
        %v4050 = vpop.f32.mrb[0].mxu0
        %4051 = vdwg.mxu0
        %v4053 = vsel %vm3743, %v3902, 0
        %v4056 = vsel %vm3743, %v3903, 0
        %v4059 = vsel %vm3743, %v3904, 0
        %v4062 = vsel %vm3743, %v3905, 0
        %v4065 = vsel %vm3743, %v3906, 0
        %v4068 = vsel %vm3743, %v3907, 0
        %v4071 = vsel %vm3743, %v3908, 0
        %v4074 = vsel %vm3743, %v3909, 0
        %4076 = vmatprep.subr.mxu0 0.0
        %4077 = vmatpush1.msra.mxu0 %v3910
        %4078 = vmatprep.subr.mxu0 0.0
        %4079 = vmatpush1.msra.mxu0 %v3911
        %4080 = vmatprep.subr.mxu0 0.0
        %4081 = vmatpush1.msra.mxu0 0.0
        %4082 = vmatprep.subr.mxu0 0.0
        %4083 = vmatpush1.msra.mxu0 0.0
        %4084 = vmatprep.subr.mxu0 0.0
        %4085 = vmatpush1.msra.mxu0 0.0
        %4086 = vmatprep.subr.mxu0 0.0
        %4087 = vmatpush1.msra.mxu0 0.0
        %4088 = vmatprep.subr.mxu0 0.0
        %4089 = vmatpush1.msra.mxu0 0.0
        %4090 = vmatprep.subr.mxu0 0.0
        %4091 = vmatpush1.msra.mxu0 0.0
        %4092 = vmatprep.subr.mxu0 0.0
        %4093 = vmatpush1.msra.mxu0 0.0
        %4094 = vmatprep.subr.mxu0 0.0
        %4095 = vmatpush1.msra.mxu0 0.0
        %4096 = vmatprep.subr.mxu0 0.0
        %4097 = vmatpush1.msra.mxu0 0.0
        %4098 = vmatprep.subr.mxu0 0.0
        %4099 = vmatpush1.msra.mxu0 0.0
        %4100 = vmatprep.subr.mxu0 0.0
        %4101 = vmatpush1.msra.mxu0 0.0
        %4102 = vmatprep.subr.mxu0 0.0
        %4103 = vmatpush1.msra.mxu0 0.0
        %4104 = vmatprep.subr.mxu0 0.0
        %4105 = vmatpush1.msra.mxu0 0.0
        %4106 = vmatprep.subr.mxu0 0.0
        %4107 = vmatpush1.msra.mxu0 0.0
        %4108 = vmatprep.subr.mxu0 0.0
        %4109 = vmatpush1.msra.mxu0 0.0
        %4110 = vmatprep.subr.mxu0 0.0
        %4111 = vmatpush1.msra.mxu0 0.0
        %4112 = vmatprep.subr.mxu0 0.0
        %4113 = vmatpush1.msra.mxu0 0.0
        %4114 = vmatprep.subr.mxu0 0.0
        %4115 = vmatpush1.msra.mxu0 0.0
        %4116 = vmatprep.subr.mxu0 0.0
        %4117 = vmatpush1.msra.mxu0 0.0
        %4118 = vmatprep.subr.mxu0 0.0
        %4119 = vmatpush1.msra.mxu0 0.0
        %4120 = vmatprep.subr.mxu0 0.0
        %4121 = vmatpush1.msra.mxu0 0.0
        %4122 = vmatprep.subr.mxu0 0.0
        %4123 = vmatpush1.msra.mxu0 0.0
        %4124 = vmatprep.subr.mxu0 0.0
        %4125 = vmatpush1.msra.mxu0 0.0
        %4126 = vmatprep.subr.mxu0 0.0
        %4127 = vmatpush1.msra.mxu0 0.0
        %4128 = vmatprep.subr.mxu0 0.0
        %4129 = vmatpush1.msra.mxu0 0.0
        %4130 = vmatprep.subr.mxu0 0.0
        %4131 = vmatpush1.msra.mxu0 0.0
        %4132 = vmatprep.subr.mxu0 0.0
        %4133 = vmatpush1.msra.mxu0 0.0
        %4134 = vmatprep.subr.mxu0 0.0
        %4135 = vmatpush1.msra.mxu0 0.0
        %4136 = vmatprep.subr.mxu0 0.0
        %4137 = vmatpush1.msra.mxu0 0.0
        %4138 = vmatprep.subr.mxu0 0.0
        %4139 = vmatpush1.msra.mxu0 0.0
        %4140 = vmatprep.mubr.f32.mxu0 0.0
        %4141 = vmatmul.mubr.f32.gmra.mrb[0].mxu0 %v4053
        %v4142 = vpop.f32.mrb[0].mxu0
        %v4143 = vadd.f32 %v4014, %v4142
        %v4144 = vpop.f32.mrb[0].mxu0
        %4145 = vmatprep.mubr.f32.mxu0 0.0
        %4146 = vmatmul.mubr.f32.gmra.mrb[0].mxu0 %v4056
        %v4147 = vpop.f32.mrb[0].mxu0
        %v4148 = vadd.f32 %v4019, %v4147
        %v4149 = vpop.f32.mrb[0].mxu0
        %4150 = vmatprep.mubr.f32.mxu0 0.0
        %4151 = vmatmul.mubr.f32.gmra.mrb[0].mxu0 %v4059
        %v4152 = vpop.f32.mrb[0].mxu0
        %v4153 = vadd.f32 %v4024, %v4152
        %v4154 = vpop.f32.mrb[0].mxu0
        %4155 = vmatprep.mubr.f32.mxu0 0.0
        %4156 = vmatmul.mubr.f32.gmra.mrb[0].mxu0 %v4062
        %v4157 = vpop.f32.mrb[0].mxu0
        %v4158 = vadd.f32 %v4029, %v4157
        %v4159 = vpop.f32.mrb[0].mxu0
        %4160 = vmatprep.mubr.f32.mxu0 0.0
        %4161 = vmatmul.mubr.f32.gmra.mrb[0].mxu0 %v4065
        %v4162 = vpop.f32.mrb[0].mxu0
        %v4163 = vadd.f32 %v4034, %v4162
        %v4164 = vpop.f32.mrb[0].mxu0
        %4165 = vmatprep.mubr.f32.mxu0 0.0
        %4166 = vmatmul.mubr.f32.gmra.mrb[0].mxu0 %v4068
        %v4167 = vpop.f32.mrb[0].mxu0
        %v4168 = vadd.f32 %v4039, %v4167
        %v4169 = vpop.f32.mrb[0].mxu0
        %4170 = vmatprep.mubr.f32.mxu0 0.0
        %4171 = vmatmul.mubr.f32.gmra.mrb[0].mxu0 %v4071
        %v4172 = vpop.f32.mrb[0].mxu0
        %v4173 = vadd.f32 %v4044, %v4172
        %v4174 = vpop.f32.mrb[0].mxu0
        %4175 = vmatprep.mubr.f32.mxu0 0.0
        %4176 = vmatmul.mubr.f32.gmra.mrb[0].mxu0 %v4074
        %v4177 = vpop.f32.mrb[0].mxu0
        %v4178 = vadd.f32 %v4049, %v4177
        %v4179 = vpop.f32.mrb[0].mxu0
        %4180 = vdwg.mxu0
        %v4181 = vld [vmem:[#allocation3 + $0x9] sm:$0xff]
        %v4182 = vld [vmem:[#allocation3 + $0x21] sm:$0xff]
        %v4183 = vld [vmem:[#allocation3 + $0x39] sm:$0xff]
        %v4184 = vld [vmem:[#allocation3 + $0x51] sm:$0xff]
        %v4185 = vld [vmem:[#allocation3 + $0x69] sm:$0xff]
        %v4186 = vld [vmem:[#allocation3 + $0x81] sm:$0xff]
        %v4187 = vld [vmem:[#allocation3 + $0x99] sm:$0xff]
        %v4188 = vld [vmem:[#allocation3 + $0xb1] sm:$0xff]
        %s4189 = scalar_lea.vmem %s3, 32
        %v4190 = vld [vmem:[%s4189] sm:$0xff]
        %v4191 = vld [vmem:[%s4189 + $0x8] sm:$0xff]
        %v4193 = vsel %vm3743, %v4181, 0
        %v4196 = vsel %vm3743, %v4182, 0
        %v4199 = vsel %vm3743, %v4183, 0
        %v4202 = vsel %vm3743, %v4184, 0
        %v4205 = vsel %vm3743, %v4185, 0
        %v4208 = vsel %vm3743, %v4186, 0
        %v4211 = vsel %vm3743, %v4187, 0
        %v4214 = vsel %vm3743, %v4188, 0
        %4216 = vmatprep.subr.mxu0 0.0
        %4217 = vmatpush1.msra.mxu0 %v4190
        %4218 = vmatprep.subr.mxu0 0.0
        %4219 = vmatpush1.msra.mxu0 %v4191
        %4220 = vmatprep.subr.mxu0 0.0
        %4221 = vmatpush1.msra.mxu0 0.0
        %4222 = vmatprep.subr.mxu0 0.0
        %4223 = vmatpush1.msra.mxu0 0.0
        %4224 = vmatprep.subr.mxu0 0.0
        %4225 = vmatpush1.msra.mxu0 0.0
        %4226 = vmatprep.subr.mxu0 0.0
        %4227 = vmatpush1.msra.mxu0 0.0
        %4228 = vmatprep.subr.mxu0 0.0
        %4229 = vmatpush1.msra.mxu0 0.0
        %4230 = vmatprep.subr.mxu0 0.0
        %4231 = vmatpush1.msra.mxu0 0.0
        %4232 = vmatprep.subr.mxu0 0.0
        %4233 = vmatpush1.msra.mxu0 0.0
        %4234 = vmatprep.subr.mxu0 0.0
        %4235 = vmatpush1.msra.mxu0 0.0
        %4236 = vmatprep.subr.mxu0 0.0
        %4237 = vmatpush1.msra.mxu0 0.0
        %4238 = vmatprep.subr.mxu0 0.0
        %4239 = vmatpush1.msra.mxu0 0.0
        %4240 = vmatprep.subr.mxu0 0.0
        %4241 = vmatpush1.msra.mxu0 0.0
        %4242 = vmatprep.subr.mxu0 0.0
        %4243 = vmatpush1.msra.mxu0 0.0
        %4244 = vmatprep.subr.mxu0 0.0
        %4245 = vmatpush1.msra.mxu0 0.0
        %4246 = vmatprep.subr.mxu0 0.0
        %4247 = vmatpush1.msra.mxu0 0.0
        %4248 = vmatprep.subr.mxu0 0.0
        %4249 = vmatpush1.msra.mxu0 0.0
        %4250 = vmatprep.subr.mxu0 0.0
        %4251 = vmatpush1.msra.mxu0 0.0
        %4252 = vmatprep.subr.mxu0 0.0
        %4253 = vmatpush1.msra.mxu0 0.0
        %4254 = vmatprep.subr.mxu0 0.0
        %4255 = vmatpush1.msra.mxu0 0.0
        %4256 = vmatprep.subr.mxu0 0.0
        %4257 = vmatpush1.msra.mxu0 0.0
        %4258 = vmatprep.subr.mxu0 0.0
        %4259 = vmatpush1.msra.mxu0 0.0
        %4260 = vmatprep.subr.mxu0 0.0
        %4261 = vmatpush1.msra.mxu0 0.0
        %4262 = vmatprep.subr.mxu0 0.0
        %4263 = vmatpush1.msra.mxu0 0.0
        %4264 = vmatprep.subr.mxu0 0.0
        %4265 = vmatpush1.msra.mxu0 0.0
        %4266 = vmatprep.subr.mxu0 0.0
        %4267 = vmatpush1.msra.mxu0 0.0
        %4268 = vmatprep.subr.mxu0 0.0
        %4269 = vmatpush1.msra.mxu0 0.0
        %4270 = vmatprep.subr.mxu0 0.0
        %4271 = vmatpush1.msra.mxu0 0.0
        %4272 = vmatprep.subr.mxu0 0.0
        %4273 = vmatpush1.msra.mxu0 0.0
        %4274 = vmatprep.subr.mxu0 0.0
        %4275 = vmatpush1.msra.mxu0 0.0
        %4276 = vmatprep.subr.mxu0 0.0
        %4277 = vmatpush1.msra.mxu0 0.0
        %4278 = vmatprep.subr.mxu0 0.0
        %4279 = vmatpush1.msra.mxu0 0.0
        %4280 = vmatprep.mubr.f32.mxu0 0.0
        %4281 = vmatmul.mubr.f32.gmra.mrb[0].mxu0 %v4193
        %v4282 = vpop.f32.mrb[0].mxu0
        %v4283 = vadd.f32 0.0, %v4282
        %v4284 = vpop.f32.mrb[0].mxu0
        %4285 = vmatprep.mubr.f32.mxu0 0.0
        %4286 = vmatmul.mubr.f32.gmra.mrb[0].mxu0 %v4196
        %v4287 = vpop.f32.mrb[0].mxu0
        %v4288 = vadd.f32 0.0, %v4287
        %v4289 = vpop.f32.mrb[0].mxu0
        %4290 = vmatprep.mubr.f32.mxu0 0.0
        %4291 = vmatmul.mubr.f32.gmra.mrb[0].mxu0 %v4199
        %v4292 = vpop.f32.mrb[0].mxu0
        %v4293 = vadd.f32 0.0, %v4292
        %v4294 = vpop.f32.mrb[0].mxu0
        %4295 = vmatprep.mubr.f32.mxu0 0.0
        %4296 = vmatmul.mubr.f32.gmra.mrb[0].mxu0 %v4202
        %v4297 = vpop.f32.mrb[0].mxu0
        %v4298 = vadd.f32 0.0, %v4297
        %v4299 = vpop.f32.mrb[0].mxu0
        %4300 = vmatprep.mubr.f32.mxu0 0.0
        %4301 = vmatmul.mubr.f32.gmra.mrb[0].mxu0 %v4205
        %v4302 = vpop.f32.mrb[0].mxu0
        %v4303 = vadd.f32 0.0, %v4302
        %v4304 = vpop.f32.mrb[0].mxu0
        %4305 = vmatprep.mubr.f32.mxu0 0.0
        %4306 = vmatmul.mubr.f32.gmra.mrb[0].mxu0 %v4208
        %v4307 = vpop.f32.mrb[0].mxu0
        %v4308 = vadd.f32 0.0, %v4307
        %v4309 = vpop.f32.mrb[0].mxu0
        %4310 = vmatprep.mubr.f32.mxu0 0.0
        %4311 = vmatmul.mubr.f32.gmra.mrb[0].mxu0 %v4211
        %v4312 = vpop.f32.mrb[0].mxu0
        %v4313 = vadd.f32 0.0, %v4312
        %v4314 = vpop.f32.mrb[0].mxu0
        %4315 = vmatprep.mubr.f32.mxu0 0.0
        %4316 = vmatmul.mubr.f32.gmra.mrb[0].mxu0 %v4214
        %v4317 = vpop.f32.mrb[0].mxu0
        %v4318 = vadd.f32 0.0, %v4317
        %v4319 = vpop.f32.mrb[0].mxu0
        %4320 = vdwg.mxu0
        %v4321 = vadd.f32 %v4143, %v4283
        %v4322 = vadd.f32 %v4148, %v4288
        %v4323 = vadd.f32 %v4153, %v4293
        %v4324 = vadd.f32 %v4158, %v4298
        %v4325 = vadd.f32 %v4163, %v4303
        %v4326 = vadd.f32 %v4168, %v4308
        %v4327 = vadd.f32 %v4173, %v4313
        %v4328 = vadd.f32 %v4178, %v4318
        %v4329 = vld [vmem:[%s3893 + $0x7] sm:$0xff]
        %v4330 = vld [vmem:[%s3893 + $0x1f] sm:$0xff]
        %v4331 = vld [vmem:[%s3893 + $0x37] sm:$0xff]
        %v4332 = vld [vmem:[%s3893 + $0x4f] sm:$0xff]
        %v4333 = vld [vmem:[%s3893 + $0x67] sm:$0xff]
        %v4334 = vld [vmem:[%s3893 + $0x7f] sm:$0xff]
        %v4335 = vld [vmem:[%s3893 + $0x97] sm:$0xff]
        %v4336 = vld [vmem:[%s3893 + $0xaf] sm:$0xff]
        %s4337 = scalar_lea.vmem %s3, 48
        %v4338 = vld [vmem:[%s4337] sm:$0xff]
        %v4339 = vld [vmem:[%s4337 + $0x8] sm:$0xff]
        %v4341 = vsel %vm3743, %v4329, 0
        %v4344 = vsel %vm3743, %v4330, 0
        %v4347 = vsel %vm3743, %v4331, 0
        %v4350 = vsel %vm3743, %v4332, 0
        %v4353 = vsel %vm3743, %v4333, 0
        %v4356 = vsel %vm3743, %v4334, 0
        %v4359 = vsel %vm3743, %v4335, 0
        %v4362 = vsel %vm3743, %v4336, 0
        %4364 = vmatprep.subr.mxu0 0.0
        %4365 = vmatpush1.msra.mxu0 %v4338
        %4366 = vmatprep.subr.mxu0 0.0
        %4367 = vmatpush1.msra.mxu0 %v4339
        %4368 = vmatprep.subr.mxu0 0.0
        %4369 = vmatpush1.msra.mxu0 0.0
        %4370 = vmatprep.subr.mxu0 0.0
        %4371 = vmatpush1.msra.mxu0 0.0
        %4372 = vmatprep.subr.mxu0 0.0
        %4373 = vmatpush1.msra.mxu0 0.0
        %4374 = vmatprep.subr.mxu0 0.0
        %4375 = vmatpush1.msra.mxu0 0.0
        %4376 = vmatprep.subr.mxu0 0.0
        %4377 = vmatpush1.msra.mxu0 0.0
        %4378 = vmatprep.subr.mxu0 0.0
        %4379 = vmatpush1.msra.mxu0 0.0
        %4380 = vmatprep.subr.mxu0 0.0
        %4381 = vmatpush1.msra.mxu0 0.0
        %4382 = vmatprep.subr.mxu0 0.0
        %4383 = vmatpush1.msra.mxu0 0.0
        %4384 = vmatprep.subr.mxu0 0.0
        %4385 = vmatpush1.msra.mxu0 0.0
        %4386 = vmatprep.subr.mxu0 0.0
        %4387 = vmatpush1.msra.mxu0 0.0
        %4388 = vmatprep.subr.mxu0 0.0
        %4389 = vmatpush1.msra.mxu0 0.0
        %4390 = vmatprep.subr.mxu0 0.0
        %4391 = vmatpush1.msra.mxu0 0.0
        %4392 = vmatprep.subr.mxu0 0.0
        %4393 = vmatpush1.msra.mxu0 0.0
        %4394 = vmatprep.subr.mxu0 0.0
        %4395 = vmatpush1.msra.mxu0 0.0
        %4396 = vmatprep.subr.mxu0 0.0
        %4397 = vmatpush1.msra.mxu0 0.0
        %4398 = vmatprep.subr.mxu0 0.0
        %4399 = vmatpush1.msra.mxu0 0.0
        %4400 = vmatprep.subr.mxu0 0.0
        %4401 = vmatpush1.msra.mxu0 0.0
        %4402 = vmatprep.subr.mxu0 0.0
        %4403 = vmatpush1.msra.mxu0 0.0
        %4404 = vmatprep.subr.mxu0 0.0
        %4405 = vmatpush1.msra.mxu0 0.0
        %4406 = vmatprep.subr.mxu0 0.0
        %4407 = vmatpush1.msra.mxu0 0.0
        %4408 = vmatprep.subr.mxu0 0.0
        %4409 = vmatpush1.msra.mxu0 0.0
        %4410 = vmatprep.subr.mxu0 0.0
        %4411 = vmatpush1.msra.mxu0 0.0
        %4412 = vmatprep.subr.mxu0 0.0
        %4413 = vmatpush1.msra.mxu0 0.0
        %4414 = vmatprep.subr.mxu0 0.0
        %4415 = vmatpush1.msra.mxu0 0.0
        %4416 = vmatprep.subr.mxu0 0.0
        %4417 = vmatpush1.msra.mxu0 0.0
        %4418 = vmatprep.subr.mxu0 0.0
        %4419 = vmatpush1.msra.mxu0 0.0
        %4420 = vmatprep.subr.mxu0 0.0
        %4421 = vmatpush1.msra.mxu0 0.0
        %4422 = vmatprep.subr.mxu0 0.0
        %4423 = vmatpush1.msra.mxu0 0.0
        %4424 = vmatprep.subr.mxu0 0.0
        %4425 = vmatpush1.msra.mxu0 0.0
        %4426 = vmatprep.subr.mxu0 0.0
        %4427 = vmatpush1.msra.mxu0 0.0
        %4428 = vmatprep.mubr.f32.mxu0 0.0
        %4429 = vmatmul.mubr.f32.gmra.mrb[0].mxu0 %v4341
        %v4430 = vpop.f32.mrb[0].mxu0
        %v4431 = vadd.f32 0.0, %v4430
        %v4432 = vpop.f32.mrb[0].mxu0
        %4433 = vmatprep.mubr.f32.mxu0 0.0
        %4434 = vmatmul.mubr.f32.gmra.mrb[0].mxu0 %v4344
        %v4435 = vpop.f32.mrb[0].mxu0
        %v4436 = vadd.f32 0.0, %v4435
        %v4437 = vpop.f32.mrb[0].mxu0
        %4438 = vmatprep.mubr.f32.mxu0 0.0
        %4439 = vmatmul.mubr.f32.gmra.mrb[0].mxu0 %v4347
        %v4440 = vpop.f32.mrb[0].mxu0
        %v4441 = vadd.f32 0.0, %v4440
        %v4442 = vpop.f32.mrb[0].mxu0
        %4443 = vmatprep.mubr.f32.mxu0 0.0
        %4444 = vmatmul.mubr.f32.gmra.mrb[0].mxu0 %v4350
        %v4445 = vpop.f32.mrb[0].mxu0
        %v4446 = vadd.f32 0.0, %v4445
        %v4447 = vpop.f32.mrb[0].mxu0
        %4448 = vmatprep.mubr.f32.mxu0 0.0
        %4449 = vmatmul.mubr.f32.gmra.mrb[0].mxu0 %v4353
        %v4450 = vpop.f32.mrb[0].mxu0
        %v4451 = vadd.f32 0.0, %v4450
        %v4452 = vpop.f32.mrb[0].mxu0
        %4453 = vmatprep.mubr.f32.mxu0 0.0
        %4454 = vmatmul.mubr.f32.gmra.mrb[0].mxu0 %v4356
        %v4455 = vpop.f32.mrb[0].mxu0
        %v4456 = vadd.f32 0.0, %v4455
        %v4457 = vpop.f32.mrb[0].mxu0
        %4458 = vmatprep.mubr.f32.mxu0 0.0
        %4459 = vmatmul.mubr.f32.gmra.mrb[0].mxu0 %v4359
        %v4460 = vpop.f32.mrb[0].mxu0
        %v4461 = vadd.f32 0.0, %v4460
        %v4462 = vpop.f32.mrb[0].mxu0
        %4463 = vmatprep.mubr.f32.mxu0 0.0
        %4464 = vmatmul.mubr.f32.gmra.mrb[0].mxu0 %v4362
        %v4465 = vpop.f32.mrb[0].mxu0
        %v4466 = vadd.f32 0.0, %v4465
        %v4467 = vpop.f32.mrb[0].mxu0
        %4468 = vdwg.mxu0
        %v4469 = vadd.f32 %v4321, %v4431
        %v4470 = vadd.f32 %v4322, %v4436
        %v4471 = vadd.f32 %v4323, %v4441
        %v4472 = vadd.f32 %v4324, %v4446
        %v4473 = vadd.f32 %v4325, %v4451
        %v4474 = vadd.f32 %v4326, %v4456
        %v4475 = vadd.f32 %v4327, %v4461
        %v4476 = vadd.f32 %v4328, %v4466
        %v4477 = vld [vmem:[%s3893 + $0x8] sm:$0xff]
        %v4478 = vld [vmem:[%s3893 + $0x20] sm:$0xff]
        %v4479 = vld [vmem:[%s3893 + $0x38] sm:$0xff]
        %v4480 = vld [vmem:[%s3893 + $0x50] sm:$0xff]
        %v4481 = vld [vmem:[%s3893 + $0x68] sm:$0xff]
        %v4482 = vld [vmem:[%s3893 + $0x80] sm:$0xff]
        %v4483 = vld [vmem:[%s3893 + $0x98] sm:$0xff]
        %v4484 = vld [vmem:[%s3893 + $0xb0] sm:$0xff]
        %s4485 = scalar_lea.vmem %s3, 64
        %v4486 = vld [vmem:[%s4485] sm:$0xff]
        %v4487 = vld [vmem:[%s4485 + $0x8] sm:$0xff]
        %v4489 = vsel %vm3743, %v4477, 0
        %v4492 = vsel %vm3743, %v4478, 0
        %v4495 = vsel %vm3743, %v4479, 0
        %v4498 = vsel %vm3743, %v4480, 0
        %v4501 = vsel %vm3743, %v4481, 0
        %v4504 = vsel %vm3743, %v4482, 0
        %v4507 = vsel %vm3743, %v4483, 0
        %v4510 = vsel %vm3743, %v4484, 0
        %4512 = vmatprep.subr.mxu0 0.0
        %4513 = vmatpush1.msra.mxu0 %v4486
        %4514 = vmatprep.subr.mxu0 0.0
        %4515 = vmatpush1.msra.mxu0 %v4487
        %4516 = vmatprep.subr.mxu0 0.0
        %4517 = vmatpush1.msra.mxu0 0.0
        %4518 = vmatprep.subr.mxu0 0.0
        %4519 = vmatpush1.msra.mxu0 0.0
        %4520 = vmatprep.subr.mxu0 0.0
        %4521 = vmatpush1.msra.mxu0 0.0
        %4522 = vmatprep.subr.mxu0 0.0
        %4523 = vmatpush1.msra.mxu0 0.0
        %4524 = vmatprep.subr.mxu0 0.0
        %4525 = vmatpush1.msra.mxu0 0.0
        %4526 = vmatprep.subr.mxu0 0.0
        %4527 = vmatpush1.msra.mxu0 0.0
        %4528 = vmatprep.subr.mxu0 0.0
        %4529 = vmatpush1.msra.mxu0 0.0
        %4530 = vmatprep.subr.mxu0 0.0
        %4531 = vmatpush1.msra.mxu0 0.0
        %4532 = vmatprep.subr.mxu0 0.0
        %4533 = vmatpush1.msra.mxu0 0.0
        %4534 = vmatprep.subr.mxu0 0.0
        %4535 = vmatpush1.msra.mxu0 0.0
        %4536 = vmatprep.subr.mxu0 0.0
        %4537 = vmatpush1.msra.mxu0 0.0
        %4538 = vmatprep.subr.mxu0 0.0
        %4539 = vmatpush1.msra.mxu0 0.0
        %4540 = vmatprep.subr.mxu0 0.0
        %4541 = vmatpush1.msra.mxu0 0.0
        %4542 = vmatprep.subr.mxu0 0.0
        %4543 = vmatpush1.msra.mxu0 0.0
        %4544 = vmatprep.subr.mxu0 0.0
        %4545 = vmatpush1.msra.mxu0 0.0
        %4546 = vmatprep.subr.mxu0 0.0
        %4547 = vmatpush1.msra.mxu0 0.0
        %4548 = vmatprep.subr.mxu0 0.0
        %4549 = vmatpush1.msra.mxu0 0.0
        %4550 = vmatprep.subr.mxu0 0.0
        %4551 = vmatpush1.msra.mxu0 0.0
        %4552 = vmatprep.subr.mxu0 0.0
        %4553 = vmatpush1.msra.mxu0 0.0
        %4554 = vmatprep.subr.mxu0 0.0
        %4555 = vmatpush1.msra.mxu0 0.0
        %4556 = vmatprep.subr.mxu0 0.0
        %4557 = vmatpush1.msra.mxu0 0.0
        %4558 = vmatprep.subr.mxu0 0.0
        %4559 = vmatpush1.msra.mxu0 0.0
        %4560 = vmatprep.subr.mxu0 0.0
        %4561 = vmatpush1.msra.mxu0 0.0
        %4562 = vmatprep.subr.mxu0 0.0
        %4563 = vmatpush1.msra.mxu0 0.0
        %4564 = vmatprep.subr.mxu0 0.0
        %4565 = vmatpush1.msra.mxu0 0.0
        %4566 = vmatprep.subr.mxu0 0.0
        %4567 = vmatpush1.msra.mxu0 0.0
        %4568 = vmatprep.subr.mxu0 0.0
        %4569 = vmatpush1.msra.mxu0 0.0
        %4570 = vmatprep.subr.mxu0 0.0
        %4571 = vmatpush1.msra.mxu0 0.0
        %4572 = vmatprep.subr.mxu0 0.0
        %4573 = vmatpush1.msra.mxu0 0.0
        %4574 = vmatprep.subr.mxu0 0.0
        %4575 = vmatpush1.msra.mxu0 0.0
        %4576 = vmatprep.mubr.f32.mxu0 0.0
        %4577 = vmatmul.mubr.f32.gmra.mrb[0].mxu0 %v4489
        %v4578 = vpop.f32.mrb[0].mxu0
        %v4579 = vadd.f32 0.0, %v4578
        %v4580 = vpop.f32.mrb[0].mxu0
        %4581 = vmatprep.mubr.f32.mxu0 0.0
        %4582 = vmatmul.mubr.f32.gmra.mrb[0].mxu0 %v4492
        %v4583 = vpop.f32.mrb[0].mxu0
        %v4584 = vadd.f32 0.0, %v4583
        %v4585 = vpop.f32.mrb[0].mxu0
        %4586 = vmatprep.mubr.f32.mxu0 0.0
        %4587 = vmatmul.mubr.f32.gmra.mrb[0].mxu0 %v4495
        %v4588 = vpop.f32.mrb[0].mxu0
        %v4589 = vadd.f32 0.0, %v4588
        %v4590 = vpop.f32.mrb[0].mxu0
        %4591 = vmatprep.mubr.f32.mxu0 0.0
        %4592 = vmatmul.mubr.f32.gmra.mrb[0].mxu0 %v4498
        %v4593 = vpop.f32.mrb[0].mxu0
        %v4594 = vadd.f32 0.0, %v4593
        %v4595 = vpop.f32.mrb[0].mxu0
        %4596 = vmatprep.mubr.f32.mxu0 0.0
        %4597 = vmatmul.mubr.f32.gmra.mrb[0].mxu0 %v4501
        %v4598 = vpop.f32.mrb[0].mxu0
        %v4599 = vadd.f32 0.0, %v4598
        %v4600 = vpop.f32.mrb[0].mxu0
        %4601 = vmatprep.mubr.f32.mxu0 0.0
        %4602 = vmatmul.mubr.f32.gmra.mrb[0].mxu0 %v4504
        %v4603 = vpop.f32.mrb[0].mxu0
        %v4604 = vadd.f32 0.0, %v4603
        %v4605 = vpop.f32.mrb[0].mxu0
        %4606 = vmatprep.mubr.f32.mxu0 0.0
        %4607 = vmatmul.mubr.f32.gmra.mrb[0].mxu0 %v4507
        %v4608 = vpop.f32.mrb[0].mxu0
        %v4609 = vadd.f32 0.0, %v4608
        %v4610 = vpop.f32.mrb[0].mxu0
        %4611 = vmatprep.mubr.f32.mxu0 0.0
        %4612 = vmatmul.mubr.f32.gmra.mrb[0].mxu0 %v4510
        %v4613 = vpop.f32.mrb[0].mxu0
        %v4614 = vadd.f32 0.0, %v4613
        %v4615 = vpop.f32.mrb[0].mxu0
        %4616 = vdwg.mxu0
        %v4617 = vadd.f32 %v4469, %v4579
        %v4618 = vadd.f32 %v4470, %v4584
        %v4619 = vadd.f32 %v4471, %v4589
        %v4620 = vadd.f32 %v4472, %v4594
        %v4621 = vadd.f32 %v4473, %v4599
        %v4622 = vadd.f32 %v4474, %v4604
        %v4623 = vadd.f32 %v4475, %v4609
        %v4624 = vadd.f32 %v4476, %v4614
        %v4625 = vld [vmem:[%s3893 + $0x9] sm:$0xff]
        %v4626 = vld [vmem:[%s3893 + $0x21] sm:$0xff]
        %v4627 = vld [vmem:[%s3893 + $0x39] sm:$0xff]
        %v4628 = vld [vmem:[%s3893 + $0x51] sm:$0xff]
        %v4629 = vld [vmem:[%s3893 + $0x69] sm:$0xff]
        %v4630 = vld [vmem:[%s3893 + $0x81] sm:$0xff]
        %v4631 = vld [vmem:[%s3893 + $0x99] sm:$0xff]
        %v4632 = vld [vmem:[%s3893 + $0xb1] sm:$0xff]
        %s4633 = scalar_lea.vmem %s3, 80
        %v4634 = vld [vmem:[%s4633] sm:$0xff]
        %v4635 = vld [vmem:[%s4633 + $0x8] sm:$0xff]
        %v4637 = vsel %vm3743, %v4625, 0
        %v4640 = vsel %vm3743, %v4626, 0
        %v4643 = vsel %vm3743, %v4627, 0
        %v4646 = vsel %vm3743, %v4628, 0
        %v4649 = vsel %vm3743, %v4629, 0
        %v4652 = vsel %vm3743, %v4630, 0
        %v4655 = vsel %vm3743, %v4631, 0
        %v4658 = vsel %vm3743, %v4632, 0
        %4660 = vmatprep.subr.mxu0 0.0
        %4661 = vmatpush1.msra.mxu0 %v4634
        %4662 = vmatprep.subr.mxu0 0.0
        %4663 = vmatpush1.msra.mxu0 %v4635
        %4664 = vmatprep.subr.mxu0 0.0
        %4665 = vmatpush1.msra.mxu0 0.0
        %4666 = vmatprep.subr.mxu0 0.0
        %4667 = vmatpush1.msra.mxu0 0.0
        %4668 = vmatprep.subr.mxu0 0.0
        %4669 = vmatpush1.msra.mxu0 0.0
        %4670 = vmatprep.subr.mxu0 0.0
        %4671 = vmatpush1.msra.mxu0 0.0
        %4672 = vmatprep.subr.mxu0 0.0
        %4673 = vmatpush1.msra.mxu0 0.0
        %4674 = vmatprep.subr.mxu0 0.0
        %4675 = vmatpush1.msra.mxu0 0.0
        %4676 = vmatprep.subr.mxu0 0.0
        %4677 = vmatpush1.msra.mxu0 0.0
        %4678 = vmatprep.subr.mxu0 0.0
        %4679 = vmatpush1.msra.mxu0 0.0
        %4680 = vmatprep.subr.mxu0 0.0
        %4681 = vmatpush1.msra.mxu0 0.0
        %4682 = vmatprep.subr.mxu0 0.0
        %4683 = vmatpush1.msra.mxu0 0.0
        %4684 = vmatprep.subr.mxu0 0.0
        %4685 = vmatpush1.msra.mxu0 0.0
        %4686 = vmatprep.subr.mxu0 0.0
        %4687 = vmatpush1.msra.mxu0 0.0
        %4688 = vmatprep.subr.mxu0 0.0
        %4689 = vmatpush1.msra.mxu0 0.0
        %4690 = vmatprep.subr.mxu0 0.0
        %4691 = vmatpush1.msra.mxu0 0.0
        %4692 = vmatprep.subr.mxu0 0.0
        %4693 = vmatpush1.msra.mxu0 0.0
        %4694 = vmatprep.subr.mxu0 0.0
        %4695 = vmatpush1.msra.mxu0 0.0
        %4696 = vmatprep.subr.mxu0 0.0
        %4697 = vmatpush1.msra.mxu0 0.0
        %4698 = vmatprep.subr.mxu0 0.0
        %4699 = vmatpush1.msra.mxu0 0.0
        %4700 = vmatprep.subr.mxu0 0.0
        %4701 = vmatpush1.msra.mxu0 0.0
        %4702 = vmatprep.subr.mxu0 0.0
        %4703 = vmatpush1.msra.mxu0 0.0
        %4704 = vmatprep.subr.mxu0 0.0
        %4705 = vmatpush1.msra.mxu0 0.0
        %4706 = vmatprep.subr.mxu0 0.0
        %4707 = vmatpush1.msra.mxu0 0.0
        %4708 = vmatprep.subr.mxu0 0.0
        %4709 = vmatpush1.msra.mxu0 0.0
        %4710 = vmatprep.subr.mxu0 0.0
        %4711 = vmatpush1.msra.mxu0 0.0
        %4712 = vmatprep.subr.mxu0 0.0
        %4713 = vmatpush1.msra.mxu0 0.0
        %4714 = vmatprep.subr.mxu0 0.0
        %4715 = vmatpush1.msra.mxu0 0.0
        %4716 = vmatprep.subr.mxu0 0.0
        %4717 = vmatpush1.msra.mxu0 0.0
        %4718 = vmatprep.subr.mxu0 0.0
        %4719 = vmatpush1.msra.mxu0 0.0
        %4720 = vmatprep.subr.mxu0 0.0
        %4721 = vmatpush1.msra.mxu0 0.0
        %4722 = vmatprep.subr.mxu0 0.0
        %4723 = vmatpush1.msra.mxu0 0.0
        %4724 = vmatprep.mubr.f32.mxu0 0.0
        %4725 = vmatmul.mubr.f32.gmra.mrb[0].mxu0 %v4637
        %v4726 = vpop.f32.mrb[0].mxu0
        %v4727 = vadd.f32 0.0, %v4726
        %v4728 = vpop.f32.mrb[0].mxu0
        %4729 = vmatprep.mubr.f32.mxu0 0.0
        %4730 = vmatmul.mubr.f32.gmra.mrb[0].mxu0 %v4640
        %v4731 = vpop.f32.mrb[0].mxu0
        %v4732 = vadd.f32 0.0, %v4731
        %v4733 = vpop.f32.mrb[0].mxu0
        %4734 = vmatprep.mubr.f32.mxu0 0.0
        %4735 = vmatmul.mubr.f32.gmra.mrb[0].mxu0 %v4643
        %v4736 = vpop.f32.mrb[0].mxu0
        %v4737 = vadd.f32 0.0, %v4736
        %v4738 = vpop.f32.mrb[0].mxu0
        %4739 = vmatprep.mubr.f32.mxu0 0.0
        %4740 = vmatmul.mubr.f32.gmra.mrb[0].mxu0 %v4646
        %v4741 = vpop.f32.mrb[0].mxu0
        %v4742 = vadd.f32 0.0, %v4741
        %v4743 = vpop.f32.mrb[0].mxu0
        %4744 = vmatprep.mubr.f32.mxu0 0.0
        %4745 = vmatmul.mubr.f32.gmra.mrb[0].mxu0 %v4649
        %v4746 = vpop.f32.mrb[0].mxu0
        %v4747 = vadd.f32 0.0, %v4746
        %v4748 = vpop.f32.mrb[0].mxu0
        %4749 = vmatprep.mubr.f32.mxu0 0.0
        %4750 = vmatmul.mubr.f32.gmra.mrb[0].mxu0 %v4652
        %v4751 = vpop.f32.mrb[0].mxu0
        %v4752 = vadd.f32 0.0, %v4751
        %v4753 = vpop.f32.mrb[0].mxu0
        %4754 = vmatprep.mubr.f32.mxu0 0.0
        %4755 = vmatmul.mubr.f32.gmra.mrb[0].mxu0 %v4655
        %v4756 = vpop.f32.mrb[0].mxu0
        %v4757 = vadd.f32 0.0, %v4756
        %v4758 = vpop.f32.mrb[0].mxu0
        %4759 = vmatprep.mubr.f32.mxu0 0.0
        %4760 = vmatmul.mubr.f32.gmra.mrb[0].mxu0 %v4658
        %v4761 = vpop.f32.mrb[0].mxu0
        %v4762 = vadd.f32 0.0, %v4761
        %v4763 = vpop.f32.mrb[0].mxu0
        %4764 = vdwg.mxu0
        %v4765 = vadd.f32 %v4617, %v4727
        %v4766 = vadd.f32 %v4618, %v4732
        %v4767 = vadd.f32 %v4619, %v4737
        %v4768 = vadd.f32 %v4620, %v4742
        %v4769 = vadd.f32 %v4621, %v4747
        %v4770 = vadd.f32 %v4622, %v4752
        %v4771 = vadd.f32 %v4623, %v4757
        %v4772 = vadd.f32 %v4624, %v4762
        %s4773 = scalar_lea.vmem [#allocation3], 48
        %v4774 = vld [vmem:[%s4773 + $0x7] sm:$0xff]
        %v4775 = vld [vmem:[%s4773 + $0x1f] sm:$0xff]
        %v4776 = vld [vmem:[%s4773 + $0x37] sm:$0xff]
        %v4777 = vld [vmem:[%s4773 + $0x4f] sm:$0xff]
        %v4778 = vld [vmem:[%s4773 + $0x67] sm:$0xff]
        %v4779 = vld [vmem:[%s4773 + $0x7f] sm:$0xff]
        %v4780 = vld [vmem:[%s4773 + $0x97] sm:$0xff]
        %v4781 = vld [vmem:[%s4773 + $0xaf] sm:$0xff]
        %s4782 = scalar_lea.vmem %s3, 96
        %v4783 = vld [vmem:[%s4782] sm:$0xff]
        %v4784 = vld [vmem:[%s4782 + $0x8] sm:$0xff]
        %v4786 = vsel %vm3743, %v4774, 0
        %v4789 = vsel %vm3743, %v4775, 0
        %v4792 = vsel %vm3743, %v4776, 0
        %v4795 = vsel %vm3743, %v4777, 0
        %v4798 = vsel %vm3743, %v4778, 0
        %v4801 = vsel %vm3743, %v4779, 0
        %v4804 = vsel %vm3743, %v4780, 0
        %v4807 = vsel %vm3743, %v4781, 0
        %4809 = vmatprep.subr.mxu0 0.0
        %4810 = vmatpush1.msra.mxu0 %v4783
        %4811 = vmatprep.subr.mxu0 0.0
        %4812 = vmatpush1.msra.mxu0 %v4784
        %4813 = vmatprep.subr.mxu0 0.0
        %4814 = vmatpush1.msra.mxu0 0.0
        %4815 = vmatprep.subr.mxu0 0.0
        %4816 = vmatpush1.msra.mxu0 0.0
        %4817 = vmatprep.subr.mxu0 0.0
        %4818 = vmatpush1.msra.mxu0 0.0
        %4819 = vmatprep.subr.mxu0 0.0
        %4820 = vmatpush1.msra.mxu0 0.0
        %4821 = vmatprep.subr.mxu0 0.0
        %4822 = vmatpush1.msra.mxu0 0.0
        %4823 = vmatprep.subr.mxu0 0.0
        %4824 = vmatpush1.msra.mxu0 0.0
        %4825 = vmatprep.subr.mxu0 0.0
        %4826 = vmatpush1.msra.mxu0 0.0
        %4827 = vmatprep.subr.mxu0 0.0
        %4828 = vmatpush1.msra.mxu0 0.0
        %4829 = vmatprep.subr.mxu0 0.0
        %4830 = vmatpush1.msra.mxu0 0.0
        %4831 = vmatprep.subr.mxu0 0.0
        %4832 = vmatpush1.msra.mxu0 0.0
        %4833 = vmatprep.subr.mxu0 0.0
        %4834 = vmatpush1.msra.mxu0 0.0
        %4835 = vmatprep.subr.mxu0 0.0
        %4836 = vmatpush1.msra.mxu0 0.0
        %4837 = vmatprep.subr.mxu0 0.0
        %4838 = vmatpush1.msra.mxu0 0.0
        %4839 = vmatprep.subr.mxu0 0.0
        %4840 = vmatpush1.msra.mxu0 0.0
        %4841 = vmatprep.subr.mxu0 0.0
        %4842 = vmatpush1.msra.mxu0 0.0
        %4843 = vmatprep.subr.mxu0 0.0
        %4844 = vmatpush1.msra.mxu0 0.0
        %4845 = vmatprep.subr.mxu0 0.0
        %4846 = vmatpush1.msra.mxu0 0.0
        %4847 = vmatprep.subr.mxu0 0.0
        %4848 = vmatpush1.msra.mxu0 0.0
        %4849 = vmatprep.subr.mxu0 0.0
        %4850 = vmatpush1.msra.mxu0 0.0
        %4851 = vmatprep.subr.mxu0 0.0
        %4852 = vmatpush1.msra.mxu0 0.0
        %4853 = vmatprep.subr.mxu0 0.0
        %4854 = vmatpush1.msra.mxu0 0.0
        %4855 = vmatprep.subr.mxu0 0.0
        %4856 = vmatpush1.msra.mxu0 0.0
        %4857 = vmatprep.subr.mxu0 0.0
        %4858 = vmatpush1.msra.mxu0 0.0
        %4859 = vmatprep.subr.mxu0 0.0
        %4860 = vmatpush1.msra.mxu0 0.0
        %4861 = vmatprep.subr.mxu0 0.0
        %4862 = vmatpush1.msra.mxu0 0.0
        %4863 = vmatprep.subr.mxu0 0.0
        %4864 = vmatpush1.msra.mxu0 0.0
        %4865 = vmatprep.subr.mxu0 0.0
        %4866 = vmatpush1.msra.mxu0 0.0
        %4867 = vmatprep.subr.mxu0 0.0
        %4868 = vmatpush1.msra.mxu0 0.0
        %4869 = vmatprep.subr.mxu0 0.0
        %4870 = vmatpush1.msra.mxu0 0.0
        %4871 = vmatprep.subr.mxu0 0.0
        %4872 = vmatpush1.msra.mxu0 0.0
        %4873 = vmatprep.mubr.f32.mxu0 0.0
        %4874 = vmatmul.mubr.f32.gmra.mrb[0].mxu0 %v4786
        %v4875 = vpop.f32.mrb[0].mxu0
        %v4876 = vadd.f32 0.0, %v4875
        %v4877 = vpop.f32.mrb[0].mxu0
        %4878 = vmatprep.mubr.f32.mxu0 0.0
        %4879 = vmatmul.mubr.f32.gmra.mrb[0].mxu0 %v4789
        %v4880 = vpop.f32.mrb[0].mxu0
        %v4881 = vadd.f32 0.0, %v4880
        %v4882 = vpop.f32.mrb[0].mxu0
        %4883 = vmatprep.mubr.f32.mxu0 0.0
        %4884 = vmatmul.mubr.f32.gmra.mrb[0].mxu0 %v4792
        %v4885 = vpop.f32.mrb[0].mxu0
        %v4886 = vadd.f32 0.0, %v4885
        %v4887 = vpop.f32.mrb[0].mxu0
        %4888 = vmatprep.mubr.f32.mxu0 0.0
        %4889 = vmatmul.mubr.f32.gmra.mrb[0].mxu0 %v4795
        %v4890 = vpop.f32.mrb[0].mxu0
        %v4891 = vadd.f32 0.0, %v4890
        %v4892 = vpop.f32.mrb[0].mxu0
        %4893 = vmatprep.mubr.f32.mxu0 0.0
        %4894 = vmatmul.mubr.f32.gmra.mrb[0].mxu0 %v4798
        %v4895 = vpop.f32.mrb[0].mxu0
        %v4896 = vadd.f32 0.0, %v4895
        %v4897 = vpop.f32.mrb[0].mxu0
        %4898 = vmatprep.mubr.f32.mxu0 0.0
        %4899 = vmatmul.mubr.f32.gmra.mrb[0].mxu0 %v4801
        %v4900 = vpop.f32.mrb[0].mxu0
        %v4901 = vadd.f32 0.0, %v4900
        %v4902 = vpop.f32.mrb[0].mxu0
        %4903 = vmatprep.mubr.f32.mxu0 0.0
        %4904 = vmatmul.mubr.f32.gmra.mrb[0].mxu0 %v4804
        %v4905 = vpop.f32.mrb[0].mxu0
        %v4906 = vadd.f32 0.0, %v4905
        %v4907 = vpop.f32.mrb[0].mxu0
        %4908 = vmatprep.mubr.f32.mxu0 0.0
        %4909 = vmatmul.mubr.f32.gmra.mrb[0].mxu0 %v4807
        %v4910 = vpop.f32.mrb[0].mxu0
        %v4911 = vadd.f32 0.0, %v4910
        %v4912 = vpop.f32.mrb[0].mxu0
        %4913 = vdwg.mxu0
        %v4914 = vadd.f32 %v4765, %v4876
        %v4915 = vadd.f32 %v4766, %v4881
        %v4916 = vadd.f32 %v4767, %v4886
        %v4917 = vadd.f32 %v4768, %v4891
        %v4918 = vadd.f32 %v4769, %v4896
        %v4919 = vadd.f32 %v4770, %v4901
        %v4920 = vadd.f32 %v4771, %v4906
        %v4921 = vadd.f32 %v4772, %v4911
        %v4922 = vld [vmem:[%s4773 + $0x8] sm:$0xff]
        %v4923 = vld [vmem:[%s4773 + $0x20] sm:$0xff]
        %v4924 = vld [vmem:[%s4773 + $0x38] sm:$0xff]
        %v4925 = vld [vmem:[%s4773 + $0x50] sm:$0xff]
        %v4926 = vld [vmem:[%s4773 + $0x68] sm:$0xff]
        %v4927 = vld [vmem:[%s4773 + $0x80] sm:$0xff]
        %v4928 = vld [vmem:[%s4773 + $0x98] sm:$0xff]
        %v4929 = vld [vmem:[%s4773 + $0xb0] sm:$0xff]
        %s4930 = scalar_lea.vmem %s3, 112
        %v4931 = vld [vmem:[%s4930] sm:$0xff]
        %v4932 = vld [vmem:[%s4930 + $0x8] sm:$0xff]
        %v4934 = vsel %vm3743, %v4922, 0
        %v4937 = vsel %vm3743, %v4923, 0
        %v4940 = vsel %vm3743, %v4924, 0
        %v4943 = vsel %vm3743, %v4925, 0
        %v4946 = vsel %vm3743, %v4926, 0
        %v4949 = vsel %vm3743, %v4927, 0
        %v4952 = vsel %vm3743, %v4928, 0
        %v4955 = vsel %vm3743, %v4929, 0
        %4957 = vmatprep.subr.mxu0 0.0
        %4958 = vmatpush1.msra.mxu0 %v4931
        %4959 = vmatprep.subr.mxu0 0.0
        %4960 = vmatpush1.msra.mxu0 %v4932
        %4961 = vmatprep.subr.mxu0 0.0
        %4962 = vmatpush1.msra.mxu0 0.0
        %4963 = vmatprep.subr.mxu0 0.0
        %4964 = vmatpush1.msra.mxu0 0.0
        %4965 = vmatprep.subr.mxu0 0.0
        %4966 = vmatpush1.msra.mxu0 0.0
        %4967 = vmatprep.subr.mxu0 0.0
        %4968 = vmatpush1.msra.mxu0 0.0
        %4969 = vmatprep.subr.mxu0 0.0
        %4970 = vmatpush1.msra.mxu0 0.0
        %4971 = vmatprep.subr.mxu0 0.0
        %4972 = vmatpush1.msra.mxu0 0.0
        %4973 = vmatprep.subr.mxu0 0.0
        %4974 = vmatpush1.msra.mxu0 0.0
        %4975 = vmatprep.subr.mxu0 0.0
        %4976 = vmatpush1.msra.mxu0 0.0
        %4977 = vmatprep.subr.mxu0 0.0
        %4978 = vmatpush1.msra.mxu0 0.0
        %4979 = vmatprep.subr.mxu0 0.0
        %4980 = vmatpush1.msra.mxu0 0.0
        %4981 = vmatprep.subr.mxu0 0.0
        %4982 = vmatpush1.msra.mxu0 0.0
        %4983 = vmatprep.subr.mxu0 0.0
        %4984 = vmatpush1.msra.mxu0 0.0
        %4985 = vmatprep.subr.mxu0 0.0
        %4986 = vmatpush1.msra.mxu0 0.0
        %4987 = vmatprep.subr.mxu0 0.0
        %4988 = vmatpush1.msra.mxu0 0.0
        %4989 = vmatprep.subr.mxu0 0.0
        %4990 = vmatpush1.msra.mxu0 0.0
        %4991 = vmatprep.subr.mxu0 0.0
        %4992 = vmatpush1.msra.mxu0 0.0
        %4993 = vmatprep.subr.mxu0 0.0
        %4994 = vmatpush1.msra.mxu0 0.0
        %4995 = vmatprep.subr.mxu0 0.0
        %4996 = vmatpush1.msra.mxu0 0.0
        %4997 = vmatprep.subr.mxu0 0.0
        %4998 = vmatpush1.msra.mxu0 0.0
        %4999 = vmatprep.subr.mxu0 0.0
        %5000 = vmatpush1.msra.mxu0 0.0
        %5001 = vmatprep.subr.mxu0 0.0
        %5002 = vmatpush1.msra.mxu0 0.0
        %5003 = vmatprep.subr.mxu0 0.0
        %5004 = vmatpush1.msra.mxu0 0.0
        %5005 = vmatprep.subr.mxu0 0.0
        %5006 = vmatpush1.msra.mxu0 0.0
        %5007 = vmatprep.subr.mxu0 0.0
        %5008 = vmatpush1.msra.mxu0 0.0
        %5009 = vmatprep.subr.mxu0 0.0
        %5010 = vmatpush1.msra.mxu0 0.0
        %5011 = vmatprep.subr.mxu0 0.0
        %5012 = vmatpush1.msra.mxu0 0.0
        %5013 = vmatprep.subr.mxu0 0.0
        %5014 = vmatpush1.msra.mxu0 0.0
        %5015 = vmatprep.subr.mxu0 0.0
        %5016 = vmatpush1.msra.mxu0 0.0
        %5017 = vmatprep.subr.mxu0 0.0
        %5018 = vmatpush1.msra.mxu0 0.0
        %5019 = vmatprep.subr.mxu0 0.0
        %5020 = vmatpush1.msra.mxu0 0.0
        %5021 = vmatprep.mubr.f32.mxu0 0.0
        %5022 = vmatmul.mubr.f32.gmra.mrb[0].mxu0 %v4934
        %v5023 = vpop.f32.mrb[0].mxu0
        %v5024 = vadd.f32 0.0, %v5023
        %v5025 = vpop.f32.mrb[0].mxu0
        %5026 = vmatprep.mubr.f32.mxu0 0.0
        %5027 = vmatmul.mubr.f32.gmra.mrb[0].mxu0 %v4937
        %v5028 = vpop.f32.mrb[0].mxu0
        %v5029 = vadd.f32 0.0, %v5028
        %v5030 = vpop.f32.mrb[0].mxu0
        %5031 = vmatprep.mubr.f32.mxu0 0.0
        %5032 = vmatmul.mubr.f32.gmra.mrb[0].mxu0 %v4940
        %v5033 = vpop.f32.mrb[0].mxu0
        %v5034 = vadd.f32 0.0, %v5033
        %v5035 = vpop.f32.mrb[0].mxu0
        %5036 = vmatprep.mubr.f32.mxu0 0.0
        %5037 = vmatmul.mubr.f32.gmra.mrb[0].mxu0 %v4943
        %v5038 = vpop.f32.mrb[0].mxu0
        %v5039 = vadd.f32 0.0, %v5038
        %v5040 = vpop.f32.mrb[0].mxu0
        %5041 = vmatprep.mubr.f32.mxu0 0.0
        %5042 = vmatmul.mubr.f32.gmra.mrb[0].mxu0 %v4946
        %v5043 = vpop.f32.mrb[0].mxu0
        %v5044 = vadd.f32 0.0, %v5043
        %v5045 = vpop.f32.mrb[0].mxu0
        %5046 = vmatprep.mubr.f32.mxu0 0.0
        %5047 = vmatmul.mubr.f32.gmra.mrb[0].mxu0 %v4949
        %v5048 = vpop.f32.mrb[0].mxu0
        %v5049 = vadd.f32 0.0, %v5048
        %v5050 = vpop.f32.mrb[0].mxu0
        %5051 = vmatprep.mubr.f32.mxu0 0.0
        %5052 = vmatmul.mubr.f32.gmra.mrb[0].mxu0 %v4952
        %v5053 = vpop.f32.mrb[0].mxu0
        %v5054 = vadd.f32 0.0, %v5053
        %v5055 = vpop.f32.mrb[0].mxu0
        %5056 = vmatprep.mubr.f32.mxu0 0.0
        %5057 = vmatmul.mubr.f32.gmra.mrb[0].mxu0 %v4955
        %v5058 = vpop.f32.mrb[0].mxu0
        %v5059 = vadd.f32 0.0, %v5058
        %v5060 = vpop.f32.mrb[0].mxu0
        %5061 = vdwg.mxu0
        %v5062 = vadd.f32 %v4914, %v5024
        %v5063 = vadd.f32 %v4915, %v5029
        %v5064 = vadd.f32 %v4916, %v5034
        %v5065 = vadd.f32 %v4917, %v5039
        %v5066 = vadd.f32 %v4918, %v5044
        %v5067 = vadd.f32 %v4919, %v5049
        %v5068 = vadd.f32 %v4920, %v5054
        %v5069 = vadd.f32 %v4921, %v5059
        %v5070 = vld [vmem:[%s4773 + $0x9] sm:$0xff]
        %v5071 = vld [vmem:[%s4773 + $0x21] sm:$0xff]
        %v5072 = vld [vmem:[%s4773 + $0x39] sm:$0xff]
        %v5073 = vld [vmem:[%s4773 + $0x51] sm:$0xff]
        %v5074 = vld [vmem:[%s4773 + $0x69] sm:$0xff]
        %v5075 = vld [vmem:[%s4773 + $0x81] sm:$0xff]
        %v5076 = vld [vmem:[%s4773 + $0x99] sm:$0xff]
        %v5077 = vld [vmem:[%s4773 + $0xb1] sm:$0xff]
        %s5078 = scalar_lea.vmem %s3, 128
        %v5079 = vld [vmem:[%s5078] sm:$0xff]
        %v5080 = vld [vmem:[%s5078 + $0x8] sm:$0xff]
        %v5082 = vsel %vm3743, %v5070, 0
        %v5085 = vsel %vm3743, %v5071, 0
        %v5088 = vsel %vm3743, %v5072, 0
        %v5091 = vsel %vm3743, %v5073, 0
        %v5094 = vsel %vm3743, %v5074, 0
        %v5097 = vsel %vm3743, %v5075, 0
        %v5100 = vsel %vm3743, %v5076, 0
        %v5103 = vsel %vm3743, %v5077, 0
        %5105 = vmatprep.subr.mxu0 0.0
        %5106 = vmatpush1.msra.mxu0 %v5079
        %5107 = vmatprep.subr.mxu0 0.0
        %5108 = vmatpush1.msra.mxu0 %v5080
        %5109 = vmatprep.subr.mxu0 0.0
        %5110 = vmatpush1.msra.mxu0 0.0
        %5111 = vmatprep.subr.mxu0 0.0
        %5112 = vmatpush1.msra.mxu0 0.0
        %5113 = vmatprep.subr.mxu0 0.0
        %5114 = vmatpush1.msra.mxu0 0.0
        %5115 = vmatprep.subr.mxu0 0.0
        %5116 = vmatpush1.msra.mxu0 0.0
        %5117 = vmatprep.subr.mxu0 0.0
        %5118 = vmatpush1.msra.mxu0 0.0
        %5119 = vmatprep.subr.mxu0 0.0
        %5120 = vmatpush1.msra.mxu0 0.0
        %5121 = vmatprep.subr.mxu0 0.0
        %5122 = vmatpush1.msra.mxu0 0.0
        %5123 = vmatprep.subr.mxu0 0.0
        %5124 = vmatpush1.msra.mxu0 0.0
        %5125 = vmatprep.subr.mxu0 0.0
        %5126 = vmatpush1.msra.mxu0 0.0
        %5127 = vmatprep.subr.mxu0 0.0
        %5128 = vmatpush1.msra.mxu0 0.0
        %5129 = vmatprep.subr.mxu0 0.0
        %5130 = vmatpush1.msra.mxu0 0.0
        %5131 = vmatprep.subr.mxu0 0.0
        %5132 = vmatpush1.msra.mxu0 0.0
        %5133 = vmatprep.subr.mxu0 0.0
        %5134 = vmatpush1.msra.mxu0 0.0
        %5135 = vmatprep.subr.mxu0 0.0
        %5136 = vmatpush1.msra.mxu0 0.0
        %5137 = vmatprep.subr.mxu0 0.0
        %5138 = vmatpush1.msra.mxu0 0.0
        %5139 = vmatprep.subr.mxu0 0.0
        %5140 = vmatpush1.msra.mxu0 0.0
        %5141 = vmatprep.subr.mxu0 0.0
        %5142 = vmatpush1.msra.mxu0 0.0
        %5143 = vmatprep.subr.mxu0 0.0
        %5144 = vmatpush1.msra.mxu0 0.0
        %5145 = vmatprep.subr.mxu0 0.0
        %5146 = vmatpush1.msra.mxu0 0.0
        %5147 = vmatprep.subr.mxu0 0.0
        %5148 = vmatpush1.msra.mxu0 0.0
        %5149 = vmatprep.subr.mxu0 0.0
        %5150 = vmatpush1.msra.mxu0 0.0
        %5151 = vmatprep.subr.mxu0 0.0
        %5152 = vmatpush1.msra.mxu0 0.0
        %5153 = vmatprep.subr.mxu0 0.0
        %5154 = vmatpush1.msra.mxu0 0.0
        %5155 = vmatprep.subr.mxu0 0.0
        %5156 = vmatpush1.msra.mxu0 0.0
        %5157 = vmatprep.subr.mxu0 0.0
        %5158 = vmatpush1.msra.mxu0 0.0
        %5159 = vmatprep.subr.mxu0 0.0
        %5160 = vmatpush1.msra.mxu0 0.0
        %5161 = vmatprep.subr.mxu0 0.0
        %5162 = vmatpush1.msra.mxu0 0.0
        %5163 = vmatprep.subr.mxu0 0.0
        %5164 = vmatpush1.msra.mxu0 0.0
        %5165 = vmatprep.subr.mxu0 0.0
        %5166 = vmatpush1.msra.mxu0 0.0
        %5167 = vmatprep.subr.mxu0 0.0
        %5168 = vmatpush1.msra.mxu0 0.0
        %5169 = vmatprep.mubr.f32.mxu0 0.0
        %5170 = vmatmul.mubr.f32.gmra.mrb[0].mxu0 %v5082
        %v5171 = vpop.f32.mrb[0].mxu0
        %v5172 = vadd.f32 0.0, %v5171
        %v5173 = vpop.f32.mrb[0].mxu0
        %5174 = vmatprep.mubr.f32.mxu0 0.0
        %5175 = vmatmul.mubr.f32.gmra.mrb[0].mxu0 %v5085
        %v5176 = vpop.f32.mrb[0].mxu0
        %v5177 = vadd.f32 0.0, %v5176
        %v5178 = vpop.f32.mrb[0].mxu0
        %5179 = vmatprep.mubr.f32.mxu0 0.0
        %5180 = vmatmul.mubr.f32.gmra.mrb[0].mxu0 %v5088
        %v5181 = vpop.f32.mrb[0].mxu0
        %v5182 = vadd.f32 0.0, %v5181
        %v5183 = vpop.f32.mrb[0].mxu0
        %5184 = vmatprep.mubr.f32.mxu0 0.0
        %5185 = vmatmul.mubr.f32.gmra.mrb[0].mxu0 %v5091
        %v5186 = vpop.f32.mrb[0].mxu0
        %v5187 = vadd.f32 0.0, %v5186
        %v5188 = vpop.f32.mrb[0].mxu0
        %5189 = vmatprep.mubr.f32.mxu0 0.0
        %5190 = vmatmul.mubr.f32.gmra.mrb[0].mxu0 %v5094
        %v5191 = vpop.f32.mrb[0].mxu0
        %v5192 = vadd.f32 0.0, %v5191
        %v5193 = vpop.f32.mrb[0].mxu0
        %5194 = vmatprep.mubr.f32.mxu0 0.0
        %5195 = vmatmul.mubr.f32.gmra.mrb[0].mxu0 %v5097
        %v5196 = vpop.f32.mrb[0].mxu0
        %v5197 = vadd.f32 0.0, %v5196
        %v5198 = vpop.f32.mrb[0].mxu0
        %5199 = vmatprep.mubr.f32.mxu0 0.0
        %5200 = vmatmul.mubr.f32.gmra.mrb[0].mxu0 %v5100
        %v5201 = vpop.f32.mrb[0].mxu0
        %v5202 = vadd.f32 0.0, %v5201
        %v5203 = vpop.f32.mrb[0].mxu0
        %5204 = vmatprep.mubr.f32.mxu0 0.0
        %5205 = vmatmul.mubr.f32.gmra.mrb[0].mxu0 %v5103
        %v5206 = vpop.f32.mrb[0].mxu0
        %v5207 = vadd.f32 0.0, %v5206
        %v5208 = vpop.f32.mrb[0].mxu0
        %5209 = vdwg.mxu0
        %v5210 = vadd.f32 %v5062, %v5172
        %v5211 = vadd.f32 %v5063, %v5177
        %v5212 = vadd.f32 %v5064, %v5182
        %v5213 = vadd.f32 %v5065, %v5187
        %v5214 = vadd.f32 %v5066, %v5192
        %v5215 = vadd.f32 %v5067, %v5197
        %v5216 = vadd.f32 %v5068, %v5202
        %v5217 = vadd.f32 %v5069, %v5207
        %v5218 = vld [vmem:[%s4] sm:$0x1]
        %v5220 = vlaneseq
        %v5221 = vshrl.u32 %v5220, 7
        %v5222 = vsub.s32 0, %v5221
        %v5223 = vrot.slane %v5218, %v5222
        %v5225 = vadd.f32 %v5210, %v5223
        %v5226 = vadd.f32 %v5211, %v5223
        %v5227 = vadd.f32 %v5212, %v5223
        %v5228 = vadd.f32 %v5213, %v5223
        %v5229 = vadd.f32 %v5214, %v5223
        %v5230 = vadd.f32 %v5215, %v5223
        %v5231 = vadd.f32 %v5216, %v5223
        %v5232 = vadd.f32 %v5217, %v5223
        %v5233 = vmax.f32 %v5225, 0.0
        %v5234 = vmax.f32 %v5226, 0.0
        %v5235 = vmax.f32 %v5227, 0.0
        %v5236 = vmax.f32 %v5228, 0.0
        %v5237 = vmax.f32 %v5229, 0.0
        %v5238 = vmax.f32 %v5230, 0.0
        %v5239 = vmax.f32 %v5231, 0.0
        %v5240 = vmax.f32 %v5232, 0.0
        %vm5241 = vcmask 261120
        %5242 = vst.msk [vmem:[#allocation4] sm:$0xff] %vm5241, %v5233
        %5243 = vst.msk [vmem:[#allocation4 + $0x8] sm:$0xff] %vm5241, %v5234
        %5244 = vst.msk [vmem:[#allocation4 + $0x10] sm:$0xff] %vm5241, %v5235
        %5245 = vst.msk [vmem:[#allocation4 + $0x18] sm:$0xff] %vm5241, %v5236
        %5246 = vst.msk [vmem:[#allocation4 + $0x20] sm:$0xff] %vm5241, %v5237
        %5247 = vst.msk [vmem:[#allocation4 + $0x28] sm:$0xff] %vm5241, %v5238
        %5248 = vst.msk [vmem:[#allocation4 + $0x30] sm:$0xff] %vm5241, %v5239
        %5249 = vst.msk [vmem:[#allocation4 + $0x38] sm:$0xff] %vm5241, %v5240
        %v5250 = vld [vmem:[#allocation4] ss:$2 sm:$0xf]
        %s5251 = scalar_lea.vmem [#allocation4], 8
        %v5252 = vld [vmem:[%s5251] ss:$2 sm:$0xf]
        %s5253 = scalar_lea.vmem [#allocation4], 16
        %v5254 = vld [vmem:[%s5253] ss:$2 sm:$0xf]
        %s5255 = scalar_lea.vmem [#allocation4], 24
        %v5256 = vld [vmem:[%s5255] ss:$2 sm:$0xf]
        %s5257 = scalar_lea.vmem [#allocation4], 32
        %v5258 = vld [vmem:[%s5257] ss:$2 sm:$0xf]
        %s5259 = scalar_lea.vmem [#allocation4], 40
        %v5260 = vld [vmem:[%s5259] ss:$2 sm:$0xf]
        %s5261 = scalar_lea.vmem [#allocation4], 48
        %v5262 = vld [vmem:[%s5261] ss:$2 sm:$0xf]
        %s5263 = scalar_lea.vmem [#allocation4], 56
        %v5264 = vld [vmem:[%s5263] ss:$2 sm:$0xf]
        %s5265 = scalar_lea.vmem [#allocation4], 1
        %v5266 = vld [vmem:[%s5265] ss:$2 sm:$0xf]
        %s5267 = scalar_lea.vmem [#allocation4], 9
        %v5268 = vld [vmem:[%s5267] ss:$2 sm:$0xf]
        %s5269 = scalar_lea.vmem [#allocation4], 17
        %v5270 = vld [vmem:[%s5269] ss:$2 sm:$0xf]
        %s5271 = scalar_lea.vmem [#allocation4], 25
        %v5272 = vld [vmem:[%s5271] ss:$2 sm:$0xf]
        %s5273 = scalar_lea.vmem [#allocation4], 33
        %v5274 = vld [vmem:[%s5273] ss:$2 sm:$0xf]
        %s5275 = scalar_lea.vmem [#allocation4], 41
        %v5276 = vld [vmem:[%s5275] ss:$2 sm:$0xf]
        %s5277 = scalar_lea.vmem [#allocation4], 49
        %v5278 = vld [vmem:[%s5277] ss:$2 sm:$0xf]
        %s5279 = scalar_lea.vmem [#allocation4], 57
        %v5280 = vld [vmem:[%s5279] ss:$2 sm:$0xf]
        %v5281 = vmax.f32 %v5250, %v5266
        %v5282 = vmax.f32 %v5252, %v5268
        %v5283 = vmax.f32 %v5254, %v5270
        %v5284 = vmax.f32 %v5256, %v5272
        %v5285 = vmax.f32 %v5258, %v5274
        %v5286 = vmax.f32 %v5260, %v5276
        %v5287 = vmax.f32 %v5262, %v5278
        %v5288 = vmax.f32 %v5264, %v5280
        %v5289 = vmax.f32 %v5281, %v5282
        %v5290 = vmax.f32 %v5283, %v5284
        %v5291 = vmax.f32 %v5285, %v5286
        %v5292 = vmax.f32 %v5287, %v5288
        %vm5293 = vcmask 257024
        %5294 = vst.msk [vmem:[%s217] sm:$0xf] %vm5293, %v5289
        %5295 = vst.msk [vmem:[%s217 + $0x4] sm:$0xf] %vm5293, %v5290
        %5296 = vst.msk [vmem:[%s217 + $0x8] sm:$0xf] %vm5293, %v5291
        %5297 = vst.msk [vmem:[%s217 + $0xc] sm:$0xf] %vm5293, %v5292
        %s5298 = sand.u32 %s137, 1
        %s5299 = scalar_lea.sflag [#allocation6], %s5298
        %s5300 = sand.u32 %s137, 1
        %s5301 = smul.addr %s5300, 16
        %s5302 = scalar_lea.vmem [#allocation5], %s5301
        // Predicated region
        $region41: #{tpu_custom_call.1} parent=39 // pred_check
          %p5303 = pneg %p147
        $region42: #{tpu_custom_call.1} parent=39 // pred_check_branch
          %5305 = sbr.rel (%p5303) target = $region44
        $region43: #{tpu_custom_call.1} parent=39 // pred_region
          %s5307 = ssub.s32 256, 256
          %5308 = vsyncadd %s5299, %s5307
          %s5309 = smul.addr %s19, 4
          %s5310 = smul.addr %s5309, 64
          %s5311 = scalar_lea.hbm %s5, %s5310
          %s5312 = sshll.u32 %s5302, 4
          %s5313 = int_to_ptr.vmem [resolvable:$true] %s5312
          %5318 = dma.vmem_to_hbm [thread:$0]  %s5313, 256, %s5311, %s5299, 64, 64, 4
        $region44: #{tpu_custom_call.1} parent=39 // pred_fallthru
          _
      $region40: #{tpu_custom_call.1} parent=5 // pred_fallthru
        _
      %p5319 = scmp.le.s32.totalorder 2, %s14
      // Predicated region
      $region45: #{tpu_custom_call.1} parent=5 // pred_check
        %p5320 = pneg %p5319
      $region46: #{tpu_custom_call.1} parent=5 // pred_check_branch
        %5322 = sbr.rel (%p5320) target = $region48
      $region47: #{tpu_custom_call.1} parent=5 // pred_region
        %s5323 = ssub.s32 %s14, 2
        // Predicated region
        $region49: #{tpu_custom_call.1} parent=47 // pred_check
          %p5324 = pneg %p153
        $region50: #{tpu_custom_call.1} parent=47 // pred_check_branch
          %5326 = sbr.rel (%p5324) target = $region52
        $region51: #{tpu_custom_call.1} parent=47 // pred_region
          %s5327 = sand.u32 %s138, 1
          %s5328 = scalar_lea.sflag [#allocation6], %s5327
          %s5329 = sand.u32 %s138, 1
          %s5330 = smul.addr %s5329, 16
          %s5331 = scalar_lea.vmem [#allocation5], %s5330
          %5332 = dma.done %s5328, 256
        $region52: #{tpu_custom_call.1} parent=47 // pred_fallthru
          _
      $region48: #{tpu_custom_call.1} parent=5 // pred_fallthru
        _
    $region6: #{tpu_custom_call.1} parent=1 // loop_footer
      %s18 = sadd.s32 1, %s14
    $region7: #{tpu_custom_call.1} parent=1 // loop_footer_branch
      %13 = sbr.rel target = $region3
    $region8: #{tpu_custom_call.1} parent=1 // loop_exit
      _
    %5333 = vsyncpa [#allocation6], 1
    %s5334 = scalar_lea.sflag [#allocation6], 1
    %5335 = vsyncpa %s5334, 1

</llo_original>
